<compile_context>
chip_gen: v7x
topology: tpu7x:2x2x1
jax: 0.10.0
libtpu: 0.0.40
codegen_flags: <defaults>
</compile_context>

<pallas_src>
import jax
import jax.numpy as jnp
from jax import lax
from jax.experimental import pallas as pl
from jax.experimental.pallas import tpu as pltpu


def _resblock_kernel(xim_ref, xpool_ref, w1_ref, b1_ref, w2_ref, wr_ref, bf_ref,
                     out_ref, hp_ref):
    """One batch block per grid step.

    xim_ref  : (BB, 2, 2, Hh, Wh, 9*Cin)  conv1 im2col patches, parity-split (y=2my+py,
                                          x=2mx+px), channel order (dy, dx, cin)
    xpool_ref: (BB, Hh, Wh, Cin)          raw 2x2 sum of the input (0.25 folded into wr)
    w1_ref   : (9*Cin, Cout)              conv1 weights
    b1_ref   : (1, Cout)                  conv1 bias (f32)
    w2_ref   : (16*Cout, OUTC)            conv2 fused with the full 2x2 avg-pool,
                                          rows ordered (row-offset a, col-offset b, cin)
    wr_ref   : (Cin, OUTC)                residual 1x1 conv (x 0.25)
    bf_ref   : (1, OUTC)                  b2 + br (f32)
    out_ref  : (BB, Hh, Wh, OUTC)         OUTC = Cout rounded up to 128 (lane dense)
    hp_ref   : (BB, 2, 2, Hh+1, Wh+1, Cout)  zero-padded, parity-split conv1 output
                                             (VMEM scratch, mxu_dtype)
    """
    BB, Hh, Wh, OUTC = out_ref.shape
    K1 = xim_ref.shape[-1]
    Cin = xpool_ref.shape[-1]
    Cout = hp_ref.shape[-1]
    f32 = jnp.float32
    dt = hp_ref.dtype

    # ---- zero only the conv2 padding border of hp (wide slab stores, every step) ----
    zrow = jnp.zeros((BB, 2, Wh + 1, Cout), dt)
    hp_ref[:, 0, :, 0, :, :] = zrow                      # padded row 0
    hp_ref[:, 1, :, Hh, :, :] = zrow                     # padded row H+1
    zcol = jnp.zeros((BB, 2, Hh + 1, Cout), dt)
    hp_ref[:, :, 0, :, 0, :] = zcol                      # padded col 0
    hp_ref[:, :, 1, :, Wh, :] = zcol                     # padded col W+1

    # ---- conv1 (3x3, pad 1) + bias + LeakyReLU(0.2): one matmul per row parity ----
    b1 = b1_ref[...].astype(f32)
    w1 = w1_ref[...]
    for py in range(2):
        patches = xim_ref[:, py, :, :, :, :].reshape(BB * 2 * Hh * Wh, K1)
        h = jnp.dot(patches, w1, preferred_element_type=f32) + b1
        h = jnp.maximum(h, 0.2 * h)                      # LeakyReLU(0.2)
        h = h.reshape(BB, 2, Hh, Wh, Cout).astype(dt)    # (BB, px, my, mx, Cout)
        # conv1 pixel (y=2my+py, x=2mx+px) -> zero-padded (y+1, x+1) -> parity slot
        if py == 0:
            hp_ref[:, 1, 1, 0:Hh, 0:Wh, :] = h[:, 0]
            hp_ref[:, 1, 0, 0:Hh, 1:Wh + 1, :] = h[:, 1]
        else:
            hp_ref[:, 0, 1, 1:Hh + 1, 0:Wh, :] = h[:, 0]
            hp_ref[:, 0, 0, 1:Hh + 1, 1:Wh + 1, :] = h[:, 1]

    M2 = BB * Hh * Wh

    # ---- residual branch: (2x2-sum-pooled x) @ (0.25 * wr) ----
    acc = jnp.dot(xpool_ref[...].reshape(M2, Cin), wr_ref[...],
                  preferred_element_type=f32)

    # ---- conv2 (3x3, pad 1) fused with the full 2x2 avg-pool: 16 effective taps,
    #      4 accumulated matmuls (row-offset groups a=0..3, K = 4*Cout each) ----
    for a in range(4):
        taps = [hp_ref[:, a % 2, b % 2, a // 2:a // 2 + Hh, b // 2:b // 2 + Wh, :]
                for b in range(4)]
        pat = jnp.concatenate(taps, axis=-1).reshape(M2, 4 * Cout)
        acc = acc + jnp.dot(pat, w2_ref[a * 4 * Cout:(a + 1) * 4 * Cout, :],
                            preferred_element_type=f32)

    out = acc + bf_ref[...].astype(f32)                  # combined conv2 + residual bias
    out_ref[...] = out.reshape(BB, Hh, Wh, OUTC).astype(out_ref.dtype)


def _vmem_limit_bytes():
    try:
        cap = int(getattr(pltpu.get_tpu_info(), "vmem_capacity_bytes", 128 << 20))
    except Exception:
        cap = 128 << 20
    # ~96 MiB on v5e/v6e (128 MiB VMEM), ~48 MiB on v7x (64 MiB VMEM)
    return min(100 << 20, (cap * 3) // 4)


def _pick_block_b(B, H, W, Cin, Cout, OUTC, mxu_bytes, out_bytes, budget):
    """Largest block_b in {8,4,2,1} whose per-step VMEM estimate fits the budget
    while keeping the 'parallel' grid length >= 2 whenever B >= 2 (megacore)."""
    Hh, Wh = H // 2, W // 2
    lane = 128
    k1p = -(-9 * Cin // lane) * lane
    cinp = -(-Cin // lane) * lane
    coutp = -(-Cout // lane) * lane
    per_img = (2 * 4 * Hh * Wh * k1p * mxu_bytes        # im2col input block (x2 buffers)
               + 2 * Hh * Wh * cinp * mxu_bytes          # pooled-input block (x2 buffers)
               + 2 * Hh * Wh * OUTC * out_bytes          # output block (x2 buffers)
               + 4 * (Hh + 1) * (Wh + 1) * coutp * mxu_bytes   # hp scratch
               + 2 * Hh * Wh * coutp * (4 + mxu_bytes)   # conv1 half-image temporaries
               + Hh * Wh * 4 * coutp * mxu_bytes         # conv2 group patch temp
               + Hh * Wh * OUTC * 4)                     # f32 accumulator
    fixed = 2 * (9 * Cin * Cout + 16 * Cout * OUTC + Cin * OUTC) * mxu_bytes
    for bb in (8, 4, 2, 1):
        if bb <= max(1, B // 2) and fixed + bb * per_img <= budget:
            return bb
    return 1


def discriminator_input_residual_block(x_nchw, params, *, block_b=None,
                                       mxu_dtype=jnp.bfloat16,
                                       out_dtype=jnp.float32):
    """params (torch-shaped, already spectral-normalized):
       w1 (Cout,Cin,3,3), b1 (Cout,), w2 (Cout,Cout,3,3), b2 (Cout,),
       wr (Cout,Cin,1,1), br (Cout,)."""
    w1, b1, w2, b2, wr, br = params
    B, Cin, H, W = x_nchw.shape
    Cout = w1.shape[0]
    assert H % 2 == 0 and W % 2 == 0, "kernel assumes even H and W"
    Hh, Wh = H // 2, W // 2
    OUTC = ((Cout + 127) // 128) * 128              # lane-dense output stores
    f32 = jnp.float32
    mxu_bytes = jnp.dtype(mxu_dtype).itemsize
    out_bytes = jnp.dtype(out_dtype).itemsize

    vmem_limit = _vmem_limit_bytes()
    if block_b is None:
        block_b = _pick_block_b(B, H, W, Cin, Cout, OUTC, mxu_bytes, out_bytes,
                                (vmem_limit * 7) // 10)
    block_b = max(1, min(block_b, B))
    Bp = ((B + block_b - 1) // block_b) * block_b

    # ---- wrapper-side layout prep (all cheap XLA ops) ----
    xcl = jnp.transpose(x_nchw, (0, 2, 3, 1)).astype(f32)       # (B, H, W, Cin)
    xpad = jnp.pad(xcl, ((0, 0), (1, 1), (1, 1), (0, 0)))
    # conv1 im2col, parity-split over both spatial dims:
    #   xim[b, py, px, my, mx, (dy,dx,ci)] = x_pad[b, 2*my+py+dy, 2*mx+px+dx, ci]
    cols = [xpad[:, dy:dy + H, dx:dx + W, :] for dy in range(3) for dx in range(3)]
    xim = jnp.concatenate(cols, axis=-1)                        # (B, H, W, 9*Cin)
    xim = xim.reshape(B, Hh, 2, Wh, 2, 9 * Cin).transpose(0, 2, 4, 1, 3, 5)
    xim = xim.astype(mxu_dtype)
    # residual pool: raw 2x2 sum in f32 (0.25 folded into the 1x1 conv weight)
    xpool = xcl.reshape(B, Hh, 2, Wh, 2, Cin).sum(axis=(2, 4)).astype(mxu_dtype)

    if Bp != B:
        xim = jnp.pad(xim, ((0, Bp - B),) + ((0, 0),) * 5)
        xpool = jnp.pad(xpool, ((0, Bp - B), (0, 0), (0, 0), (0, 0)))

    # conv1 weights, rows ordered (dy, dx, cin) to match the im2col channel order
    w1k = jnp.transpose(w1, (2, 3, 1, 0)).reshape(9 * Cin, Cout).astype(mxu_dtype)
    b1k = b1.reshape(1, Cout).astype(f32)

    # conv2 fused with the FULL 2x2 avg-pool: 16 effective taps (row offset a=0..3,
    # col offset b=0..3), 1/4 scale folded in; rows ordered (a, b, cin).
    w2t = jnp.transpose(w2, (2, 3, 1, 0)).astype(f32)           # (dy, dx, cin, cout)
    wy = jnp.stack([w2t[0], w2t[0] + w2t[1], w2t[1] + w2t[2], w2t[2]], axis=0)
    w44 = jnp.stack([wy[:, 0], wy[:, 0] + wy[:, 1], wy[:, 1] + wy[:, 2], wy[:, 2]],
                    axis=1)                                     # (4, 4, Cout, Cout)
    w2e = (0.25 * w44).reshape(16 * Cout, Cout)
    w2e = jnp.pad(w2e, ((0, 0), (0, OUTC - Cout))).astype(mxu_dtype)

    wrk = 0.25 * jnp.transpose(wr[:, :, 0, 0], (1, 0))          # (Cin, Cout), pool folded
    wrk = jnp.pad(wrk, ((0, 0), (0, OUTC - Cout))).astype(mxu_dtype)
    bfk = jnp.pad((b2 + br).reshape(1, Cout), ((0, 0), (0, OUTC - Cout))).astype(f32)

    out = pl.pallas_call(
        _resblock_kernel,
        out_shape=jax.ShapeDtypeStruct((Bp, Hh, Wh, OUTC), out_dtype),
        grid=(Bp // block_b,),
        in_specs=[
            pl.BlockSpec((block_b, 2, 2, Hh, Wh, 9 * Cin),
                         lambda b: (b, 0, 0, 0, 0, 0)),
            pl.BlockSpec((block_b, Hh, Wh, Cin), lambda b: (b, 0, 0, 0)),
            pl.BlockSpec((9 * Cin, Cout), lambda b: (0, 0)),
            pl.BlockSpec((1, Cout), lambda b: (0, 0)),
            pl.BlockSpec((16 * Cout, OUTC), lambda b: (0, 0)),
            pl.BlockSpec((Cin, OUTC), lambda b: (0, 0)),
            pl.BlockSpec((1, OUTC), lambda b: (0, 0)),
        ],
        out_specs=pl.BlockSpec((block_b, Hh, Wh, OUTC), lambda b: (b, 0, 0, 0)),
        scratch_shapes=[
            pltpu.VMEM((block_b, 2, 2, Hh + 1, Wh + 1, Cout), mxu_dtype),
        ],
        compiler_params=pltpu.CompilerParams(
            dimension_semantics=("parallel",),
            vmem_limit_bytes=vmem_limit),
    )(xim, xpool, w1k, b1k, w2e, wrk, bfk)

    out = out[:B, :, :, :Cout]                      # drop batch / channel padding
    return jnp.transpose(out, (0, 3, 1, 2))         # back to NCHW


# ----------------------------- reference (plain JAX) -----------------------------
def _reference_forward(x_nchw, params):
    w1, b1, w2, b2, wr, br = params

    def conv(x, w, pad):
        return lax.conv_general_dilated(x, w, (1, 1), ((pad, pad), (pad, pad)),
                                        dimension_numbers=('NCHW', 'OIHW', 'NCHW'))

    def pool(t):
        return 0.25 * (t[:, :, 0::2, 0::2] + t[:, :, 0::2, 1::2]
                       + t[:, :, 1::2, 0::2] + t[:, :, 1::2, 1::2])

    h = conv(x_nchw, w1, 1) + b1[None, :, None, None]
    h = jnp.where(h > 0, h, 0.2 * h)
    h = conv(h, w2, 1) + b2[None, :, None, None]
    main = pool(h)
    res = conv(pool(x_nchw), wr, 0) + br[None, :, None, None]
    return main + res


def _spectral_normalize(w):
    # Exact spectral normalization W / sigma_max(W.reshape(out, -1)).
    # (PyTorch's spectral_norm estimates sigma via power iteration; weights are synthetic.)
    m = w.reshape(w.shape[0], -1)
    sigma = jnp.linalg.svd(m, compute_uv=False)[0]
    return w / sigma


if __name__ == "__main__":
    key = jax.random.PRNGKey(0)
    kx, k1, k2, k3, k4, k5, k6 = jax.random.split(key, 7)

    B, Cin, Cout, H, W = 2, 4, 8, 16, 32
    x = jax.random.normal(kx, (B, Cin, H, W), jnp.float32)

    w1 = _spectral_normalize(jax.random.normal(k1, (Cout, Cin, 3, 3), jnp.float32) * 0.2)
    b1 = jax.random.normal(k2, (Cout,), jnp.float32) * 0.1
    w2 = _spectral_normalize(jax.random.normal(k3, (Cout, Cout, 3, 3), jnp.float32) * 0.2)
    b2 = jax.random.normal(k4, (Cout,), jnp.float32) * 0.1
    wr = _spectral_normalize(jax.random.normal(k5, (Cout, Cin, 1, 1), jnp.float32) * 0.2)
    br = jax.random.normal(k6, (Cout,), jnp.float32) * 0.1
    params = (w1, b1, w2, b2, wr, br)

    ref = _reference_forward(x, params)

    # exact f32 path (f32 at the MXU, f32 scratch)
    out_f32 = discriminator_input_residual_block(x, params, mxu_dtype=jnp.float32)
    out_f32 = jax.block_until_ready(out_f32)
    assert out_f32.shape == (B, Cout, H // 2, W // 2), out_f32.shape
    err32 = float(jnp.max(jnp.abs(out_f32 - ref)))
    assert err32 < 2e-3, f"f32 max abs error {err32}"

    # default bf16-at-the-MXU path (bf16 activations/scratch, f32 accumulation)
    out_bf = discriminator_input_residual_block(x, params)
    out_bf = jax.block_until_ready(out_bf)
    err_bf = float(jnp.max(jnp.abs(out_bf - ref)))
    assert err_bf < 5e-2, f"bf16 max abs error {err_bf}"

    print("KERNEL_OK")
</pallas_src>

<mosaic_0001>
module attributes {stable_mosaic.version = 11 : i64} {
  func.func @_resblock_kernel(%arg0: i32, %arg1: memref<1x2x2x8x16x36xf32, #tpu.memory_space<vmem>>, %arg2: memref<1x8x16x4xf32, #tpu.memory_space<vmem>>, %arg3: memref<36x8xf32, #tpu.memory_space<vmem>>, %arg4: memref<1x8xf32, #tpu.memory_space<vmem>>, %arg5: memref<128x128xf32, #tpu.memory_space<vmem>>, %arg6: memref<4x128xf32, #tpu.memory_space<vmem>>, %arg7: memref<1x128xf32, #tpu.memory_space<vmem>>, %arg8: memref<1x8x16x128xf32, #tpu.memory_space<vmem>>, %arg9: memref<1x2x2x9x17x8xf32, #tpu.memory_space<vmem>>) attributes {dimension_semantics = [#tpu.dimension_semantics<parallel>], iteration_bounds = array<i64: 2>, scalar_prefetch = 0 : i64, scratch_operands = 1 : i64, tpu.core_type = #tpu.core_type<tc>, window_params = [{transform_indices = @transform_0, window_bounds = array<i64: 1, 2, 2, 8, 16, 36>}, {transform_indices = @transform_1, window_bounds = array<i64: 1, 8, 16, 4>}, {pipeline_mode = #tpu.pipeline_mode<synchronous>, transform_indices = @transform_2, window_bounds = array<i64: 36, 8>}, {pipeline_mode = #tpu.pipeline_mode<synchronous>, transform_indices = @transform_3, window_bounds = array<i64: 1, 8>}, {pipeline_mode = #tpu.pipeline_mode<synchronous>, transform_indices = @transform_4, window_bounds = array<i64: 128, 128>}, {pipeline_mode = #tpu.pipeline_mode<synchronous>, transform_indices = @transform_5, window_bounds = array<i64: 4, 128>}, {pipeline_mode = #tpu.pipeline_mode<synchronous>, transform_indices = @transform_6, window_bounds = array<i64: 1, 128>}, {transform_indices = @transform_7, window_bounds = array<i64: 1, 8, 16, 128>}]} {
    %cst = arith.constant 0.000000e+00 : f32
    %0 = vector.broadcast %cst : f32 to vector<1x2x17x8xf32>
    %c0 = arith.constant 0 : index
    %c0_0 = arith.constant 0 : index
    %c0_1 = arith.constant 0 : index
    %c0_2 = arith.constant 0 : index
    %c0_3 = arith.constant 0 : index
    %c0_4 = arith.constant 0 : index
    %1 = vector.load %arg9[%c0, %c0_0, %c0_1, %c0_2, %c0_3, %c0_4] : memref<1x2x2x9x17x8xf32, #tpu.memory_space<vmem>>, vector<1x1x2x1x17x8xf32>
    %2 = vector.shape_cast %1 : vector<1x1x2x1x17x8xf32> to vector<1x2x17x8xf32>
    %3 = vector.shape_cast %0 : vector<1x2x17x8xf32> to vector<1x1x2x1x17x8xf32>
    tpu.vector_store %arg9[%c0, %c0_0, %c0_1, %c0_2, %c0_3, %c0_4], %3 {strides = array<i32>} : memref<1x2x2x9x17x8xf32, #tpu.memory_space<vmem>>, vector<1x1x2x1x17x8xf32>,
    %c0_5 = arith.constant 0 : index
    %c1 = arith.constant 1 : index
    %c0_6 = arith.constant 0 : index
    %c8 = arith.constant 8 : index
    %c0_7 = arith.constant 0 : index
    %c0_8 = arith.constant 0 : index
    %4 = vector.load %arg9[%c0_5, %c1, %c0_6, %c8, %c0_7, %c0_8] : memref<1x2x2x9x17x8xf32, #tpu.memory_space<vmem>>, vector<1x1x2x1x17x8xf32>
    %5 = vector.shape_cast %4 : vector<1x1x2x1x17x8xf32> to vector<1x2x17x8xf32>
    %6 = vector.shape_cast %0 : vector<1x2x17x8xf32> to vector<1x1x2x1x17x8xf32>
    tpu.vector_store %arg9[%c0_5, %c1, %c0_6, %c8, %c0_7, %c0_8], %6 {strides = array<i32>} : memref<1x2x2x9x17x8xf32, #tpu.memory_space<vmem>>, vector<1x1x2x1x17x8xf32>,
    %cst_9 = arith.constant 0.000000e+00 : f32
    %7 = vector.broadcast %cst_9 : f32 to vector<1x2x9x8xf32>
    %c0_10 = arith.constant 0 : index
    %c0_11 = arith.constant 0 : index
    %c0_12 = arith.constant 0 : index
    %c0_13 = arith.constant 0 : index
    %c0_14 = arith.constant 0 : index
    %c0_15 = arith.constant 0 : index
    %8 = vector.load %arg9[%c0_10, %c0_11, %c0_12, %c0_13, %c0_14, %c0_15] : memref<1x2x2x9x17x8xf32, #tpu.memory_space<vmem>>, vector<1x2x1x9x1x8xf32>
    %9 = vector.shape_cast %8 : vector<1x2x1x9x1x8xf32> to vector<1x2x9x8xf32>
    %10 = vector.shape_cast %7 : vector<1x2x9x8xf32> to vector<1x2x1x9x1x8xf32>
    tpu.vector_store %arg9[%c0_10, %c0_11, %c0_12, %c0_13, %c0_14, %c0_15], %10 {strides = array<i32>} : memref<1x2x2x9x17x8xf32, #tpu.memory_space<vmem>>, vector<1x2x1x9x1x8xf32>,
    %c0_16 = arith.constant 0 : index
    %c0_17 = arith.constant 0 : index
    %c1_18 = arith.constant 1 : index
    %c0_19 = arith.constant 0 : index
    %c16 = arith.constant 16 : index
    %c0_20 = arith.constant 0 : index
    %11 = vector.load %arg9[%c0_16, %c0_17, %c1_18, %c0_19, %c16, %c0_20] : memref<1x2x2x9x17x8xf32, #tpu.memory_space<vmem>>, vector<1x2x1x9x1x8xf32>
    %12 = vector.shape_cast %11 : vector<1x2x1x9x1x8xf32> to vector<1x2x9x8xf32>
    %13 = vector.shape_cast %7 : vector<1x2x9x8xf32> to vector<1x2x1x9x1x8xf32>
    tpu.vector_store %arg9[%c0_16, %c0_17, %c1_18, %c0_19, %c16, %c0_20], %13 {strides = array<i32>} : memref<1x2x2x9x17x8xf32, #tpu.memory_space<vmem>>, vector<1x2x1x9x1x8xf32>,
    %c0_21 = arith.constant 0 : index
    %c0_22 = arith.constant 0 : index
    %14 = vector.load %arg4[%c0_21, %c0_22] : memref<1x8xf32, #tpu.memory_space<vmem>>, vector<1x8xf32>
    %c0_23 = arith.constant 0 : index
    %c0_24 = arith.constant 0 : index
    %15 = vector.load %arg3[%c0_23, %c0_24] : memref<36x8xf32, #tpu.memory_space<vmem>>, vector<36x8xf32>
    %c0_25 = arith.constant 0 : index
    %c0_26 = arith.constant 0 : index
    %c0_27 = arith.constant 0 : index
    %c0_28 = arith.constant 0 : index
    %c0_29 = arith.constant 0 : index
    %c0_30 = arith.constant 0 : index
    %16 = vector.load %arg1[%c0_25, %c0_26, %c0_27, %c0_28, %c0_29, %c0_30] : memref<1x2x2x8x16x36xf32, #tpu.memory_space<vmem>>, vector<1x1x2x8x16x36xf32>
    %17 = vector.shape_cast %16 : vector<1x1x2x8x16x36xf32> to vector<1x2x8x16x36xf32>
    %18 = vector.shape_cast %17 : vector<1x2x8x16x36xf32> to vector<256x36xf32>
    %cst_31 = arith.constant dense<0.000000e+00> : vector<256x8xf32>
    %19 = tpu.matmul %18, %15, %cst_31 {dimension_numbers = #tpu.dot_dimension_numbers<[1], [0], [0], [1], [0, 0, 1, 1], [], []>} : vector<256x36xf32>, vector<36x8xf32>, vector<256x8xf32> -> vector<256x8xf32>
    %20 = vector.broadcast %14 : vector<1x8xf32> to vector<256x8xf32>
    %21 = arith.addf %19, %20 : vector<256x8xf32>
    %cst_32 = arith.constant 2.000000e-01 : f32
    %22 = vector.broadcast %cst_32 : f32 to vector<256x8xf32>
    %23 = arith.mulf %22, %21 : vector<256x8xf32>
    %24 = arith.maximumf %21, %23 : vector<256x8xf32>
    %25 = vector.shape_cast %24 : vector<256x8xf32> to vector<1x2x8x16x8xf32>
    %26 = vector.extract_strided_slice %25 {offsets = [0, 0, 0, 0, 0], sizes = [1, 1, 8, 16, 8], strides = [1, 1, 1, 1, 1]} : vector<1x2x8x16x8xf32> to vector<1x1x8x16x8xf32>
    %27 = vector.shape_cast %26 : vector<1x1x8x16x8xf32> to vector<1x8x16x8xf32>
    %c0_33 = arith.constant 0 : index
    %c1_34 = arith.constant 1 : index
    %c1_35 = arith.constant 1 : index
    %c0_36 = arith.constant 0 : index
    %c0_37 = arith.constant 0 : index
    %c0_38 = arith.constant 0 : index
    %28 = vector.load %arg9[%c0_33, %c1_34, %c1_35, %c0_36, %c0_37, %c0_38] : memref<1x2x2x9x17x8xf32, #tpu.memory_space<vmem>>, vector<1x1x1x8x16x8xf32>
    %29 = vector.shape_cast %28 : vector<1x1x1x8x16x8xf32> to vector<1x8x16x8xf32>
    %30 = vector.shape_cast %27 : vector<1x8x16x8xf32> to vector<1x1x1x8x16x8xf32>
    tpu.vector_store %arg9[%c0_33, %c1_34, %c1_35, %c0_36, %c0_37, %c0_38], %30 {strides = array<i32>} : memref<1x2x2x9x17x8xf32, #tpu.memory_space<vmem>>, vector<1x1x1x8x16x8xf32>,
    %31 = vector.extract_strided_slice %25 {offsets = [0, 1, 0, 0, 0], sizes = [1, 1, 8, 16, 8], strides = [1, 1, 1, 1, 1]} : vector<1x2x8x16x8xf32> to vector<1x1x8x16x8xf32>
    %32 = vector.shape_cast %31 : vector<1x1x8x16x8xf32> to vector<1x8x16x8xf32>
    %c0_39 = arith.constant 0 : index
    %c1_40 = arith.constant 1 : index
    %c0_41 = arith.constant 0 : index
    %c0_42 = arith.constant 0 : index
    %c1_43 = arith.constant 1 : index
    %c0_44 = arith.constant 0 : index
    %33 = vector.load %arg9[%c0_39, %c1_40, %c0_41, %c0_42, %c1_43, %c0_44] : memref<1x2x2x9x17x8xf32, #tpu.memory_space<vmem>>, vector<1x1x1x8x16x8xf32>
    %34 = vector.shape_cast %33 : vector<1x1x1x8x16x8xf32> to vector<1x8x16x8xf32>
    %35 = vector.shape_cast %32 : vector<1x8x16x8xf32> to vector<1x1x1x8x16x8xf32>
    tpu.vector_store %arg9[%c0_39, %c1_40, %c0_41, %c0_42, %c1_43, %c0_44], %35 {strides = array<i32>} : memref<1x2x2x9x17x8xf32, #tpu.memory_space<vmem>>, vector<1x1x1x8x16x8xf32>,
    %c0_45 = arith.constant 0 : index
    %c1_46 = arith.constant 1 : index
    %c0_47 = arith.constant 0 : index
    %c0_48 = arith.constant 0 : index
    %c0_49 = arith.constant 0 : index
    %c0_50 = arith.constant 0 : index
    %36 = vector.load %arg1[%c0_45, %c1_46, %c0_47, %c0_48, %c0_49, %c0_50] : memref<1x2x2x8x16x36xf32, #tpu.memory_space<vmem>>, vector<1x1x2x8x16x36xf32>
    %37 = vector.shape_cast %36 : vector<1x1x2x8x16x36xf32> to vector<1x2x8x16x36xf32>
    %38 = vector.shape_cast %37 : vector<1x2x8x16x36xf32> to vector<256x36xf32>
    %cst_51 = arith.constant dense<0.000000e+00> : vector<256x8xf32>
    %39 = tpu.matmul %38, %15, %cst_51 {dimension_numbers = #tpu.dot_dimension_numbers<[1], [0], [0], [1], [0, 0, 1, 1], [], []>} : vector<256x36xf32>, vector<36x8xf32>, vector<256x8xf32> -> vector<256x8xf32>
    %40 = vector.broadcast %14 : vector<1x8xf32> to vector<256x8xf32>
    %41 = arith.addf %39, %40 : vector<256x8xf32>
    %cst_52 = arith.constant 2.000000e-01 : f32
    %42 = vector.broadcast %cst_52 : f32 to vector<256x8xf32>
    %43 = arith.mulf %42, %41 : vector<256x8xf32>
    %44 = arith.maximumf %41, %43 : vector<256x8xf32>
    %45 = vector.shape_cast %44 : vector<256x8xf32> to vector<1x2x8x16x8xf32>
    %46 = vector.extract_strided_slice %45 {offsets = [0, 0, 0, 0, 0], sizes = [1, 1, 8, 16, 8], strides = [1, 1, 1, 1, 1]} : vector<1x2x8x16x8xf32> to vector<1x1x8x16x8xf32>
    %47 = vector.shape_cast %46 : vector<1x1x8x16x8xf32> to vector<1x8x16x8xf32>
    %c0_53 = arith.constant 0 : index
    %c0_54 = arith.constant 0 : index
    %c1_55 = arith.constant 1 : index
    %c1_56 = arith.constant 1 : index
    %c0_57 = arith.constant 0 : index
    %c0_58 = arith.constant 0 : index
    %48 = vector.load %arg9[%c0_53, %c0_54, %c1_55, %c1_56, %c0_57, %c0_58] : memref<1x2x2x9x17x8xf32, #tpu.memory_space<vmem>>, vector<1x1x1x8x16x8xf32>
    %49 = vector.shape_cast %48 : vector<1x1x1x8x16x8xf32> to vector<1x8x16x8xf32>
    %50 = vector.shape_cast %47 : vector<1x8x16x8xf32> to vector<1x1x1x8x16x8xf32>
    tpu.vector_store %arg9[%c0_53, %c0_54, %c1_55, %c1_56, %c0_57, %c0_58], %50 {strides = array<i32>} : memref<1x2x2x9x17x8xf32, #tpu.memory_space<vmem>>, vector<1x1x1x8x16x8xf32>,
    %51 = vector.extract_strided_slice %45 {offsets = [0, 1, 0, 0, 0], sizes = [1, 1, 8, 16, 8], strides = [1, 1, 1, 1, 1]} : vector<1x2x8x16x8xf32> to vector<1x1x8x16x8xf32>
    %52 = vector.shape_cast %51 : vector<1x1x8x16x8xf32> to vector<1x8x16x8xf32>
    %c0_59 = arith.constant 0 : index
    %c0_60 = arith.constant 0 : index
    %c0_61 = arith.constant 0 : index
    %c1_62 = arith.constant 1 : index
    %c1_63 = arith.constant 1 : index
    %c0_64 = arith.constant 0 : index
    %53 = vector.load %arg9[%c0_59, %c0_60, %c0_61, %c1_62, %c1_63, %c0_64] : memref<1x2x2x9x17x8xf32, #tpu.memory_space<vmem>>, vector<1x1x1x8x16x8xf32>
    %54 = vector.shape_cast %53 : vector<1x1x1x8x16x8xf32> to vector<1x8x16x8xf32>
    %55 = vector.shape_cast %52 : vector<1x8x16x8xf32> to vector<1x1x1x8x16x8xf32>
    tpu.vector_store %arg9[%c0_59, %c0_60, %c0_61, %c1_62, %c1_63, %c0_64], %55 {strides = array<i32>} : memref<1x2x2x9x17x8xf32, #tpu.memory_space<vmem>>, vector<1x1x1x8x16x8xf32>,
    %c0_65 = arith.constant 0 : index
    %c0_66 = arith.constant 0 : index
    %c0_67 = arith.constant 0 : index
    %c0_68 = arith.constant 0 : index
    %56 = vector.load %arg2[%c0_65, %c0_66, %c0_67, %c0_68] : memref<1x8x16x4xf32, #tpu.memory_space<vmem>>, vector<1x8x16x4xf32>
    %57 = vector.shape_cast %56 : vector<1x8x16x4xf32> to vector<128x4xf32>
    %c0_69 = arith.constant 0 : index
    %c0_70 = arith.constant 0 : index
    %58 = vector.load %arg6[%c0_69, %c0_70] : memref<4x128xf32, #tpu.memory_space<vmem>>, vector<4x128xf32>
    %cst_71 = arith.constant dense<0.000000e+00> : vector<128x128xf32>
    %59 = tpu.matmul %57, %58, %cst_71 {dimension_numbers = #tpu.dot_dimension_numbers<[1], [0], [0], [1], [0, 0, 1, 1], [], []>} : vector<128x4xf32>, vector<4x128xf32>, vector<128x128xf32> -> vector<128x128xf32>
    %c0_72 = arith.constant 0 : index
    %c0_73 = arith.constant 0 : index
    %c0_74 = arith.constant 0 : index
    %c0_75 = arith.constant 0 : index
    %c0_76 = arith.constant 0 : index
    %c0_77 = arith.constant 0 : index
    %60 = vector.load %arg9[%c0_72, %c0_73, %c0_74, %c0_75, %c0_76, %c0_77] : memref<1x2x2x9x17x8xf32, #tpu.memory_space<vmem>>, vector<1x1x1x8x16x8xf32>
    %61 = vector.shape_cast %60 : vector<1x1x1x8x16x8xf32> to vector<1x8x16x8xf32>
    %c0_78 = arith.constant 0 : index
    %c0_79 = arith.constant 0 : index
    %c1_80 = arith.constant 1 : index
    %c0_81 = arith.constant 0 : index
    %c0_82 = arith.constant 0 : index
    %c0_83 = arith.constant 0 : index
    %62 = vector.load %arg9[%c0_78, %c0_79, %c1_80, %c0_81, %c0_82, %c0_83] : memref<1x2x2x9x17x8xf32, #tpu.memory_space<vmem>>, vector<1x1x1x8x16x8xf32>
    %63 = vector.shape_cast %62 : vector<1x1x1x8x16x8xf32> to vector<1x8x16x8xf32>
    %c0_84 = arith.constant 0 : index
    %c0_85 = arith.constant 0 : index
    %c0_86 = arith.constant 0 : index
    %c0_87 = arith.constant 0 : index
    %c1_88 = arith.constant 1 : index
    %c0_89 = arith.constant 0 : index
    %64 = vector.load %arg9[%c0_84, %c0_85, %c0_86, %c0_87, %c1_88, %c0_89] : memref<1x2x2x9x17x8xf32, #tpu.memory_space<vmem>>, vector<1x1x1x8x16x8xf32>
    %65 = vector.shape_cast %64 : vector<1x1x1x8x16x8xf32> to vector<1x8x16x8xf32>
    %c0_90 = arith.constant 0 : index
    %c0_91 = arith.constant 0 : index
    %c1_92 = arith.constant 1 : index
    %c0_93 = arith.constant 0 : index
    %c1_94 = arith.constant 1 : index
    %c0_95 = arith.constant 0 : index
    %66 = vector.load %arg9[%c0_90, %c0_91, %c1_92, %c0_93, %c1_94, %c0_95] : memref<1x2x2x9x17x8xf32, #tpu.memory_space<vmem>>, vector<1x1x1x8x16x8xf32>
    %67 = vector.shape_cast %66 : vector<1x1x1x8x16x8xf32> to vector<1x8x16x8xf32>
    %68 = tpu.concatenate %61, %63, %65, %67 in 3 : vector<1x8x16x8xf32>, vector<1x8x16x8xf32>, vector<1x8x16x8xf32>, vector<1x8x16x8xf32> -> vector<1x8x16x32xf32>
    %69 = vector.shape_cast %68 : vector<1x8x16x32xf32> to vector<128x32xf32>
    %c0_96 = arith.constant 0 : index
    %c0_97 = arith.constant 0 : index
    %70 = vector.load %arg5[%c0_96, %c0_97] : memref<128x128xf32, #tpu.memory_space<vmem>>, vector<32x128xf32>
    %cst_98 = arith.constant dense<0.000000e+00> : vector<128x128xf32>
    %71 = tpu.matmul %69, %70, %cst_98 {dimension_numbers = #tpu.dot_dimension_numbers<[1], [0], [0], [1], [0, 0, 1, 1], [], []>} : vector<128x32xf32>, vector<32x128xf32>, vector<128x128xf32> -> vector<128x128xf32>
    %72 = arith.addf %59, %71 : vector<128x128xf32>
    %c0_99 = arith.constant 0 : index
    %c1_100 = arith.constant 1 : index
    %c0_101 = arith.constant 0 : index
    %c0_102 = arith.constant 0 : index
    %c0_103 = arith.constant 0 : index
    %c0_104 = arith.constant 0 : index
    %73 = vector.load %arg9[%c0_99, %c1_100, %c0_101, %c0_102, %c0_103, %c0_104] : memref<1x2x2x9x17x8xf32, #tpu.memory_space<vmem>>, vector<1x1x1x8x16x8xf32>
    %74 = vector.shape_cast %73 : vector<1x1x1x8x16x8xf32> to vector<1x8x16x8xf32>
    %c0_105 = arith.constant 0 : index
    %c1_106 = arith.constant 1 : index
    %c1_107 = arith.constant 1 : index
    %c0_108 = arith.constant 0 : index
    %c0_109 = arith.constant 0 : index
    %c0_110 = arith.constant 0 : index
    %75 = vector.load %arg9[%c0_105, %c1_106, %c1_107, %c0_108, %c0_109, %c0_110] : memref<1x2x2x9x17x8xf32, #tpu.memory_space<vmem>>, vector<1x1x1x8x16x8xf32>
    %76 = vector.shape_cast %75 : vector<1x1x1x8x16x8xf32> to vector<1x8x16x8xf32>
    %c0_111 = arith.constant 0 : index
    %c1_112 = arith.constant 1 : index
    %c0_113 = arith.constant 0 : index
    %c0_114 = arith.constant 0 : index
    %c1_115 = arith.constant 1 : index
    %c0_116 = arith.constant 0 : index
    %77 = vector.load %arg9[%c0_111, %c1_112, %c0_113, %c0_114, %c1_115, %c0_116] : memref<1x2x2x9x17x8xf32, #tpu.memory_space<vmem>>, vector<1x1x1x8x16x8xf32>
    %78 = vector.shape_cast %77 : vector<1x1x1x8x16x8xf32> to vector<1x8x16x8xf32>
    %c0_117 = arith.constant 0 : index
    %c1_118 = arith.constant 1 : index
    %c1_119 = arith.constant 1 : index
    %c0_120 = arith.constant 0 : index
    %c1_121 = arith.constant 1 : index
    %c0_122 = arith.constant 0 : index
    %79 = vector.load %arg9[%c0_117, %c1_118, %c1_119, %c0_120, %c1_121, %c0_122] : memref<1x2x2x9x17x8xf32, #tpu.memory_space<vmem>>, vector<1x1x1x8x16x8xf32>
    %80 = vector.shape_cast %79 : vector<1x1x1x8x16x8xf32> to vector<1x8x16x8xf32>
    %81 = tpu.concatenate %74, %76, %78, %80 in 3 : vector<1x8x16x8xf32>, vector<1x8x16x8xf32>, vector<1x8x16x8xf32>, vector<1x8x16x8xf32> -> vector<1x8x16x32xf32>
    %82 = vector.shape_cast %81 : vector<1x8x16x32xf32> to vector<128x32xf32>
    %c32 = arith.constant 32 : index
    %c0_123 = arith.constant 0 : index
    %83 = vector.load %arg5[%c32, %c0_123] : memref<128x128xf32, #tpu.memory_space<vmem>>, vector<32x128xf32>
    %cst_124 = arith.constant dense<0.000000e+00> : vector<128x128xf32>
    %84 = tpu.matmul %82, %83, %cst_124 {dimension_numbers = #tpu.dot_dimension_numbers<[1], [0], [0], [1], [0, 0, 1, 1], [], []>} : vector<128x32xf32>, vector<32x128xf32>, vector<128x128xf32> -> vector<128x128xf32>
    %85 = arith.addf %72, %84 : vector<128x128xf32>
    %c0_125 = arith.constant 0 : index
    %c0_126 = arith.constant 0 : index
    %c0_127 = arith.constant 0 : index
    %c1_128 = arith.constant 1 : index
    %c0_129 = arith.constant 0 : index
    %c0_130 = arith.constant 0 : index
    %86 = vector.load %arg9[%c0_125, %c0_126, %c0_127, %c1_128, %c0_129, %c0_130] : memref<1x2x2x9x17x8xf32, #tpu.memory_space<vmem>>, vector<1x1x1x8x16x8xf32>
    %87 = vector.shape_cast %86 : vector<1x1x1x8x16x8xf32> to vector<1x8x16x8xf32>
    %c0_131 = arith.constant 0 : index
    %c0_132 = arith.constant 0 : index
    %c1_133 = arith.constant 1 : index
    %c1_134 = arith.constant 1 : index
    %c0_135 = arith.constant 0 : index
    %c0_136 = arith.constant 0 : index
    %88 = vector.load %arg9[%c0_131, %c0_132, %c1_133, %c1_134, %c0_135, %c0_136] : memref<1x2x2x9x17x8xf32, #tpu.memory_space<vmem>>, vector<1x1x1x8x16x8xf32>
    %89 = vector.shape_cast %88 : vector<1x1x1x8x16x8xf32> to vector<1x8x16x8xf32>
    %c0_137 = arith.constant 0 : index
    %c0_138 = arith.constant 0 : index
    %c0_139 = arith.constant 0 : index
    %c1_140 = arith.constant 1 : index
    %c1_141 = arith.constant 1 : index
    %c0_142 = arith.constant 0 : index
    %90 = vector.load %arg9[%c0_137, %c0_138, %c0_139, %c1_140, %c1_141, %c0_142] : memref<1x2x2x9x17x8xf32, #tpu.memory_space<vmem>>, vector<1x1x1x8x16x8xf32>
    %91 = vector.shape_cast %90 : vector<1x1x1x8x16x8xf32> to vector<1x8x16x8xf32>
    %c0_143 = arith.constant 0 : index
    %c0_144 = arith.constant 0 : index
    %c1_145 = arith.constant 1 : index
    %c1_146 = arith.constant 1 : index
    %c1_147 = arith.constant 1 : index
    %c0_148 = arith.constant 0 : index
    %92 = vector.load %arg9[%c0_143, %c0_144, %c1_145, %c1_146, %c1_147, %c0_148] : memref<1x2x2x9x17x8xf32, #tpu.memory_space<vmem>>, vector<1x1x1x8x16x8xf32>
    %93 = vector.shape_cast %92 : vector<1x1x1x8x16x8xf32> to vector<1x8x16x8xf32>
    %94 = tpu.concatenate %87, %89, %91, %93 in 3 : vector<1x8x16x8xf32>, vector<1x8x16x8xf32>, vector<1x8x16x8xf32>, vector<1x8x16x8xf32> -> vector<1x8x16x32xf32>
    %95 = vector.shape_cast %94 : vector<1x8x16x32xf32> to vector<128x32xf32>
    %c64 = arith.constant 64 : index
    %c0_149 = arith.constant 0 : index
    %96 = vector.load %arg5[%c64, %c0_149] : memref<128x128xf32, #tpu.memory_space<vmem>>, vector<32x128xf32>
    %cst_150 = arith.constant dense<0.000000e+00> : vector<128x128xf32>
    %97 = tpu.matmul %95, %96, %cst_150 {dimension_numbers = #tpu.dot_dimension_numbers<[1], [0], [0], [1], [0, 0, 1, 1], [], []>} : vector<128x32xf32>, vector<32x128xf32>, vector<128x128xf32> -> vector<128x128xf32>
    %98 = arith.addf %85, %97 : vector<128x128xf32>
    %c0_151 = arith.constant 0 : index
    %c1_152 = arith.constant 1 : index
    %c0_153 = arith.constant 0 : index
    %c1_154 = arith.constant 1 : index
    %c0_155 = arith.constant 0 : index
    %c0_156 = arith.constant 0 : index
    %99 = vector.load %arg9[%c0_151, %c1_152, %c0_153, %c1_154, %c0_155, %c0_156] : memref<1x2x2x9x17x8xf32, #tpu.memory_space<vmem>>, vector<1x1x1x8x16x8xf32>
    %100 = vector.shape_cast %99 : vector<1x1x1x8x16x8xf32> to vector<1x8x16x8xf32>
    %c0_157 = arith.constant 0 : index
    %c1_158 = arith.constant 1 : index
    %c1_159 = arith.constant 1 : index
    %c1_160 = arith.constant 1 : index
    %c0_161 = arith.constant 0 : index
    %c0_162 = arith.constant 0 : index
    %101 = vector.load %arg9[%c0_157, %c1_158, %c1_159, %c1_160, %c0_161, %c0_162] : memref<1x2x2x9x17x8xf32, #tpu.memory_space<vmem>>, vector<1x1x1x8x16x8xf32>
    %102 = vector.shape_cast %101 : vector<1x1x1x8x16x8xf32> to vector<1x8x16x8xf32>
    %c0_163 = arith.constant 0 : index
    %c1_164 = arith.constant 1 : index
    %c0_165 = arith.constant 0 : index
    %c1_166 = arith.constant 1 : index
    %c1_167 = arith.constant 1 : index
    %c0_168 = arith.constant 0 : index
    %103 = vector.load %arg9[%c0_163, %c1_164, %c0_165, %c1_166, %c1_167, %c0_168] : memref<1x2x2x9x17x8xf32, #tpu.memory_space<vmem>>, vector<1x1x1x8x16x8xf32>
    %104 = vector.shape_cast %103 : vector<1x1x1x8x16x8xf32> to vector<1x8x16x8xf32>
    %c0_169 = arith.constant 0 : index
    %c1_170 = arith.constant 1 : index
    %c1_171 = arith.constant 1 : index
    %c1_172 = arith.constant 1 : index
    %c1_173 = arith.constant 1 : index
    %c0_174 = arith.constant 0 : index
    %105 = vector.load %arg9[%c0_169, %c1_170, %c1_171, %c1_172, %c1_173, %c0_174] : memref<1x2x2x9x17x8xf32, #tpu.memory_space<vmem>>, vector<1x1x1x8x16x8xf32>
    %106 = vector.shape_cast %105 : vector<1x1x1x8x16x8xf32> to vector<1x8x16x8xf32>
    %107 = tpu.concatenate %100, %102, %104, %106 in 3 : vector<1x8x16x8xf32>, vector<1x8x16x8xf32>, vector<1x8x16x8xf32>, vector<1x8x16x8xf32> -> vector<1x8x16x32xf32>
    %108 = vector.shape_cast %107 : vector<1x8x16x32xf32> to vector<128x32xf32>
    %c96 = arith.constant 96 : index
    %c0_175 = arith.constant 0 : index
    %109 = vector.load %arg5[%c96, %c0_175] : memref<128x128xf32, #tpu.memory_space<vmem>>, vector<32x128xf32>
    %cst_176 = arith.constant dense<0.000000e+00> : vector<128x128xf32>
    %110 = tpu.matmul %108, %109, %cst_176 {dimension_numbers = #tpu.dot_dimension_numbers<[1], [0], [0], [1], [0, 0, 1, 1], [], []>} : vector<128x32xf32>, vector<32x128xf32>, vector<128x128xf32> -> vector<128x128xf32>
    %111 = arith.addf %98, %110 : vector<128x128xf32>
    %c0_177 = arith.constant 0 : index
    %c0_178 = arith.constant 0 : index
    %112 = vector.load %arg7[%c0_177, %c0_178] : memref<1x128xf32, #tpu.memory_space<vmem>>, vector<1x128xf32>
    %113 = vector.broadcast %112 : vector<1x128xf32> to vector<128x128xf32>
    %114 = arith.addf %111, %113 : vector<128x128xf32>
    %115 = vector.shape_cast %114 : vector<128x128xf32> to vector<1x8x16x128xf32>
    %c0_179 = arith.constant 0 : index
    %c0_180 = arith.constant 0 : index
    %c0_181 = arith.constant 0 : index
    %c0_182 = arith.constant 0 : index
    %116 = vector.load %arg8[%c0_179, %c0_180, %c0_181, %c0_182] : memref<1x8x16x128xf32, #tpu.memory_space<vmem>>, vector<1x8x16x128xf32>
    tpu.vector_store %arg8[%c0_179, %c0_180, %c0_181, %c0_182], %115 {strides = array<i32>} : memref<1x8x16x128xf32, #tpu.memory_space<vmem>>, vector<1x8x16x128xf32>,
    return
  }
  func.func @transform_0(%arg0: i32) -> (i32, i32, i32, i32, i32, i32) {
    %c0_i32 = arith.constant 0 : i32
    %c0_i32_0 = arith.constant 0 : i32
    %c0_i32_1 = arith.constant 0 : i32
    %c0_i32_2 = arith.constant 0 : i32
    %c0_i32_3 = arith.constant 0 : i32
    %c0_i32_4 = arith.constant 0 : i32
    return %arg0, %c0_i32, %c0_i32_0, %c0_i32_1, %c0_i32_2, %c0_i32_3 : i32, i32, i32, i32, i32, i32
  }
  func.func @transform_1(%arg0: i32) -> (i32, i32, i32, i32) {
    %c0_i32 = arith.constant 0 : i32
    %c0_i32_0 = arith.constant 0 : i32
    %c0_i32_1 = arith.constant 0 : i32
    %c0_i32_2 = arith.constant 0 : i32
    return %arg0, %c0_i32, %c0_i32_0, %c0_i32_1 : i32, i32, i32, i32
  }
  func.func @transform_2(%arg0: i32) -> (i32, i32) {
    %c0_i32 = arith.constant 0 : i32
    %c0_i32_0 = arith.constant 0 : i32
    %c0_i32_1 = arith.constant 0 : i32
    return %c0_i32, %c0_i32_0 : i32, i32
  }
  func.func @transform_3(%arg0: i32) -> (i32, i32) {
    %c0_i32 = arith.constant 0 : i32
    %c0_i32_0 = arith.constant 0 : i32
    %c0_i32_1 = arith.constant 0 : i32
    return %c0_i32, %c0_i32_0 : i32, i32
  }
  func.func @transform_4(%arg0: i32) -> (i32, i32) {
    %c0_i32 = arith.constant 0 : i32
    %c0_i32_0 = arith.constant 0 : i32
    %c0_i32_1 = arith.constant 0 : i32
    return %c0_i32, %c0_i32_0 : i32, i32
  }
  func.func @transform_5(%arg0: i32) -> (i32, i32) {
    %c0_i32 = arith.constant 0 : i32
    %c0_i32_0 = arith.constant 0 : i32
    %c0_i32_1 = arith.constant 0 : i32
    return %c0_i32, %c0_i32_0 : i32, i32
  }
  func.func @transform_6(%arg0: i32) -> (i32, i32) {
    %c0_i32 = arith.constant 0 : i32
    %c0_i32_0 = arith.constant 0 : i32
    %c0_i32_1 = arith.constant 0 : i32
    return %c0_i32, %c0_i32_0 : i32, i32
  }
  func.func @transform_7(%arg0: i32) -> (i32, i32, i32, i32) {
    %c0_i32 = arith.constant 0 : i32
    %c0_i32_0 = arith.constant 0 : i32
    %c0_i32_1 = arith.constant 0 : i32
    %c0_i32_2 = arith.constant 0 : i32
    return %arg0, %c0_i32, %c0_i32_0, %c0_i32_1 : i32, i32, i32, i32
  }
}

</mosaic_0001>

<llo_original>
// kernel: tpu_custom_call.1
$region0: #{tpu_custom_call.1}
  #allocation0 [shape = 'u32[]', space=smem, size = 0x4, offset = 0x4, fixed_abs, tag = 'smem constant byte address 0x4 - core index']
  #allocation1 [shape = 'u32[144,128]{1,0:T(1,128)}', space=vmem, size = 0x12000, scoped, tag = 'internal scratch']
  #allocation2 [shape = 'f32[1,2,2,9,17,8]{5,4,3,2,1,0:T(8,128)}', space=vmem, size = 0x6c000, scoped, tag = 'scratch operand']
  %s0 = inlined_call_operand.hbm [shape: f32[2,2,2,8,16,36], index: 0, kind: input, shape index: {}]
  %s1 = inlined_call_operand.hbm [shape: f32[2,8,16,4], index: 1, kind: input, shape index: {}]
  %s2 = inlined_call_operand.hbm [shape: f32[36,8], index: 2, kind: input, shape index: {}]
  %s3 = inlined_call_operand.hbm [shape: f32[1,8], index: 3, kind: input, shape index: {}]
  %s4 = inlined_call_operand.hbm [shape: f32[128,128], index: 4, kind: input, shape index: {}]
  %s5 = inlined_call_operand.hbm [shape: f32[4,128], index: 5, kind: input, shape index: {}]
  %s6 = inlined_call_operand.hbm [shape: f32[1,128], index: 6, kind: input, shape index: {}]
  %s7 = inlined_call_operand.hbm [shape: f32[2,8,16,128], index: 7, kind: output, shape index: {}]
  %s8 = sld [smem:[#allocation0]]
  $region89: #{tpu_custom_call.1} parent=0
    _
  %s10 = ssub.s32 1, %s8
  %s11 = scalar_select 0, %s10, %s8
  $region1: #{tpu_custom_call.1} parent=0
    #allocation3 [shape = 'u8[524288]{0}', space=vmem, size = 0x80000, scoped, tag = 'input window, operand 0']
    #allocation4 [shape = 's32[2]{0}', space=sflag, size = 0x8, scoped, tag = 'scoped memory for tpu_custom_call.1']
    #allocation5 [shape = 's32[2]{0}', space=sflag, size = 0x8, scoped, tag = 'scoped memory for tpu_custom_call.1']
    #allocation6 [shape = 'u8[131072]{0}', space=vmem, size = 0x20000, scoped, tag = 'input window, operand 1']
    #allocation7 [shape = 's32[2]{0}', space=sflag, size = 0x8, scoped, tag = 'scoped memory for tpu_custom_call.1']
    #allocation8 [shape = 'u8[20480]{0}', space=vmem, size = 0x5000, scoped, tag = 'input window, operand 2, single buffered']
    #allocation9 [shape = 'u8[512]{0}', space=vmem, size = 0x400, scoped, tag = 'input window, operand 3, single buffered']
    #allocation10 [shape = 's32[1]{0}', space=sflag, size = 0x4, scoped, tag = 'scoped memory for tpu_custom_call.1']
    #allocation11 [shape = 'u8[65536]{0}', space=vmem, size = 0x10000, scoped, tag = 'input window, operand 4, single buffered']
    #allocation12 [shape = 'u8[2048]{0}', space=vmem, size = 0x800, scoped, tag = 'input window, operand 5, single buffered']
    #allocation13 [shape = 's32[1]{0}', space=sflag, size = 0x4, scoped, tag = 'scoped memory for tpu_custom_call.1']
    #allocation14 [shape = 'u8[512]{0}', space=vmem, size = 0x400, scoped, tag = 'input window, operand 6, single buffered']
    #allocation15 [shape = 'u8[131072]{0}', space=vmem, size = 0x20000, scoped, tag = 'output window, operand 0']
    %12 = vsyncpa [#allocation4], 0
    %s13 = scalar_lea.sflag [#allocation4], 1
    %14 = vsyncpa %s13, 0
    %15 = vsyncpa [#allocation7], 0
    %s16 = scalar_lea.sflag [#allocation7], 1
    %17 = vsyncpa %s16, 0
    %18 = vsyncpa [#allocation10], 0
    %19 = vsyncpa [#allocation13], 0
    %20 = vsyncpa [#allocation5], 0
    %s21 = scalar_lea.sflag [#allocation5], 1
    %22 = vsyncpa %s21, 0
    loop: start=0, step=1, limit=4
    $region2: #{tpu_custom_call.1} parent=1 // loop_pre_header
      _
    $region3: #{tpu_custom_call.1} parent=1 // loop_header
      %s24 = sphi 0, %s28
      %p25 = scmp.ge.s32.totalorder %s24, 4
      %s34 = sphi 0, %s36
      %s37 = sphi 0, %s34
      %s38 = sphi 0, %s37
      %s54 = sphi 0, %s38
      %s60 = sphi 0, %s62
      %s63 = sphi 0, %s60
      %s64 = sphi 0, %s63
      %s80 = sphi 0, %s64
      %s84 = sphi 0, %s84
      %s86 = sphi 0, %s84
      %s87 = sphi 0, %s86
      %s101 = sphi 0, %s87
      %s105 = sphi 0, %s105
      %s107 = sphi 0, %s105
      %s108 = sphi 0, %s107
      %s122 = sphi 0, %s108
      %s126 = sphi 0, %s126
      %s128 = sphi 0, %s126
      %s129 = sphi 0, %s128
      %s143 = sphi 0, %s129
      %s147 = sphi 0, %s147
      %s149 = sphi 0, %s147
      %s150 = sphi 0, %s149
      %s164 = sphi 0, %s150
      %s168 = sphi 0, %s168
      %s170 = sphi 0, %s168
      %s171 = sphi 0, %s170
      %s185 = sphi 0, %s171
      %s191 = sphi 0, %s193
      %s194 = sphi 0, %s191
      %s195 = sphi 0, %s194
      %s211 = sphi 0, %s195
    $region4: #{tpu_custom_call.1} parent=1 // loop_header_branch
      %27 = sbr.rel (%p25) target = $region8
    $region5: #{tpu_custom_call.1} parent=1 // loop_body
      %s29 = ssub.s32 %s24, 1
      %s30 = ssub.s32 %s24, 2
      %s31 = sadd.s32 %s24, 1
      %s32 = ssub.s32 %s24, %s31
      %p33 = scmp.eq.s32.totalorder %s32, 0
      %s35 = sadd.s32 %s34, 1
      %s36 = scalar_select %p33, %s34, %s35
      %p39 = pneg %p33
      %p40 = scmp.eq.s32.totalorder %s24, 1
      %p41 = por %p39, %p40
      %p42 = scmp.ne.s32.totalorder %s34, %s37
      %p43 = scmp.eq.s32.totalorder %s24, 0
      %p44 = por %p42, %p43
      %p45 = scmp.ne.s32.totalorder %s34, %s37
      %p46 = scmp.eq.s32.totalorder %s29, 1
      %p47 = por %p45, %p46
      %p48 = scmp.ne.s32.totalorder %s37, %s38
      %p49 = scmp.eq.s32.totalorder %s29, 0
      %p50 = por %p48, %p49
      %p51 = scmp.ne.s32.totalorder %s37, %s38
      %p52 = scmp.eq.s32.totalorder %s30, 1
      %p53 = por %p51, %p52
      %p55 = scmp.ne.s32.totalorder %s38, %s54
      %p56 = scmp.eq.s32.totalorder %s30, 0
      %p57 = por %p55, %p56
      %s58 = ssub.s32 %s24, %s31
      %p59 = scmp.eq.s32.totalorder %s58, 0
      %s61 = sadd.s32 %s60, 1
      %s62 = scalar_select %p59, %s60, %s61
      %p65 = pneg %p59
      %p66 = scmp.eq.s32.totalorder %s24, 1
      %p67 = por %p65, %p66
      %p68 = scmp.ne.s32.totalorder %s60, %s63
      %p69 = scmp.eq.s32.totalorder %s24, 0
      %p70 = por %p68, %p69
      %p71 = scmp.ne.s32.totalorder %s60, %s63
      %p72 = scmp.eq.s32.totalorder %s29, 1
      %p73 = por %p71, %p72
      %p74 = scmp.ne.s32.totalorder %s63, %s64
      %p75 = scmp.eq.s32.totalorder %s29, 0
      %p76 = por %p74, %p75
      %p77 = scmp.ne.s32.totalorder %s63, %s64
      %p78 = scmp.eq.s32.totalorder %s30, 1
      %p79 = por %p77, %p78
      %p81 = scmp.ne.s32.totalorder %s64, %s80
      %p82 = scmp.eq.s32.totalorder %s30, 0
      %p83 = por %p81, %p82
      %s85 = sadd.s32 %s84, 1
      %p88 = scmp.eq.s32.totalorder %s24, 1
      %p89 = scmp.ne.s32.totalorder %s84, %s86
      %p90 = scmp.eq.s32.totalorder %s24, 0
      %p91 = por %p89, %p90
      %p92 = scmp.ne.s32.totalorder %s84, %s86
      %p93 = scmp.eq.s32.totalorder %s29, 1
      %p94 = por %p92, %p93
      %p95 = scmp.ne.s32.totalorder %s86, %s87
      %p96 = scmp.eq.s32.totalorder %s29, 0
      %p97 = por %p95, %p96
      %p98 = scmp.ne.s32.totalorder %s86, %s87
      %p99 = scmp.eq.s32.totalorder %s30, 1
      %p100 = por %p98, %p99
      %p102 = scmp.ne.s32.totalorder %s87, %s101
      %p103 = scmp.eq.s32.totalorder %s30, 0
      %p104 = por %p102, %p103
      %s106 = sadd.s32 %s105, 1
      %p109 = scmp.eq.s32.totalorder %s24, 1
      %p110 = scmp.ne.s32.totalorder %s105, %s107
      %p111 = scmp.eq.s32.totalorder %s24, 0
      %p112 = por %p110, %p111
      %p113 = scmp.ne.s32.totalorder %s105, %s107
      %p114 = scmp.eq.s32.totalorder %s29, 1
      %p115 = por %p113, %p114
      %p116 = scmp.ne.s32.totalorder %s107, %s108
      %p117 = scmp.eq.s32.totalorder %s29, 0
      %p118 = por %p116, %p117
      %p119 = scmp.ne.s32.totalorder %s107, %s108
      %p120 = scmp.eq.s32.totalorder %s30, 1
      %p121 = por %p119, %p120
      %p123 = scmp.ne.s32.totalorder %s108, %s122
      %p124 = scmp.eq.s32.totalorder %s30, 0
      %p125 = por %p123, %p124
      %s127 = sadd.s32 %s126, 1
      %p130 = scmp.eq.s32.totalorder %s24, 1
      %p131 = scmp.ne.s32.totalorder %s126, %s128
      %p132 = scmp.eq.s32.totalorder %s24, 0
      %p133 = por %p131, %p132
      %p134 = scmp.ne.s32.totalorder %s126, %s128
      %p135 = scmp.eq.s32.totalorder %s29, 1
      %p136 = por %p134, %p135
      %p137 = scmp.ne.s32.totalorder %s128, %s129
      %p138 = scmp.eq.s32.totalorder %s29, 0
      %p139 = por %p137, %p138
      %p140 = scmp.ne.s32.totalorder %s128, %s129
      %p141 = scmp.eq.s32.totalorder %s30, 1
      %p142 = por %p140, %p141
      %p144 = scmp.ne.s32.totalorder %s129, %s143
      %p145 = scmp.eq.s32.totalorder %s30, 0
      %p146 = por %p144, %p145
      %s148 = sadd.s32 %s147, 1
      %p151 = scmp.eq.s32.totalorder %s24, 1
      %p152 = scmp.ne.s32.totalorder %s147, %s149
      %p153 = scmp.eq.s32.totalorder %s24, 0
      %p154 = por %p152, %p153
      %p155 = scmp.ne.s32.totalorder %s147, %s149
      %p156 = scmp.eq.s32.totalorder %s29, 1
      %p157 = por %p155, %p156
      %p158 = scmp.ne.s32.totalorder %s149, %s150
      %p159 = scmp.eq.s32.totalorder %s29, 0
      %p160 = por %p158, %p159
      %p161 = scmp.ne.s32.totalorder %s149, %s150
      %p162 = scmp.eq.s32.totalorder %s30, 1
      %p163 = por %p161, %p162
      %p165 = scmp.ne.s32.totalorder %s150, %s164
      %p166 = scmp.eq.s32.totalorder %s30, 0
      %p167 = por %p165, %p166
      %s169 = sadd.s32 %s168, 1
      %p172 = scmp.eq.s32.totalorder %s24, 1
      %p173 = scmp.ne.s32.totalorder %s168, %s170
      %p174 = scmp.eq.s32.totalorder %s24, 0
      %p175 = por %p173, %p174
      %p176 = scmp.ne.s32.totalorder %s168, %s170
      %p177 = scmp.eq.s32.totalorder %s29, 1
      %p178 = por %p176, %p177
      %p179 = scmp.ne.s32.totalorder %s170, %s171
      %p180 = scmp.eq.s32.totalorder %s29, 0
      %p181 = por %p179, %p180
      %p182 = scmp.ne.s32.totalorder %s170, %s171
      %p183 = scmp.eq.s32.totalorder %s30, 1
      %p184 = por %p182, %p183
      %p186 = scmp.ne.s32.totalorder %s171, %s185
      %p187 = scmp.eq.s32.totalorder %s30, 0
      %p188 = por %p186, %p187
      %s189 = ssub.s32 %s24, %s31
      %p190 = scmp.eq.s32.totalorder %s189, 0
      %s192 = sadd.s32 %s191, 1
      %s193 = scalar_select %p190, %s191, %s192
      %p196 = pneg %p190
      %p197 = scmp.eq.s32.totalorder %s24, 1
      %p198 = por %p196, %p197
      %p199 = scmp.ne.s32.totalorder %s191, %s194
      %p200 = scmp.eq.s32.totalorder %s24, 0
      %p201 = por %p199, %p200
      %p202 = scmp.ne.s32.totalorder %s191, %s194
      %p203 = scmp.eq.s32.totalorder %s29, 1
      %p204 = por %p202, %p203
      %p205 = scmp.ne.s32.totalorder %s194, %s195
      %p206 = scmp.eq.s32.totalorder %s29, 0
      %p207 = por %p205, %p206
      %p208 = scmp.ne.s32.totalorder %s194, %s195
      %p209 = scmp.eq.s32.totalorder %s30, 1
      %p210 = por %p208, %p209
      %p212 = scmp.ne.s32.totalorder %s195, %s211
      %p213 = scmp.eq.s32.totalorder %s30, 0
      %p214 = por %p212, %p213
      %p215 = scmp.le.s32.totalorder 1, %s24
      %p216 = scmp.lt.s32.totalorder %s24, 3
      %p217 = pnand %p215, %p216
      %p218 = pneg %p217
      // Predicated region
      $region9: #{tpu_custom_call.1} parent=5 // pred_check
        _
      $region10: #{tpu_custom_call.1} parent=5 // pred_check_branch
        %220 = sbr.rel (%p217) target = $region12
      $region11: #{tpu_custom_call.1} parent=5 // pred_region
        %s221 = ssub.s32 %s24, 1
        // Predicated region
        $region13: #{tpu_custom_call.1} parent=11 // pred_check
          %p222 = pneg %p97
        $region14: #{tpu_custom_call.1} parent=11 // pred_check_branch
          %224 = sbr.rel (%p222) target = $region16
        $region15: #{tpu_custom_call.1} parent=11 // pred_region
          %s226 = ssub.s32 640, 640
          %227 = vsyncadd [#allocation7], %s226
          %s228 = sshll.u32 [#allocation8], 4
          %s229 = int_to_ptr.vmem [resolvable:$true] %s228
          %234 = dma.hbm_to_vmem [thread:$0]  %s2, 640, %s229, [#allocation7], 128, 128, 8
        $region16: #{tpu_custom_call.1} parent=11 // pred_fallthru
          _
        // Predicated region
        $region17: #{tpu_custom_call.1} parent=11 // pred_check
          %p235 = pneg %p118
        $region18: #{tpu_custom_call.1} parent=11 // pred_check_branch
          %237 = sbr.rel (%p235) target = $region20
        $region19: #{tpu_custom_call.1} parent=11 // pred_region
          %s239 = ssub.s32 16, 16
          %240 = vsyncadd [#allocation10], %s239
          %s242 = sshll.u32 [#allocation9], 4
          %s243 = int_to_ptr.vmem [resolvable:$true] %s242
          %245 = dma.hbm_to_vmem [thread:$0]  %s3, 16, %s243, [#allocation10]
        $region20: #{tpu_custom_call.1} parent=11 // pred_fallthru
          _
        // Predicated region
        $region21: #{tpu_custom_call.1} parent=11 // pred_check
          %p246 = pneg %p139
        $region22: #{tpu_custom_call.1} parent=11 // pred_check_branch
          %248 = sbr.rel (%p246) target = $region24
        $region23: #{tpu_custom_call.1} parent=11 // pred_region
          %s250 = ssub.s32 2048, 2048
          %251 = vsyncadd [#allocation10], %s250
          %s252 = sshll.u32 [#allocation11], 4
          %s253 = int_to_ptr.vmem [resolvable:$true] %s252
          %258 = dma.hbm_to_vmem [thread:$0]  %s4, 2048, %s253, [#allocation10], 128, 128, 8
        $region24: #{tpu_custom_call.1} parent=11 // pred_fallthru
          _
        // Predicated region
        $region25: #{tpu_custom_call.1} parent=11 // pred_check
          %p259 = pneg %p160
        $region26: #{tpu_custom_call.1} parent=11 // pred_check_branch
          %261 = sbr.rel (%p259) target = $region28
        $region27: #{tpu_custom_call.1} parent=11 // pred_region
          %s263 = ssub.s32 64, 64
          %264 = vsyncadd [#allocation13], %s263
          %s266 = sshll.u32 [#allocation12], 4
          %s267 = int_to_ptr.vmem [resolvable:$true] %s266
          %269 = dma.hbm_to_vmem [thread:$0]  %s5, 64, %s267, [#allocation13]
        $region28: #{tpu_custom_call.1} parent=11 // pred_fallthru
          _
        // Predicated region
        $region29: #{tpu_custom_call.1} parent=11 // pred_check
          %p270 = pneg %p181
        $region30: #{tpu_custom_call.1} parent=11 // pred_check_branch
          %272 = sbr.rel (%p270) target = $region32
        $region31: #{tpu_custom_call.1} parent=11 // pred_region
          %s274 = ssub.s32 16, 16
          %275 = vsyncadd [#allocation13], %s274
          %s277 = sshll.u32 [#allocation14], 4
          %s278 = int_to_ptr.vmem [resolvable:$true] %s277
          %280 = dma.hbm_to_vmem [thread:$0]  %s6, 16, %s278, [#allocation13]
        $region32: #{tpu_custom_call.1} parent=11 // pred_fallthru
          _
      $region12: #{tpu_custom_call.1} parent=5 // pred_fallthru
        _
      %p281 = scmp.lt.s32.totalorder %s24, 2
      // Predicated region
      $region33: #{tpu_custom_call.1} parent=5 // pred_check
        %p282 = pneg %p281
      $region34: #{tpu_custom_call.1} parent=5 // pred_check_branch
        %284 = sbr.rel (%p282) target = $region36
      $region35: #{tpu_custom_call.1} parent=5 // pred_region
        // Predicated region
        $region37: #{tpu_custom_call.1} parent=35 // pred_check
          %p285 = pneg %p44
        $region38: #{tpu_custom_call.1} parent=35 // pred_check_branch
          %287 = sbr.rel (%p285) target = $region40
        $region39: #{tpu_custom_call.1} parent=35 // pred_region
          %s288 = sand.u32 %s34, 1
          %s289 = scalar_lea.sflag [#allocation4], %s288
          %s290 = sand.u32 %s34, 1
          %s291 = smul.addr %s290, 512
          %s292 = scalar_lea.vmem [#allocation3], %s291
          %s294 = ssub.s32 8192, 8192
          %295 = vsyncadd %s289, %s294
          %s296 = smul.addr %s24, 64
          %s297 = smul.addr %s296, 128
          %s298 = scalar_lea.hbm %s0, %s297
          %s299 = sshll.u32 %s292, 4
          %s300 = int_to_ptr.vmem [resolvable:$true] %s299
          %305 = dma.hbm_to_vmem [thread:$0]  %s298, 8192, %s300, %s289, 128, 128, 8
        $region40: #{tpu_custom_call.1} parent=35 // pred_fallthru
          _
        // Predicated region
        $region41: #{tpu_custom_call.1} parent=35 // pred_check
          %p306 = pneg %p70
        $region42: #{tpu_custom_call.1} parent=35 // pred_check_branch
          %308 = sbr.rel (%p306) target = $region44
        $region43: #{tpu_custom_call.1} parent=35 // pred_region
          %s309 = sand.u32 %s24, 1
          %s310 = scalar_lea.sflag [#allocation7], %s309
          %s311 = sand.u32 %s60, 1
          %s312 = smul.addr %s311, 128
          %s313 = scalar_lea.vmem [#allocation6], %s312
          %s315 = ssub.s32 2048, 2048
          %316 = vsyncadd %s310, %s315
          %s317 = smul.addr %s24, 16
          %s318 = smul.addr %s317, 128
          %s319 = scalar_lea.hbm %s1, %s318
          %s320 = sshll.u32 %s313, 4
          %s321 = int_to_ptr.vmem [resolvable:$true] %s320
          %326 = dma.hbm_to_vmem [thread:$0]  %s319, 2048, %s321, %s310, 128, 128, 8
        $region44: #{tpu_custom_call.1} parent=35 // pred_fallthru
          _
      $region36: #{tpu_custom_call.1} parent=5 // pred_fallthru
        _
      %p327 = scmp.le.s32.totalorder 1, %s24
      %p328 = scmp.lt.s32.totalorder %s24, 3
      %p329 = pnand %p327, %p328
      %p330 = pneg %p329
      // Predicated region
      $region45: #{tpu_custom_call.1} parent=5 // pred_check
        _
      $region46: #{tpu_custom_call.1} parent=5 // pred_check_branch
        %332 = sbr.rel (%p329) target = $region48
      $region47: #{tpu_custom_call.1} parent=5 // pred_region
        %s333 = ssub.s32 %s24, 1
        %s334 = sand.u32 %s37, 1
        %s335 = scalar_lea.sflag [#allocation4], %s334
        %s336 = sand.u32 %s37, 1
        %s337 = smul.addr %s336, 512
        %s338 = scalar_lea.vmem [#allocation3], %s337
        // Predicated region
        $region49: #{tpu_custom_call.1} parent=47 // pred_check
          %p339 = pneg %p50
        $region50: #{tpu_custom_call.1} parent=47 // pred_check_branch
          %341 = sbr.rel (%p339) target = $region52
        $region51: #{tpu_custom_call.1} parent=47 // pred_region
          %342 = dma.done %s335, 8192
        $region52: #{tpu_custom_call.1} parent=47 // pred_fallthru
          _
        %s343 = sand.u32 %s29, 1
        %s344 = scalar_lea.sflag [#allocation7], %s343
        %s345 = sand.u32 %s63, 1
        %s346 = smul.addr %s345, 128
        %s347 = scalar_lea.vmem [#allocation6], %s346
        // Predicated region
        $region53: #{tpu_custom_call.1} parent=47 // pred_check
          %p348 = pneg %p76
        $region54: #{tpu_custom_call.1} parent=47 // pred_check_branch
          %350 = sbr.rel (%p348) target = $region56
        $region55: #{tpu_custom_call.1} parent=47 // pred_region
          %351 = dma.done %s344, 2048
        $region56: #{tpu_custom_call.1} parent=47 // pred_fallthru
          _
        // Predicated region
        $region57: #{tpu_custom_call.1} parent=47 // pred_check
          %p352 = pneg %p97
        $region58: #{tpu_custom_call.1} parent=47 // pred_check_branch
          %354 = sbr.rel (%p352) target = $region60
        $region59: #{tpu_custom_call.1} parent=47 // pred_region
          %355 = dma.done [#allocation7], 640
        $region60: #{tpu_custom_call.1} parent=47 // pred_fallthru
          _
        // Predicated region
        $region61: #{tpu_custom_call.1} parent=47 // pred_check
          %p356 = pneg %p118
        $region62: #{tpu_custom_call.1} parent=47 // pred_check_branch
          %358 = sbr.rel (%p356) target = $region64
        $region63: #{tpu_custom_call.1} parent=47 // pred_region
          %359 = dma.done [#allocation10], 16
        $region64: #{tpu_custom_call.1} parent=47 // pred_fallthru
          _
        // Predicated region
        $region65: #{tpu_custom_call.1} parent=47 // pred_check
          %p360 = pneg %p139
        $region66: #{tpu_custom_call.1} parent=47 // pred_check_branch
          %362 = sbr.rel (%p360) target = $region68
        $region67: #{tpu_custom_call.1} parent=47 // pred_region
          %363 = dma.done [#allocation10], 2048
        $region68: #{tpu_custom_call.1} parent=47 // pred_fallthru
          _
        // Predicated region
        $region69: #{tpu_custom_call.1} parent=47 // pred_check
          %p364 = pneg %p160
        $region70: #{tpu_custom_call.1} parent=47 // pred_check_branch
          %366 = sbr.rel (%p364) target = $region72
        $region71: #{tpu_custom_call.1} parent=47 // pred_region
          %367 = dma.done [#allocation13], 64
        $region72: #{tpu_custom_call.1} parent=47 // pred_fallthru
          _
        // Predicated region
        $region73: #{tpu_custom_call.1} parent=47 // pred_check
          %p368 = pneg %p181
        $region74: #{tpu_custom_call.1} parent=47 // pred_check_branch
          %370 = sbr.rel (%p368) target = $region76
        $region75: #{tpu_custom_call.1} parent=47 // pred_region
          %371 = dma.done [#allocation13], 16
        $region76: #{tpu_custom_call.1} parent=47 // pred_fallthru
          _
        %s372 = sand.u32 %s37, 1
        %s373 = scalar_lea.sflag [#allocation4], %s372
        %s374 = sand.u32 %s37, 1
        %s375 = smul.addr %s374, 512
        %s376 = scalar_lea.vmem [#allocation3], %s375
        %p377 = pneg %p50
        %p378 = pneg %p47
        %s379 = sand.u32 %s29, 1
        %s380 = scalar_lea.sflag [#allocation7], %s379
        %s381 = sand.u32 %s63, 1
        %s382 = smul.addr %s381, 128
        %s383 = scalar_lea.vmem [#allocation6], %s382
        %p384 = pneg %p76
        %p385 = pneg %p73
        %p386 = pneg %p97
        %p387 = pneg %p94
        %p388 = pneg %p118
        %p389 = pneg %p115
        %p390 = pneg %p139
        %p391 = pneg %p136
        %p392 = pneg %p160
        %p393 = pneg %p157
        %p394 = pneg %p181
        %p395 = pneg %p178
        %p396 = pneg %p207
        %p397 = pneg %p204
        %s398 = sand.u32 %s194, 1
        %s399 = scalar_lea.sflag [#allocation5], %s398
        %s400 = sand.u32 %s194, 1
        %s401 = smul.addr %s400, 128
        %s402 = scalar_lea.vmem [#allocation15], %s401
        %vm403 = vcmask 64512
        %404 = vst.msk [vmem:[#allocation2] sm:$0xff] %vm403, 0.0
        %405 = vst.msk [vmem:[#allocation2 + $0x8] sm:$0xff] %vm403, 0.0
        %vm406 = vcmask 57344
        %407 = vst.msk [vmem:[#allocation2 + $0x10] sm:$0x1] %vm406, 0.0
        %408 = vst.msk [vmem:[#allocation2 + $0xd8] sm:$0xff] %vm403, 0.0
        %409 = vst.msk [vmem:[#allocation2 + $0xe0] sm:$0xff] %vm403, 0.0
        %410 = vst.msk [vmem:[#allocation2 + $0xe8] sm:$0x1] %vm406, 0.0
        %s411 = scalar_lea.vmem [#allocation2], 624
        %412 = vst.msk [vmem:[%s411] sm:$0xff] %vm403, 0.0
        %413 = vst.msk [vmem:[%s411 + $0x8] sm:$0xff] %vm403, 0.0
        %414 = vst.msk [vmem:[%s411 + $0x10] sm:$0x1] %vm406, 0.0
        %415 = vst.msk [vmem:[%s411 + $0xd8] sm:$0xff] %vm403, 0.0
        %416 = vst.msk [vmem:[%s411 + $0xe0] sm:$0xff] %vm403, 0.0
        %417 = vst.msk [vmem:[%s411 + $0xe8] sm:$0x1] %vm406, 0.0
        %418 = vst.msk [vmem:[#allocation2] sm:$0x1] %vm406, 0.0
        %419 = vst.msk [vmem:[#allocation2 + $0x18] sm:$0x1] %vm406, 0.0
        %420 = vst.msk [vmem:[#allocation2 + $0x30] sm:$0x1] %vm406, 0.0
        %421 = vst.msk [vmem:[#allocation2 + $0x48] sm:$0x1] %vm406, 0.0
        %422 = vst.msk [vmem:[#allocation2 + $0x60] sm:$0x1] %vm406, 0.0
        %423 = vst.msk [vmem:[#allocation2 + $0x78] sm:$0x1] %vm406, 0.0
        %424 = vst.msk [vmem:[#allocation2 + $0x90] sm:$0x1] %vm406, 0.0
        %425 = vst.msk [vmem:[#allocation2 + $0xa8] sm:$0x1] %vm406, 0.0
        %426 = vst.msk [vmem:[#allocation2 + $0xc0] sm:$0x1] %vm406, 0.0
        %427 = vst.msk [vmem:[#allocation2 + $0x1b0] sm:$0x1] %vm406, 0.0
        %428 = vst.msk [vmem:[#allocation2 + $0x1c8] sm:$0x1] %vm406, 0.0
        %429 = vst.msk [vmem:[#allocation2 + $0x1e0] sm:$0x1] %vm406, 0.0
        %430 = vst.msk [vmem:[#allocation2 + $0x1f8] sm:$0x1] %vm406, 0.0
        %431 = vst.msk [vmem:[#allocation2 + $0x210] sm:$0x1] %vm406, 0.0
        %432 = vst.msk [vmem:[#allocation2 + $0x228] sm:$0x1] %vm406, 0.0
        %433 = vst.msk [vmem:[#allocation2 + $0x240] sm:$0x1] %vm406, 0.0
        %434 = vst.msk [vmem:[#allocation2 + $0x258] sm:$0x1] %vm406, 0.0
        %435 = vst.msk [vmem:[#allocation2 + $0x270] sm:$0x1] %vm406, 0.0
        %s436 = scalar_lea.vmem [#allocation2], 216
        %437 = vst.msk [vmem:[%s436 + $0x10] sm:$0x1] %vm406, 0.0
        %438 = vst.msk [vmem:[%s436 + $0x28] sm:$0x1] %vm406, 0.0
        %439 = vst.msk [vmem:[%s436 + $0x40] sm:$0x1] %vm406, 0.0
        %440 = vst.msk [vmem:[%s436 + $0x58] sm:$0x1] %vm406, 0.0
        %441 = vst.msk [vmem:[%s436 + $0x70] sm:$0x1] %vm406, 0.0
        %442 = vst.msk [vmem:[%s436 + $0x88] sm:$0x1] %vm406, 0.0
        %443 = vst.msk [vmem:[%s436 + $0xa0] sm:$0x1] %vm406, 0.0
        %444 = vst.msk [vmem:[%s436 + $0xb8] sm:$0x1] %vm406, 0.0
        %445 = vst.msk [vmem:[%s436 + $0xd0] sm:$0x1] %vm406, 0.0
        %446 = vst.msk [vmem:[%s436 + $0x1c0] sm:$0x1] %vm406, 0.0
        %447 = vst.msk [vmem:[%s436 + $0x1d8] sm:$0x1] %vm406, 0.0
        %448 = vst.msk [vmem:[%s436 + $0x1f0] sm:$0x1] %vm406, 0.0
        %449 = vst.msk [vmem:[%s436 + $0x208] sm:$0x1] %vm406, 0.0
        %450 = vst.msk [vmem:[%s436 + $0x220] sm:$0x1] %vm406, 0.0
        %451 = vst.msk [vmem:[%s436 + $0x238] sm:$0x1] %vm406, 0.0
        %452 = vst.msk [vmem:[%s436 + $0x250] sm:$0x1] %vm406, 0.0
        %453 = vst.msk [vmem:[%s436 + $0x268] sm:$0x1] %vm406, 0.0
        %454 = vst.msk [vmem:[%s436 + $0x280] sm:$0x1] %vm406, 0.0
        %v455 = vld [vmem:[#allocation9] sm:$0x1]
        %v456 = vld [vmem:[#allocation8] sm:$0xff]
        %v457 = vld [vmem:[#allocation8 + $0x8] sm:$0xff]
        %v458 = vld [vmem:[#allocation8 + $0x10] sm:$0xff]
        %v459 = vld [vmem:[#allocation8 + $0x18] sm:$0xff]
        %v460 = vld [vmem:[#allocation8 + $0x20] sm:$0xf]
        %v461 = vld [vmem:[%s338] sm:$0xff]
        %v462 = vld [vmem:[%s338 + $0x8] sm:$0xff]
        %v463 = vld [vmem:[%s338 + $0x10] sm:$0xff]
        %v464 = vld [vmem:[%s338 + $0x18] sm:$0xff]
        %v465 = vld [vmem:[%s338 + $0x20] sm:$0xff]
        %v466 = vld [vmem:[%s338 + $0x28] sm:$0xff]
        %v467 = vld [vmem:[%s338 + $0x30] sm:$0xff]
        %v468 = vld [vmem:[%s338 + $0x38] sm:$0xff]
        %v469 = vld [vmem:[%s338 + $0x40] sm:$0xff]
        %v470 = vld [vmem:[%s338 + $0x48] sm:$0xff]
        %v471 = vld [vmem:[%s338 + $0x50] sm:$0xff]
        %v472 = vld [vmem:[%s338 + $0x58] sm:$0xff]
        %v473 = vld [vmem:[%s338 + $0x60] sm:$0xff]
        %v474 = vld [vmem:[%s338 + $0x68] sm:$0xff]
        %v475 = vld [vmem:[%s338 + $0x70] sm:$0xff]
        %v476 = vld [vmem:[%s338 + $0x78] sm:$0xff]
        %v477 = vld [vmem:[%s338 + $0x80] sm:$0xff]
        %v478 = vld [vmem:[%s338 + $0x88] sm:$0xff]
        %v479 = vld [vmem:[%s338 + $0x90] sm:$0xff]
        %v480 = vld [vmem:[%s338 + $0x98] sm:$0xff]
        %v481 = vld [vmem:[%s338 + $0xa0] sm:$0xff]
        %v482 = vld [vmem:[%s338 + $0xa8] sm:$0xff]
        %v483 = vld [vmem:[%s338 + $0xb0] sm:$0xff]
        %v484 = vld [vmem:[%s338 + $0xb8] sm:$0xff]
        %v485 = vld [vmem:[%s338 + $0xc0] sm:$0xff]
        %v486 = vld [vmem:[%s338 + $0xc8] sm:$0xff]
        %v487 = vld [vmem:[%s338 + $0xd0] sm:$0xff]
        %v488 = vld [vmem:[%s338 + $0xd8] sm:$0xff]
        %v489 = vld [vmem:[%s338 + $0xe0] sm:$0xff]
        %v490 = vld [vmem:[%s338 + $0xe8] sm:$0xff]
        %v491 = vld [vmem:[%s338 + $0xf0] sm:$0xff]
        %v492 = vld [vmem:[%s338 + $0xf8] sm:$0xff]
        %v494 = vlaneseq
        %v495 = vshrl.u32 %v494, 7
        %v496 = vsub.s32 0, %v495
        %v497 = vrot.slane %v455, %v496
        %vm499 = vcmask 293888
        %v501 = vsel %vm499, %v461, 0
        %v504 = vsel %vm499, %v462, 0
        %v507 = vsel %vm499, %v463, 0
        %v510 = vsel %vm499, %v464, 0
        %v513 = vsel %vm499, %v465, 0
        %v516 = vsel %vm499, %v466, 0
        %v519 = vsel %vm499, %v467, 0
        %v522 = vsel %vm499, %v468, 0
        %v525 = vsel %vm499, %v469, 0
        %v528 = vsel %vm499, %v470, 0
        %v531 = vsel %vm499, %v471, 0
        %v534 = vsel %vm499, %v472, 0
        %v537 = vsel %vm499, %v473, 0
        %v540 = vsel %vm499, %v474, 0
        %v543 = vsel %vm499, %v475, 0
        %v546 = vsel %vm499, %v476, 0
        %v549 = vsel %vm499, %v477, 0
        %v552 = vsel %vm499, %v478, 0
        %v555 = vsel %vm499, %v479, 0
        %v558 = vsel %vm499, %v480, 0
        %v561 = vsel %vm499, %v481, 0
        %v564 = vsel %vm499, %v482, 0
        %v567 = vsel %vm499, %v483, 0
        %v570 = vsel %vm499, %v484, 0
        %v573 = vsel %vm499, %v485, 0
        %v576 = vsel %vm499, %v486, 0
        %v579 = vsel %vm499, %v487, 0
        %v582 = vsel %vm499, %v488, 0
        %v585 = vsel %vm499, %v489, 0
        %v588 = vsel %vm499, %v490, 0
        %v591 = vsel %vm499, %v491, 0
        %v594 = vsel %vm499, %v492, 0
        %vm596 = vcmask 1043456
        %v598 = vsel %vm596, %v460, 0
        %600 = vmatprep.subr.mxu0 0.0
        %601 = vmatpush1.msra.mxu0 %v456
        %602 = vmatprep.subr.mxu0 0.0
        %603 = vmatpush1.msra.mxu0 %v457
        %604 = vmatprep.subr.mxu0 0.0
        %605 = vmatpush1.msra.mxu0 %v458
        %606 = vmatprep.subr.mxu0 0.0
        %607 = vmatpush1.msra.mxu0 %v459
        %608 = vmatprep.subr.mxu0 0.0
        %609 = vmatpush1.msra.mxu0 %v598
        %610 = vmatprep.subr.mxu0 0.0
        %611 = vmatpush1.msra.mxu0 0.0
        %612 = vmatprep.subr.mxu0 0.0
        %613 = vmatpush1.msra.mxu0 0.0
        %614 = vmatprep.subr.mxu0 0.0
        %615 = vmatpush1.msra.mxu0 0.0
        %616 = vmatprep.subr.mxu0 0.0
        %617 = vmatpush1.msra.mxu0 0.0
        %618 = vmatprep.subr.mxu0 0.0
        %619 = vmatpush1.msra.mxu0 0.0
        %620 = vmatprep.subr.mxu0 0.0
        %621 = vmatpush1.msra.mxu0 0.0
        %622 = vmatprep.subr.mxu0 0.0
        %623 = vmatpush1.msra.mxu0 0.0
        %624 = vmatprep.subr.mxu0 0.0
        %625 = vmatpush1.msra.mxu0 0.0
        %626 = vmatprep.subr.mxu0 0.0
        %627 = vmatpush1.msra.mxu0 0.0
        %628 = vmatprep.subr.mxu0 0.0
        %629 = vmatpush1.msra.mxu0 0.0
        %630 = vmatprep.subr.mxu0 0.0
        %631 = vmatpush1.msra.mxu0 0.0
        %632 = vmatprep.subr.mxu0 0.0
        %633 = vmatpush1.msra.mxu0 0.0
        %634 = vmatprep.subr.mxu0 0.0
        %635 = vmatpush1.msra.mxu0 0.0
        %636 = vmatprep.subr.mxu0 0.0
        %637 = vmatpush1.msra.mxu0 0.0
        %638 = vmatprep.subr.mxu0 0.0
        %639 = vmatpush1.msra.mxu0 0.0
        %640 = vmatprep.subr.mxu0 0.0
        %641 = vmatpush1.msra.mxu0 0.0
        %642 = vmatprep.subr.mxu0 0.0
        %643 = vmatpush1.msra.mxu0 0.0
        %644 = vmatprep.subr.mxu0 0.0
        %645 = vmatpush1.msra.mxu0 0.0
        %646 = vmatprep.subr.mxu0 0.0
        %647 = vmatpush1.msra.mxu0 0.0
        %648 = vmatprep.subr.mxu0 0.0
        %649 = vmatpush1.msra.mxu0 0.0
        %650 = vmatprep.subr.mxu0 0.0
        %651 = vmatpush1.msra.mxu0 0.0
        %652 = vmatprep.subr.mxu0 0.0
        %653 = vmatpush1.msra.mxu0 0.0
        %654 = vmatprep.subr.mxu0 0.0
        %655 = vmatpush1.msra.mxu0 0.0
        %656 = vmatprep.subr.mxu0 0.0
        %657 = vmatpush1.msra.mxu0 0.0
        %658 = vmatprep.subr.mxu0 0.0
        %659 = vmatpush1.msra.mxu0 0.0
        %660 = vmatprep.subr.mxu0 0.0
        %661 = vmatpush1.msra.mxu0 0.0
        %662 = vmatprep.subr.mxu0 0.0
        %663 = vmatpush1.msra.mxu0 0.0
        %664 = vmatprep.mubr.f32.mxu0 0.0
        %665 = vmatmul.mubr.f32.gmra.mrb[0].mxu0 %v501
        %v666 = vpop.f32.mrb[0].mxu0
        %v667 = vadd.f32 %v497, %v666
        %v668 = vpop.f32.mrb[0].mxu0
        %669 = vmatprep.mubr.f32.mxu0 0.0
        %670 = vmatmul.mubr.f32.gmra.mrb[0].mxu0 %v504
        %v671 = vpop.f32.mrb[0].mxu0
        %v672 = vadd.f32 %v497, %v671
        %v673 = vpop.f32.mrb[0].mxu0
        %674 = vmatprep.mubr.f32.mxu0 0.0
        %675 = vmatmul.mubr.f32.gmra.mrb[0].mxu0 %v507
        %v676 = vpop.f32.mrb[0].mxu0
        %v677 = vadd.f32 %v497, %v676
        %v678 = vpop.f32.mrb[0].mxu0
        %679 = vmatprep.mubr.f32.mxu0 0.0
        %680 = vmatmul.mubr.f32.gmra.mrb[0].mxu0 %v510
        %v681 = vpop.f32.mrb[0].mxu0
        %v682 = vadd.f32 %v497, %v681
        %v683 = vpop.f32.mrb[0].mxu0
        %684 = vmatprep.mubr.f32.mxu0 0.0
        %685 = vmatmul.mubr.f32.gmra.mrb[0].mxu0 %v513
        %v686 = vpop.f32.mrb[0].mxu0
        %v687 = vadd.f32 %v497, %v686
        %v688 = vpop.f32.mrb[0].mxu0
        %689 = vmatprep.mubr.f32.mxu0 0.0
        %690 = vmatmul.mubr.f32.gmra.mrb[0].mxu0 %v516
        %v691 = vpop.f32.mrb[0].mxu0
        %v692 = vadd.f32 %v497, %v691
        %v693 = vpop.f32.mrb[0].mxu0
        %694 = vmatprep.mubr.f32.mxu0 0.0
        %695 = vmatmul.mubr.f32.gmra.mrb[0].mxu0 %v519
        %v696 = vpop.f32.mrb[0].mxu0
        %v697 = vadd.f32 %v497, %v696
        %v698 = vpop.f32.mrb[0].mxu0
        %699 = vmatprep.mubr.f32.mxu0 0.0
        %700 = vmatmul.mubr.f32.gmra.mrb[0].mxu0 %v522
        %v701 = vpop.f32.mrb[0].mxu0
        %v702 = vadd.f32 %v497, %v701
        %v703 = vpop.f32.mrb[0].mxu0
        %704 = vmatprep.mubr.f32.mxu0 0.0
        %705 = vmatmul.mubr.f32.gmra.mrb[0].mxu0 %v525
        %v706 = vpop.f32.mrb[0].mxu0
        %v707 = vadd.f32 %v497, %v706
        %v708 = vpop.f32.mrb[0].mxu0
        %709 = vmatprep.mubr.f32.mxu0 0.0
        %710 = vmatmul.mubr.f32.gmra.mrb[0].mxu0 %v528
        %v711 = vpop.f32.mrb[0].mxu0
        %v712 = vadd.f32 %v497, %v711
        %v713 = vpop.f32.mrb[0].mxu0
        %714 = vmatprep.mubr.f32.mxu0 0.0
        %715 = vmatmul.mubr.f32.gmra.mrb[0].mxu0 %v531
        %v716 = vpop.f32.mrb[0].mxu0
        %v717 = vadd.f32 %v497, %v716
        %v718 = vpop.f32.mrb[0].mxu0
        %719 = vmatprep.mubr.f32.mxu0 0.0
        %720 = vmatmul.mubr.f32.gmra.mrb[0].mxu0 %v534
        %v721 = vpop.f32.mrb[0].mxu0
        %v722 = vadd.f32 %v497, %v721
        %v723 = vpop.f32.mrb[0].mxu0
        %724 = vmatprep.mubr.f32.mxu0 0.0
        %725 = vmatmul.mubr.f32.gmra.mrb[0].mxu0 %v537
        %v726 = vpop.f32.mrb[0].mxu0
        %v727 = vadd.f32 %v497, %v726
        %v728 = vpop.f32.mrb[0].mxu0
        %729 = vmatprep.mubr.f32.mxu0 0.0
        %730 = vmatmul.mubr.f32.gmra.mrb[0].mxu0 %v540
        %v731 = vpop.f32.mrb[0].mxu0
        %v732 = vadd.f32 %v497, %v731
        %v733 = vpop.f32.mrb[0].mxu0
        %734 = vmatprep.mubr.f32.mxu0 0.0
        %735 = vmatmul.mubr.f32.gmra.mrb[0].mxu0 %v543
        %v736 = vpop.f32.mrb[0].mxu0
        %v737 = vadd.f32 %v497, %v736
        %v738 = vpop.f32.mrb[0].mxu0
        %739 = vmatprep.mubr.f32.mxu0 0.0
        %740 = vmatmul.mubr.f32.gmra.mrb[0].mxu0 %v546
        %v741 = vpop.f32.mrb[0].mxu0
        %v742 = vadd.f32 %v497, %v741
        %v743 = vpop.f32.mrb[0].mxu0
        %744 = vmatprep.mubr.f32.mxu0 0.0
        %745 = vmatmul.mubr.f32.gmra.mrb[0].mxu0 %v549
        %v746 = vpop.f32.mrb[0].mxu0
        %v747 = vadd.f32 %v497, %v746
        %v748 = vpop.f32.mrb[0].mxu0
        %749 = vmatprep.mubr.f32.mxu0 0.0
        %750 = vmatmul.mubr.f32.gmra.mrb[0].mxu0 %v552
        %v751 = vpop.f32.mrb[0].mxu0
        %v752 = vadd.f32 %v497, %v751
        %v753 = vpop.f32.mrb[0].mxu0
        %754 = vmatprep.mubr.f32.mxu0 0.0
        %755 = vmatmul.mubr.f32.gmra.mrb[0].mxu0 %v555
        %v756 = vpop.f32.mrb[0].mxu0
        %v757 = vadd.f32 %v497, %v756
        %v758 = vpop.f32.mrb[0].mxu0
        %759 = vmatprep.mubr.f32.mxu0 0.0
        %760 = vmatmul.mubr.f32.gmra.mrb[0].mxu0 %v558
        %v761 = vpop.f32.mrb[0].mxu0
        %v762 = vadd.f32 %v497, %v761
        %v763 = vpop.f32.mrb[0].mxu0
        %764 = vmatprep.mubr.f32.mxu0 0.0
        %765 = vmatmul.mubr.f32.gmra.mrb[0].mxu0 %v561
        %v766 = vpop.f32.mrb[0].mxu0
        %v767 = vadd.f32 %v497, %v766
        %v768 = vpop.f32.mrb[0].mxu0
        %769 = vmatprep.mubr.f32.mxu0 0.0
        %770 = vmatmul.mubr.f32.gmra.mrb[0].mxu0 %v564
        %v771 = vpop.f32.mrb[0].mxu0
        %v772 = vadd.f32 %v497, %v771
        %v773 = vpop.f32.mrb[0].mxu0
        %774 = vmatprep.mubr.f32.mxu0 0.0
        %775 = vmatmul.mubr.f32.gmra.mrb[0].mxu0 %v567
        %v776 = vpop.f32.mrb[0].mxu0
        %v777 = vadd.f32 %v497, %v776
        %v778 = vpop.f32.mrb[0].mxu0
        %779 = vmatprep.mubr.f32.mxu0 0.0
        %780 = vmatmul.mubr.f32.gmra.mrb[0].mxu0 %v570
        %v781 = vpop.f32.mrb[0].mxu0
        %v782 = vadd.f32 %v497, %v781
        %v783 = vpop.f32.mrb[0].mxu0
        %784 = vmatprep.mubr.f32.mxu0 0.0
        %785 = vmatmul.mubr.f32.gmra.mrb[0].mxu0 %v573
        %v786 = vpop.f32.mrb[0].mxu0
        %v787 = vadd.f32 %v497, %v786
        %v788 = vpop.f32.mrb[0].mxu0
        %789 = vmatprep.mubr.f32.mxu0 0.0
        %790 = vmatmul.mubr.f32.gmra.mrb[0].mxu0 %v576
        %v791 = vpop.f32.mrb[0].mxu0
        %v792 = vadd.f32 %v497, %v791
        %v793 = vpop.f32.mrb[0].mxu0
        %794 = vmatprep.mubr.f32.mxu0 0.0
        %795 = vmatmul.mubr.f32.gmra.mrb[0].mxu0 %v579
        %v796 = vpop.f32.mrb[0].mxu0
        %v797 = vadd.f32 %v497, %v796
        %v798 = vpop.f32.mrb[0].mxu0
        %799 = vmatprep.mubr.f32.mxu0 0.0
        %800 = vmatmul.mubr.f32.gmra.mrb[0].mxu0 %v582
        %v801 = vpop.f32.mrb[0].mxu0
        %v802 = vadd.f32 %v497, %v801
        %v803 = vpop.f32.mrb[0].mxu0
        %804 = vmatprep.mubr.f32.mxu0 0.0
        %805 = vmatmul.mubr.f32.gmra.mrb[0].mxu0 %v585
        %v806 = vpop.f32.mrb[0].mxu0
        %v807 = vadd.f32 %v497, %v806
        %v808 = vpop.f32.mrb[0].mxu0
        %809 = vmatprep.mubr.f32.mxu0 0.0
        %810 = vmatmul.mubr.f32.gmra.mrb[0].mxu0 %v588
        %v811 = vpop.f32.mrb[0].mxu0
        %v812 = vadd.f32 %v497, %v811
        %v813 = vpop.f32.mrb[0].mxu0
        %814 = vmatprep.mubr.f32.mxu0 0.0
        %815 = vmatmul.mubr.f32.gmra.mrb[0].mxu0 %v591
        %v816 = vpop.f32.mrb[0].mxu0
        %v817 = vadd.f32 %v497, %v816
        %v818 = vpop.f32.mrb[0].mxu0
        %819 = vmatprep.mubr.f32.mxu0 0.0
        %820 = vmatmul.mubr.f32.gmra.mrb[0].mxu0 %v594
        %v821 = vpop.f32.mrb[0].mxu0
        %v822 = vadd.f32 %v497, %v821
        %v823 = vpop.f32.mrb[0].mxu0
        %824 = vdwg.mxu0
        %v825 = vmul.f32 %v667, 0.2
        %v826 = vmul.f32 %v672, 0.2
        %v827 = vmul.f32 %v677, 0.2
        %v828 = vmul.f32 %v682, 0.2
        %v829 = vmul.f32 %v687, 0.2
        %v830 = vmul.f32 %v692, 0.2
        %v831 = vmul.f32 %v697, 0.2
        %v832 = vmul.f32 %v702, 0.2
        %v833 = vmul.f32 %v707, 0.2
        %v834 = vmul.f32 %v712, 0.2
        %v835 = vmul.f32 %v717, 0.2
        %v836 = vmul.f32 %v722, 0.2
        %v837 = vmul.f32 %v727, 0.2
        %v838 = vmul.f32 %v732, 0.2
        %v839 = vmul.f32 %v737, 0.2
        %v840 = vmul.f32 %v742, 0.2
        %v841 = vmul.f32 %v747, 0.2
        %v842 = vmul.f32 %v752, 0.2
        %v843 = vmul.f32 %v757, 0.2
        %v844 = vmul.f32 %v762, 0.2
        %v845 = vmul.f32 %v767, 0.2
        %v846 = vmul.f32 %v772, 0.2
        %v847 = vmul.f32 %v777, 0.2
        %v848 = vmul.f32 %v782, 0.2
        %v849 = vmul.f32 %v787, 0.2
        %v850 = vmul.f32 %v792, 0.2
        %v851 = vmul.f32 %v797, 0.2
        %v852 = vmul.f32 %v802, 0.2
        %v853 = vmul.f32 %v807, 0.2
        %v854 = vmul.f32 %v812, 0.2
        %v855 = vmul.f32 %v817, 0.2
        %v856 = vmul.f32 %v822, 0.2
        %v857 = vmax.f32 %v667, %v825
        %v858 = vmax.f32 %v672, %v826
        %v859 = vmax.f32 %v677, %v827
        %v860 = vmax.f32 %v682, %v828
        %v861 = vmax.f32 %v687, %v829
        %v862 = vmax.f32 %v692, %v830
        %v863 = vmax.f32 %v697, %v831
        %v864 = vmax.f32 %v702, %v832
        %v865 = vmax.f32 %v707, %v833
        %v866 = vmax.f32 %v712, %v834
        %v867 = vmax.f32 %v717, %v835
        %v868 = vmax.f32 %v722, %v836
        %v869 = vmax.f32 %v727, %v837
        %v870 = vmax.f32 %v732, %v838
        %v871 = vmax.f32 %v737, %v839
        %v872 = vmax.f32 %v742, %v840
        %v873 = vmax.f32 %v747, %v841
        %v874 = vmax.f32 %v752, %v842
        %v875 = vmax.f32 %v757, %v843
        %v876 = vmax.f32 %v762, %v844
        %v877 = vmax.f32 %v767, %v845
        %v878 = vmax.f32 %v772, %v846
        %v879 = vmax.f32 %v777, %v847
        %v880 = vmax.f32 %v782, %v848
        %v881 = vmax.f32 %v787, %v849
        %v882 = vmax.f32 %v792, %v850
        %v883 = vmax.f32 %v797, %v851
        %v884 = vmax.f32 %v802, %v852
        %v885 = vmax.f32 %v807, %v853
        %v886 = vmax.f32 %v812, %v854
        %v887 = vmax.f32 %v817, %v855
        %v888 = vmax.f32 %v822, %v856
        %s889 = scalar_lea.vmem [#allocation2], 648
        %890 = vst.msk [vmem:[%s889] sm:$0xff] %vm403, %v857
        %891 = vst.msk [vmem:[%s889 + $0x8] sm:$0xff] %vm403, %v858
        %892 = vst.msk [vmem:[%s889 + $0x18] sm:$0xff] %vm403, %v859
        %893 = vst.msk [vmem:[%s889 + $0x20] sm:$0xff] %vm403, %v860
        %894 = vst.msk [vmem:[%s889 + $0x30] sm:$0xff] %vm403, %v861
        %895 = vst.msk [vmem:[%s889 + $0x38] sm:$0xff] %vm403, %v862
        %896 = vst.msk [vmem:[%s889 + $0x48] sm:$0xff] %vm403, %v863
        %897 = vst.msk [vmem:[%s889 + $0x50] sm:$0xff] %vm403, %v864
        %898 = vst.msk [vmem:[%s889 + $0x60] sm:$0xff] %vm403, %v865
        %899 = vst.msk [vmem:[%s889 + $0x68] sm:$0xff] %vm403, %v866
        %900 = vst.msk [vmem:[%s889 + $0x78] sm:$0xff] %vm403, %v867
        %901 = vst.msk [vmem:[%s889 + $0x80] sm:$0xff] %vm403, %v868
        %902 = vst.msk [vmem:[%s889 + $0x90] sm:$0xff] %vm403, %v869
        %903 = vst.msk [vmem:[%s889 + $0x98] sm:$0xff] %vm403, %v870
        %904 = vst.msk [vmem:[%s889 + $0xa8] sm:$0xff] %vm403, %v871
        %905 = vst.msk [vmem:[%s889 + $0xb0] sm:$0xff] %vm403, %v872
        %s906 = scalar_lea.vmem [#allocation2], 432
        %907 = vst.msk [vmem:[%s906 + $0x1] sm:$0xff] %vm403, %v873
        %908 = vst.msk [vmem:[%s906 + $0x9] sm:$0xff] %vm403, %v874
        %909 = vst.msk [vmem:[%s906 + $0x19] sm:$0xff] %vm403, %v875
        %910 = vst.msk [vmem:[%s906 + $0x21] sm:$0xff] %vm403, %v876
        %911 = vst.msk [vmem:[%s906 + $0x31] sm:$0xff] %vm403, %v877
        %912 = vst.msk [vmem:[%s906 + $0x39] sm:$0xff] %vm403, %v878
        %913 = vst.msk [vmem:[%s906 + $0x49] sm:$0xff] %vm403, %v879
        %914 = vst.msk [vmem:[%s906 + $0x51] sm:$0xff] %vm403, %v880
        %915 = vst.msk [vmem:[%s906 + $0x61] sm:$0xff] %vm403, %v881
        %916 = vst.msk [vmem:[%s906 + $0x69] sm:$0xff] %vm403, %v882
        %917 = vst.msk [vmem:[%s906 + $0x79] sm:$0xff] %vm403, %v883
        %918 = vst.msk [vmem:[%s906 + $0x81] sm:$0xff] %vm403, %v884
        %919 = vst.msk [vmem:[%s906 + $0x91] sm:$0xff] %vm403, %v885
        %920 = vst.msk [vmem:[%s906 + $0x99] sm:$0xff] %vm403, %v886
        %921 = vst.msk [vmem:[%s906 + $0xa9] sm:$0xff] %vm403, %v887
        %922 = vst.msk [vmem:[%s906 + $0xb1] sm:$0xff] %vm403, %v888
        %s923 = scalar_lea.vmem %s338, 256 [#allocation3]
        %v924 = vld [vmem:[%s923] sm:$0xff]
        %v925 = vld [vmem:[%s923 + $0x8] sm:$0xff]
        %v926 = vld [vmem:[%s923 + $0x10] sm:$0xff]
        %v927 = vld [vmem:[%s923 + $0x18] sm:$0xff]
        %v928 = vld [vmem:[%s923 + $0x20] sm:$0xff]
        %v929 = vld [vmem:[%s923 + $0x28] sm:$0xff]
        %v930 = vld [vmem:[%s923 + $0x30] sm:$0xff]
        %v931 = vld [vmem:[%s923 + $0x38] sm:$0xff]
        %v932 = vld [vmem:[%s923 + $0x40] sm:$0xff]
        %v933 = vld [vmem:[%s923 + $0x48] sm:$0xff]
        %v934 = vld [vmem:[%s923 + $0x50] sm:$0xff]
        %v935 = vld [vmem:[%s923 + $0x58] sm:$0xff]
        %v936 = vld [vmem:[%s923 + $0x60] sm:$0xff]
        %v937 = vld [vmem:[%s923 + $0x68] sm:$0xff]
        %v938 = vld [vmem:[%s923 + $0x70] sm:$0xff]
        %v939 = vld [vmem:[%s923 + $0x78] sm:$0xff]
        %v940 = vld [vmem:[%s923 + $0x80] sm:$0xff]
        %v941 = vld [vmem:[%s923 + $0x88] sm:$0xff]
        %v942 = vld [vmem:[%s923 + $0x90] sm:$0xff]
        %v943 = vld [vmem:[%s923 + $0x98] sm:$0xff]
        %v944 = vld [vmem:[%s923 + $0xa0] sm:$0xff]
        %v945 = vld [vmem:[%s923 + $0xa8] sm:$0xff]
        %v946 = vld [vmem:[%s923 + $0xb0] sm:$0xff]
        %v947 = vld [vmem:[%s923 + $0xb8] sm:$0xff]
        %v948 = vld [vmem:[%s923 + $0xc0] sm:$0xff]
        %v949 = vld [vmem:[%s923 + $0xc8] sm:$0xff]
        %v950 = vld [vmem:[%s923 + $0xd0] sm:$0xff]
        %v951 = vld [vmem:[%s923 + $0xd8] sm:$0xff]
        %v952 = vld [vmem:[%s923 + $0xe0] sm:$0xff]
        %v953 = vld [vmem:[%s923 + $0xe8] sm:$0xff]
        %v954 = vld [vmem:[%s923 + $0xf0] sm:$0xff]
        %v955 = vld [vmem:[%s923 + $0xf8] sm:$0xff]
        %v957 = vsel %vm499, %v924, 0
        %v960 = vsel %vm499, %v925, 0
        %v963 = vsel %vm499, %v926, 0
        %v966 = vsel %vm499, %v927, 0
        %v969 = vsel %vm499, %v928, 0
        %v972 = vsel %vm499, %v929, 0
        %v975 = vsel %vm499, %v930, 0
        %v978 = vsel %vm499, %v931, 0
        %v981 = vsel %vm499, %v932, 0
        %v984 = vsel %vm499, %v933, 0
        %v987 = vsel %vm499, %v934, 0
        %v990 = vsel %vm499, %v935, 0
        %v993 = vsel %vm499, %v936, 0
        %v996 = vsel %vm499, %v937, 0
        %v999 = vsel %vm499, %v938, 0
        %v1002 = vsel %vm499, %v939, 0
        %v1005 = vsel %vm499, %v940, 0
        %v1008 = vsel %vm499, %v941, 0
        %v1011 = vsel %vm499, %v942, 0
        %v1014 = vsel %vm499, %v943, 0
        %v1017 = vsel %vm499, %v944, 0
        %v1020 = vsel %vm499, %v945, 0
        %v1023 = vsel %vm499, %v946, 0
        %v1026 = vsel %vm499, %v947, 0
        %v1029 = vsel %vm499, %v948, 0
        %v1032 = vsel %vm499, %v949, 0
        %v1035 = vsel %vm499, %v950, 0
        %v1038 = vsel %vm499, %v951, 0
        %v1041 = vsel %vm499, %v952, 0
        %v1044 = vsel %vm499, %v953, 0
        %v1047 = vsel %vm499, %v954, 0
        %v1050 = vsel %vm499, %v955, 0
        %1052 = vmatprep.subr.mxu0 0.0
        %1053 = vmatpush1.msra.mxu0 %v456
        %1054 = vmatprep.subr.mxu0 0.0
        %1055 = vmatpush1.msra.mxu0 %v457
        %1056 = vmatprep.subr.mxu0 0.0
        %1057 = vmatpush1.msra.mxu0 %v458
        %1058 = vmatprep.subr.mxu0 0.0
        %1059 = vmatpush1.msra.mxu0 %v459
        %1060 = vmatprep.subr.mxu0 0.0
        %1061 = vmatpush1.msra.mxu0 %v598
        %1062 = vmatprep.subr.mxu0 0.0
        %1063 = vmatpush1.msra.mxu0 0.0
        %1064 = vmatprep.subr.mxu0 0.0
        %1065 = vmatpush1.msra.mxu0 0.0
        %1066 = vmatprep.subr.mxu0 0.0
        %1067 = vmatpush1.msra.mxu0 0.0
        %1068 = vmatprep.subr.mxu0 0.0
        %1069 = vmatpush1.msra.mxu0 0.0
        %1070 = vmatprep.subr.mxu0 0.0
        %1071 = vmatpush1.msra.mxu0 0.0
        %1072 = vmatprep.subr.mxu0 0.0
        %1073 = vmatpush1.msra.mxu0 0.0
        %1074 = vmatprep.subr.mxu0 0.0
        %1075 = vmatpush1.msra.mxu0 0.0
        %1076 = vmatprep.subr.mxu0 0.0
        %1077 = vmatpush1.msra.mxu0 0.0
        %1078 = vmatprep.subr.mxu0 0.0
        %1079 = vmatpush1.msra.mxu0 0.0
        %1080 = vmatprep.subr.mxu0 0.0
        %1081 = vmatpush1.msra.mxu0 0.0
        %1082 = vmatprep.subr.mxu0 0.0
        %1083 = vmatpush1.msra.mxu0 0.0
        %1084 = vmatprep.subr.mxu0 0.0
        %1085 = vmatpush1.msra.mxu0 0.0
        %1086 = vmatprep.subr.mxu0 0.0
        %1087 = vmatpush1.msra.mxu0 0.0
        %1088 = vmatprep.subr.mxu0 0.0
        %1089 = vmatpush1.msra.mxu0 0.0
        %1090 = vmatprep.subr.mxu0 0.0
        %1091 = vmatpush1.msra.mxu0 0.0
        %1092 = vmatprep.subr.mxu0 0.0
        %1093 = vmatpush1.msra.mxu0 0.0
        %1094 = vmatprep.subr.mxu0 0.0
        %1095 = vmatpush1.msra.mxu0 0.0
        %1096 = vmatprep.subr.mxu0 0.0
        %1097 = vmatpush1.msra.mxu0 0.0
        %1098 = vmatprep.subr.mxu0 0.0
        %1099 = vmatpush1.msra.mxu0 0.0
        %1100 = vmatprep.subr.mxu0 0.0
        %1101 = vmatpush1.msra.mxu0 0.0
        %1102 = vmatprep.subr.mxu0 0.0
        %1103 = vmatpush1.msra.mxu0 0.0
        %1104 = vmatprep.subr.mxu0 0.0
        %1105 = vmatpush1.msra.mxu0 0.0
        %1106 = vmatprep.subr.mxu0 0.0
        %1107 = vmatpush1.msra.mxu0 0.0
        %1108 = vmatprep.subr.mxu0 0.0
        %1109 = vmatpush1.msra.mxu0 0.0
        %1110 = vmatprep.subr.mxu0 0.0
        %1111 = vmatpush1.msra.mxu0 0.0
        %1112 = vmatprep.subr.mxu0 0.0
        %1113 = vmatpush1.msra.mxu0 0.0
        %1114 = vmatprep.subr.mxu0 0.0
        %1115 = vmatpush1.msra.mxu0 0.0
        %1116 = vmatprep.mubr.f32.mxu0 0.0
        %1117 = vmatmul.mubr.f32.gmra.mrb[0].mxu0 %v957
        %v1118 = vpop.f32.mrb[0].mxu0
        %v1119 = vadd.f32 %v497, %v1118
        %v1120 = vpop.f32.mrb[0].mxu0
        %1121 = vmatprep.mubr.f32.mxu0 0.0
        %1122 = vmatmul.mubr.f32.gmra.mrb[0].mxu0 %v960
        %v1123 = vpop.f32.mrb[0].mxu0
        %v1124 = vadd.f32 %v497, %v1123
        %v1125 = vpop.f32.mrb[0].mxu0
        %1126 = vmatprep.mubr.f32.mxu0 0.0
        %1127 = vmatmul.mubr.f32.gmra.mrb[0].mxu0 %v963
        %v1128 = vpop.f32.mrb[0].mxu0
        %v1129 = vadd.f32 %v497, %v1128
        %v1130 = vpop.f32.mrb[0].mxu0
        %1131 = vmatprep.mubr.f32.mxu0 0.0
        %1132 = vmatmul.mubr.f32.gmra.mrb[0].mxu0 %v966
        %v1133 = vpop.f32.mrb[0].mxu0
        %v1134 = vadd.f32 %v497, %v1133
        %v1135 = vpop.f32.mrb[0].mxu0
        %1136 = vmatprep.mubr.f32.mxu0 0.0
        %1137 = vmatmul.mubr.f32.gmra.mrb[0].mxu0 %v969
        %v1138 = vpop.f32.mrb[0].mxu0
        %v1139 = vadd.f32 %v497, %v1138
        %v1140 = vpop.f32.mrb[0].mxu0
        %1141 = vmatprep.mubr.f32.mxu0 0.0
        %1142 = vmatmul.mubr.f32.gmra.mrb[0].mxu0 %v972
        %v1143 = vpop.f32.mrb[0].mxu0
        %v1144 = vadd.f32 %v497, %v1143
        %v1145 = vpop.f32.mrb[0].mxu0
        %1146 = vmatprep.mubr.f32.mxu0 0.0
        %1147 = vmatmul.mubr.f32.gmra.mrb[0].mxu0 %v975
        %v1148 = vpop.f32.mrb[0].mxu0
        %v1149 = vadd.f32 %v497, %v1148
        %v1150 = vpop.f32.mrb[0].mxu0
        %1151 = vmatprep.mubr.f32.mxu0 0.0
        %1152 = vmatmul.mubr.f32.gmra.mrb[0].mxu0 %v978
        %v1153 = vpop.f32.mrb[0].mxu0
        %v1154 = vadd.f32 %v497, %v1153
        %v1155 = vpop.f32.mrb[0].mxu0
        %1156 = vmatprep.mubr.f32.mxu0 0.0
        %1157 = vmatmul.mubr.f32.gmra.mrb[0].mxu0 %v981
        %v1158 = vpop.f32.mrb[0].mxu0
        %v1159 = vadd.f32 %v497, %v1158
        %v1160 = vpop.f32.mrb[0].mxu0
        %1161 = vmatprep.mubr.f32.mxu0 0.0
        %1162 = vmatmul.mubr.f32.gmra.mrb[0].mxu0 %v984
        %v1163 = vpop.f32.mrb[0].mxu0
        %v1164 = vadd.f32 %v497, %v1163
        %v1165 = vpop.f32.mrb[0].mxu0
        %1166 = vmatprep.mubr.f32.mxu0 0.0
        %1167 = vmatmul.mubr.f32.gmra.mrb[0].mxu0 %v987
        %v1168 = vpop.f32.mrb[0].mxu0
        %v1169 = vadd.f32 %v497, %v1168
        %v1170 = vpop.f32.mrb[0].mxu0
        %1171 = vmatprep.mubr.f32.mxu0 0.0
        %1172 = vmatmul.mubr.f32.gmra.mrb[0].mxu0 %v990
        %v1173 = vpop.f32.mrb[0].mxu0
        %v1174 = vadd.f32 %v497, %v1173
        %v1175 = vpop.f32.mrb[0].mxu0
        %1176 = vmatprep.mubr.f32.mxu0 0.0
        %1177 = vmatmul.mubr.f32.gmra.mrb[0].mxu0 %v993
        %v1178 = vpop.f32.mrb[0].mxu0
        %v1179 = vadd.f32 %v497, %v1178
        %v1180 = vpop.f32.mrb[0].mxu0
        %1181 = vmatprep.mubr.f32.mxu0 0.0
        %1182 = vmatmul.mubr.f32.gmra.mrb[0].mxu0 %v996
        %v1183 = vpop.f32.mrb[0].mxu0
        %v1184 = vadd.f32 %v497, %v1183
        %v1185 = vpop.f32.mrb[0].mxu0
        %1186 = vmatprep.mubr.f32.mxu0 0.0
        %1187 = vmatmul.mubr.f32.gmra.mrb[0].mxu0 %v999
        %v1188 = vpop.f32.mrb[0].mxu0
        %v1189 = vadd.f32 %v497, %v1188
        %v1190 = vpop.f32.mrb[0].mxu0
        %1191 = vmatprep.mubr.f32.mxu0 0.0
        %1192 = vmatmul.mubr.f32.gmra.mrb[0].mxu0 %v1002
        %v1193 = vpop.f32.mrb[0].mxu0
        %v1194 = vadd.f32 %v497, %v1193
        %v1195 = vpop.f32.mrb[0].mxu0
        %1196 = vmatprep.mubr.f32.mxu0 0.0
        %1197 = vmatmul.mubr.f32.gmra.mrb[0].mxu0 %v1005
        %v1198 = vpop.f32.mrb[0].mxu0
        %v1199 = vadd.f32 %v497, %v1198
        %v1200 = vpop.f32.mrb[0].mxu0
        %1201 = vmatprep.mubr.f32.mxu0 0.0
        %1202 = vmatmul.mubr.f32.gmra.mrb[0].mxu0 %v1008
        %v1203 = vpop.f32.mrb[0].mxu0
        %v1204 = vadd.f32 %v497, %v1203
        %v1205 = vpop.f32.mrb[0].mxu0
        %1206 = vmatprep.mubr.f32.mxu0 0.0
        %1207 = vmatmul.mubr.f32.gmra.mrb[0].mxu0 %v1011
        %v1208 = vpop.f32.mrb[0].mxu0
        %v1209 = vadd.f32 %v497, %v1208
        %v1210 = vpop.f32.mrb[0].mxu0
        %1211 = vmatprep.mubr.f32.mxu0 0.0
        %1212 = vmatmul.mubr.f32.gmra.mrb[0].mxu0 %v1014
        %v1213 = vpop.f32.mrb[0].mxu0
        %v1214 = vadd.f32 %v497, %v1213
        %v1215 = vpop.f32.mrb[0].mxu0
        %1216 = vmatprep.mubr.f32.mxu0 0.0
        %1217 = vmatmul.mubr.f32.gmra.mrb[0].mxu0 %v1017
        %v1218 = vpop.f32.mrb[0].mxu0
        %v1219 = vadd.f32 %v497, %v1218
        %v1220 = vpop.f32.mrb[0].mxu0
        %1221 = vmatprep.mubr.f32.mxu0 0.0
        %1222 = vmatmul.mubr.f32.gmra.mrb[0].mxu0 %v1020
        %v1223 = vpop.f32.mrb[0].mxu0
        %v1224 = vadd.f32 %v497, %v1223
        %v1225 = vpop.f32.mrb[0].mxu0
        %1226 = vmatprep.mubr.f32.mxu0 0.0
        %1227 = vmatmul.mubr.f32.gmra.mrb[0].mxu0 %v1023
        %v1228 = vpop.f32.mrb[0].mxu0
        %v1229 = vadd.f32 %v497, %v1228
        %v1230 = vpop.f32.mrb[0].mxu0
        %1231 = vmatprep.mubr.f32.mxu0 0.0
        %1232 = vmatmul.mubr.f32.gmra.mrb[0].mxu0 %v1026
        %v1233 = vpop.f32.mrb[0].mxu0
        %v1234 = vadd.f32 %v497, %v1233
        %v1235 = vpop.f32.mrb[0].mxu0
        %1236 = vmatprep.mubr.f32.mxu0 0.0
        %1237 = vmatmul.mubr.f32.gmra.mrb[0].mxu0 %v1029
        %v1238 = vpop.f32.mrb[0].mxu0
        %v1239 = vadd.f32 %v497, %v1238
        %v1240 = vpop.f32.mrb[0].mxu0
        %1241 = vmatprep.mubr.f32.mxu0 0.0
        %1242 = vmatmul.mubr.f32.gmra.mrb[0].mxu0 %v1032
        %v1243 = vpop.f32.mrb[0].mxu0
        %v1244 = vadd.f32 %v497, %v1243
        %v1245 = vpop.f32.mrb[0].mxu0
        %1246 = vmatprep.mubr.f32.mxu0 0.0
        %1247 = vmatmul.mubr.f32.gmra.mrb[0].mxu0 %v1035
        %v1248 = vpop.f32.mrb[0].mxu0
        %v1249 = vadd.f32 %v497, %v1248
        %v1250 = vpop.f32.mrb[0].mxu0
        %1251 = vmatprep.mubr.f32.mxu0 0.0
        %1252 = vmatmul.mubr.f32.gmra.mrb[0].mxu0 %v1038
        %v1253 = vpop.f32.mrb[0].mxu0
        %v1254 = vadd.f32 %v497, %v1253
        %v1255 = vpop.f32.mrb[0].mxu0
        %1256 = vmatprep.mubr.f32.mxu0 0.0
        %1257 = vmatmul.mubr.f32.gmra.mrb[0].mxu0 %v1041
        %v1258 = vpop.f32.mrb[0].mxu0
        %v1259 = vadd.f32 %v497, %v1258
        %v1260 = vpop.f32.mrb[0].mxu0
        %1261 = vmatprep.mubr.f32.mxu0 0.0
        %1262 = vmatmul.mubr.f32.gmra.mrb[0].mxu0 %v1044
        %v1263 = vpop.f32.mrb[0].mxu0
        %v1264 = vadd.f32 %v497, %v1263
        %v1265 = vpop.f32.mrb[0].mxu0
        %1266 = vmatprep.mubr.f32.mxu0 0.0
        %1267 = vmatmul.mubr.f32.gmra.mrb[0].mxu0 %v1047
        %v1268 = vpop.f32.mrb[0].mxu0
        %v1269 = vadd.f32 %v497, %v1268
        %v1270 = vpop.f32.mrb[0].mxu0
        %1271 = vmatprep.mubr.f32.mxu0 0.0
        %1272 = vmatmul.mubr.f32.gmra.mrb[0].mxu0 %v1050
        %v1273 = vpop.f32.mrb[0].mxu0
        %v1274 = vadd.f32 %v497, %v1273
        %v1275 = vpop.f32.mrb[0].mxu0
        %1276 = vdwg.mxu0
        %v1277 = vmul.f32 %v1119, 0.2
        %v1278 = vmul.f32 %v1124, 0.2
        %v1279 = vmul.f32 %v1129, 0.2
        %v1280 = vmul.f32 %v1134, 0.2
        %v1281 = vmul.f32 %v1139, 0.2
        %v1282 = vmul.f32 %v1144, 0.2
        %v1283 = vmul.f32 %v1149, 0.2
        %v1284 = vmul.f32 %v1154, 0.2
        %v1285 = vmul.f32 %v1159, 0.2
        %v1286 = vmul.f32 %v1164, 0.2
        %v1287 = vmul.f32 %v1169, 0.2
        %v1288 = vmul.f32 %v1174, 0.2
        %v1289 = vmul.f32 %v1179, 0.2
        %v1290 = vmul.f32 %v1184, 0.2
        %v1291 = vmul.f32 %v1189, 0.2
        %v1292 = vmul.f32 %v1194, 0.2
        %v1293 = vmul.f32 %v1199, 0.2
        %v1294 = vmul.f32 %v1204, 0.2
        %v1295 = vmul.f32 %v1209, 0.2
        %v1296 = vmul.f32 %v1214, 0.2
        %v1297 = vmul.f32 %v1219, 0.2
        %v1298 = vmul.f32 %v1224, 0.2
        %v1299 = vmul.f32 %v1229, 0.2
        %v1300 = vmul.f32 %v1234, 0.2
        %v1301 = vmul.f32 %v1239, 0.2
        %v1302 = vmul.f32 %v1244, 0.2
        %v1303 = vmul.f32 %v1249, 0.2
        %v1304 = vmul.f32 %v1254, 0.2
        %v1305 = vmul.f32 %v1259, 0.2
        %v1306 = vmul.f32 %v1264, 0.2
        %v1307 = vmul.f32 %v1269, 0.2
        %v1308 = vmul.f32 %v1274, 0.2
        %v1309 = vmax.f32 %v1119, %v1277
        %v1310 = vmax.f32 %v1124, %v1278
        %v1311 = vmax.f32 %v1129, %v1279
        %v1312 = vmax.f32 %v1134, %v1280
        %v1313 = vmax.f32 %v1139, %v1281
        %v1314 = vmax.f32 %v1144, %v1282
        %v1315 = vmax.f32 %v1149, %v1283
        %v1316 = vmax.f32 %v1154, %v1284
        %v1317 = vmax.f32 %v1159, %v1285
        %v1318 = vmax.f32 %v1164, %v1286
        %v1319 = vmax.f32 %v1169, %v1287
        %v1320 = vmax.f32 %v1174, %v1288
        %v1321 = vmax.f32 %v1179, %v1289
        %v1322 = vmax.f32 %v1184, %v1290
        %v1323 = vmax.f32 %v1189, %v1291
        %v1324 = vmax.f32 %v1194, %v1292
        %v1325 = vmax.f32 %v1199, %v1293
        %v1326 = vmax.f32 %v1204, %v1294
        %v1327 = vmax.f32 %v1209, %v1295
        %v1328 = vmax.f32 %v1214, %v1296
        %v1329 = vmax.f32 %v1219, %v1297
        %v1330 = vmax.f32 %v1224, %v1298
        %v1331 = vmax.f32 %v1229, %v1299
        %v1332 = vmax.f32 %v1234, %v1300
        %v1333 = vmax.f32 %v1239, %v1301
        %v1334 = vmax.f32 %v1244, %v1302
        %v1335 = vmax.f32 %v1249, %v1303
        %v1336 = vmax.f32 %v1254, %v1304
        %v1337 = vmax.f32 %v1259, %v1305
        %v1338 = vmax.f32 %v1264, %v1306
        %v1339 = vmax.f32 %v1269, %v1307
        %v1340 = vmax.f32 %v1274, %v1308
        %s1341 = scalar_lea.vmem [#allocation2], 240
        %1342 = vst.msk [vmem:[%s1341] sm:$0xff] %vm403, %v1309
        %1343 = vst.msk [vmem:[%s1341 + $0x8] sm:$0xff] %vm403, %v1310
        %1344 = vst.msk [vmem:[%s1341 + $0x18] sm:$0xff] %vm403, %v1311
        %1345 = vst.msk [vmem:[%s1341 + $0x20] sm:$0xff] %vm403, %v1312
        %1346 = vst.msk [vmem:[%s1341 + $0x30] sm:$0xff] %vm403, %v1313
        %1347 = vst.msk [vmem:[%s1341 + $0x38] sm:$0xff] %vm403, %v1314
        %1348 = vst.msk [vmem:[%s1341 + $0x48] sm:$0xff] %vm403, %v1315
        %1349 = vst.msk [vmem:[%s1341 + $0x50] sm:$0xff] %vm403, %v1316
        %1350 = vst.msk [vmem:[%s1341 + $0x60] sm:$0xff] %vm403, %v1317
        %1351 = vst.msk [vmem:[%s1341 + $0x68] sm:$0xff] %vm403, %v1318
        %1352 = vst.msk [vmem:[%s1341 + $0x78] sm:$0xff] %vm403, %v1319
        %1353 = vst.msk [vmem:[%s1341 + $0x80] sm:$0xff] %vm403, %v1320
        %1354 = vst.msk [vmem:[%s1341 + $0x90] sm:$0xff] %vm403, %v1321
        %1355 = vst.msk [vmem:[%s1341 + $0x98] sm:$0xff] %vm403, %v1322
        %1356 = vst.msk [vmem:[%s1341 + $0xa8] sm:$0xff] %vm403, %v1323
        %1357 = vst.msk [vmem:[%s1341 + $0xb0] sm:$0xff] %vm403, %v1324
        %s1358 = scalar_lea.vmem [#allocation2], 24
        %1359 = vst.msk [vmem:[%s1358 + $0x1] sm:$0xff] %vm403, %v1325
        %1360 = vst.msk [vmem:[%s1358 + $0x9] sm:$0xff] %vm403, %v1326
        %1361 = vst.msk [vmem:[%s1358 + $0x19] sm:$0xff] %vm403, %v1327
        %1362 = vst.msk [vmem:[%s1358 + $0x21] sm:$0xff] %vm403, %v1328
        %1363 = vst.msk [vmem:[%s1358 + $0x31] sm:$0xff] %vm403, %v1329
        %1364 = vst.msk [vmem:[%s1358 + $0x39] sm:$0xff] %vm403, %v1330
        %1365 = vst.msk [vmem:[%s1358 + $0x49] sm:$0xff] %vm403, %v1331
        %1366 = vst.msk [vmem:[%s1358 + $0x51] sm:$0xff] %vm403, %v1332
        %1367 = vst.msk [vmem:[%s1358 + $0x61] sm:$0xff] %vm403, %v1333
        %1368 = vst.msk [vmem:[%s1358 + $0x69] sm:$0xff] %vm403, %v1334
        %1369 = vst.msk [vmem:[%s1358 + $0x79] sm:$0xff] %vm403, %v1335
        %1370 = vst.msk [vmem:[%s1358 + $0x81] sm:$0xff] %vm403, %v1336
        %1371 = vst.msk [vmem:[%s1358 + $0x91] sm:$0xff] %vm403, %v1337
        %1372 = vst.msk [vmem:[%s1358 + $0x99] sm:$0xff] %vm403, %v1338
        %1373 = vst.msk [vmem:[%s1358 + $0xa9] sm:$0xff] %vm403, %v1339
        %1374 = vst.msk [vmem:[%s1358 + $0xb1] sm:$0xff] %vm403, %v1340
        %v1375 = vld [vmem:[%s347] sm:$0xff]
        %v1376 = vld [vmem:[%s347 + $0x8] sm:$0xff]
        %v1377 = vld [vmem:[%s347 + $0x10] sm:$0xff]
        %v1378 = vld [vmem:[%s347 + $0x18] sm:$0xff]
        %v1379 = vld [vmem:[%s347 + $0x20] sm:$0xff]
        %v1380 = vld [vmem:[%s347 + $0x28] sm:$0xff]
        %v1381 = vld [vmem:[%s347 + $0x30] sm:$0xff]
        %v1382 = vld [vmem:[%s347 + $0x38] sm:$0xff]
        %v1383 = vld [vmem:[%s347 + $0x40] sm:$0xff]
        %v1384 = vld [vmem:[%s347 + $0x48] sm:$0xff]
        %v1385 = vld [vmem:[%s347 + $0x50] sm:$0xff]
        %v1386 = vld [vmem:[%s347 + $0x58] sm:$0xff]
        %v1387 = vld [vmem:[%s347 + $0x60] sm:$0xff]
        %v1388 = vld [vmem:[%s347 + $0x68] sm:$0xff]
        %v1389 = vld [vmem:[%s347 + $0x70] sm:$0xff]
        %v1390 = vld [vmem:[%s347 + $0x78] sm:$0xff]
        %v1391 = vld [vmem:[#allocation12] sm:$0xf]
        %v1392 = vld [vmem:[#allocation2] sm:$0xff]
        %v1393 = vld [vmem:[#allocation2 + $0x8] sm:$0xff]
        %v1394 = vld [vmem:[#allocation2 + $0x18] sm:$0xff]
        %v1395 = vld [vmem:[#allocation2 + $0x20] sm:$0xff]
        %v1396 = vld [vmem:[#allocation2 + $0x30] sm:$0xff]
        %v1397 = vld [vmem:[#allocation2 + $0x38] sm:$0xff]
        %v1398 = vld [vmem:[#allocation2 + $0x48] sm:$0xff]
        %v1399 = vld [vmem:[#allocation2 + $0x50] sm:$0xff]
        %v1400 = vld [vmem:[#allocation2 + $0x60] sm:$0xff]
        %v1401 = vld [vmem:[#allocation2 + $0x68] sm:$0xff]
        %v1402 = vld [vmem:[#allocation2 + $0x78] sm:$0xff]
        %v1403 = vld [vmem:[#allocation2 + $0x80] sm:$0xff]
        %v1404 = vld [vmem:[#allocation2 + $0x90] sm:$0xff]
        %v1405 = vld [vmem:[#allocation2 + $0x98] sm:$0xff]
        %v1406 = vld [vmem:[#allocation2 + $0xa8] sm:$0xff]
        %v1407 = vld [vmem:[#allocation2 + $0xb0] sm:$0xff]
        %v1408 = vld [vmem:[%s436] sm:$0xff]
        %v1409 = vld [vmem:[%s436 + $0x8] sm:$0xff]
        %v1410 = vld [vmem:[%s436 + $0x18] sm:$0xff]
        %v1411 = vld [vmem:[%s436 + $0x20] sm:$0xff]
        %v1412 = vld [vmem:[%s436 + $0x30] sm:$0xff]
        %v1413 = vld [vmem:[%s436 + $0x38] sm:$0xff]
        %v1414 = vld [vmem:[%s436 + $0x48] sm:$0xff]
        %v1415 = vld [vmem:[%s436 + $0x50] sm:$0xff]
        %v1416 = vld [vmem:[%s436 + $0x60] sm:$0xff]
        %v1417 = vld [vmem:[%s436 + $0x68] sm:$0xff]
        %v1418 = vld [vmem:[%s436 + $0x78] sm:$0xff]
        %v1419 = vld [vmem:[%s436 + $0x80] sm:$0xff]
        %v1420 = vld [vmem:[%s436 + $0x90] sm:$0xff]
        %v1421 = vld [vmem:[%s436 + $0x98] sm:$0xff]
        %v1422 = vld [vmem:[%s436 + $0xa8] sm:$0xff]
        %v1423 = vld [vmem:[%s436 + $0xb0] sm:$0xff]
        %v1424 = vld [vmem:[#allocation2 + $0x1] sm:$0xff]
        %v1425 = vld [vmem:[#allocation2 + $0x9] sm:$0xff]
        %v1426 = vld [vmem:[#allocation2 + $0x19] sm:$0xff]
        %v1427 = vld [vmem:[#allocation2 + $0x21] sm:$0xff]
        %v1428 = vld [vmem:[#allocation2 + $0x31] sm:$0xff]
        %v1429 = vld [vmem:[#allocation2 + $0x39] sm:$0xff]
        %v1430 = vld [vmem:[#allocation2 + $0x49] sm:$0xff]
        %v1431 = vld [vmem:[#allocation2 + $0x51] sm:$0xff]
        %v1432 = vld [vmem:[#allocation2 + $0x61] sm:$0xff]
        %v1433 = vld [vmem:[#allocation2 + $0x69] sm:$0xff]
        %v1434 = vld [vmem:[#allocation2 + $0x79] sm:$0xff]
        %v1435 = vld [vmem:[#allocation2 + $0x81] sm:$0xff]
        %v1436 = vld [vmem:[#allocation2 + $0x91] sm:$0xff]
        %v1437 = vld [vmem:[#allocation2 + $0x99] sm:$0xff]
        %v1438 = vld [vmem:[#allocation2 + $0xa9] sm:$0xff]
        %v1439 = vld [vmem:[#allocation2 + $0xb1] sm:$0xff]
        %v1440 = vld [vmem:[%s436 + $0x1] sm:$0xff]
        %v1441 = vld [vmem:[%s436 + $0x9] sm:$0xff]
        %v1442 = vld [vmem:[%s436 + $0x19] sm:$0xff]
        %v1443 = vld [vmem:[%s436 + $0x21] sm:$0xff]
        %v1444 = vld [vmem:[%s436 + $0x31] sm:$0xff]
        %v1445 = vld [vmem:[%s436 + $0x39] sm:$0xff]
        %v1446 = vld [vmem:[%s436 + $0x49] sm:$0xff]
        %v1447 = vld [vmem:[%s436 + $0x51] sm:$0xff]
        %v1448 = vld [vmem:[%s436 + $0x61] sm:$0xff]
        %v1449 = vld [vmem:[%s436 + $0x69] sm:$0xff]
        %v1450 = vld [vmem:[%s436 + $0x79] sm:$0xff]
        %v1451 = vld [vmem:[%s436 + $0x81] sm:$0xff]
        %v1452 = vld [vmem:[%s436 + $0x91] sm:$0xff]
        %v1453 = vld [vmem:[%s436 + $0x99] sm:$0xff]
        %v1454 = vld [vmem:[%s436 + $0xa9] sm:$0xff]
        %v1455 = vld [vmem:[%s436 + $0xb1] sm:$0xff]
        %1472 = vrot.lane.b32.xlu0 %v1408, 8
        %v1473 = vpop.permute.xlu0 %1472
        %1474 = vrot.lane.b32.xlu0 %v1409, 8
        %v1475 = vpop.permute.xlu0 %1474
        %1476 = vrot.lane.b32.xlu0 %v1410, 8
        %v1477 = vpop.permute.xlu0 %1476
        %1478 = vrot.lane.b32.xlu0 %v1411, 8
        %v1479 = vpop.permute.xlu0 %1478
        %1480 = vrot.lane.b32.xlu0 %v1412, 8
        %v1481 = vpop.permute.xlu0 %1480
        %1482 = vrot.lane.b32.xlu0 %v1413, 8
        %v1483 = vpop.permute.xlu0 %1482
        %1484 = vrot.lane.b32.xlu0 %v1414, 8
        %v1485 = vpop.permute.xlu0 %1484
        %1486 = vrot.lane.b32.xlu0 %v1415, 8
        %v1487 = vpop.permute.xlu0 %1486
        %1488 = vrot.lane.b32.xlu0 %v1416, 8
        %v1489 = vpop.permute.xlu0 %1488
        %1490 = vrot.lane.b32.xlu0 %v1417, 8
        %v1491 = vpop.permute.xlu0 %1490
        %1492 = vrot.lane.b32.xlu0 %v1418, 8
        %v1493 = vpop.permute.xlu0 %1492
        %1494 = vrot.lane.b32.xlu0 %v1419, 8
        %v1495 = vpop.permute.xlu0 %1494
        %1496 = vrot.lane.b32.xlu0 %v1420, 8
        %v1497 = vpop.permute.xlu0 %1496
        %1498 = vrot.lane.b32.xlu0 %v1421, 8
        %v1499 = vpop.permute.xlu0 %1498
        %1500 = vrot.lane.b32.xlu0 %v1422, 8
        %v1501 = vpop.permute.xlu0 %1500
        %1502 = vrot.lane.b32.xlu0 %v1423, 8
        %v1503 = vpop.permute.xlu0 %1502
        %1536 = vrot.lane.b32.xlu0 %v1424, 16
        %v1537 = vpop.permute.xlu0 %1536
        %1538 = vrot.lane.b32.xlu0 %v1425, 16
        %v1539 = vpop.permute.xlu0 %1538
        %1540 = vrot.lane.b32.xlu0 %v1426, 16
        %v1541 = vpop.permute.xlu0 %1540
        %1542 = vrot.lane.b32.xlu0 %v1427, 16
        %v1543 = vpop.permute.xlu0 %1542
        %1544 = vrot.lane.b32.xlu0 %v1428, 16
        %v1545 = vpop.permute.xlu0 %1544
        %1546 = vrot.lane.b32.xlu0 %v1429, 16
        %v1547 = vpop.permute.xlu0 %1546
        %1548 = vrot.lane.b32.xlu0 %v1430, 16
        %v1549 = vpop.permute.xlu0 %1548
        %1550 = vrot.lane.b32.xlu0 %v1431, 16
        %v1551 = vpop.permute.xlu0 %1550
        %1552 = vrot.lane.b32.xlu0 %v1432, 16
        %v1553 = vpop.permute.xlu0 %1552
        %1554 = vrot.lane.b32.xlu0 %v1433, 16
        %v1555 = vpop.permute.xlu0 %1554
        %1556 = vrot.lane.b32.xlu0 %v1434, 16
        %v1557 = vpop.permute.xlu0 %1556
        %1558 = vrot.lane.b32.xlu0 %v1435, 16
        %v1559 = vpop.permute.xlu0 %1558
        %1560 = vrot.lane.b32.xlu0 %v1436, 16
        %v1561 = vpop.permute.xlu0 %1560
        %1562 = vrot.lane.b32.xlu0 %v1437, 16
        %v1563 = vpop.permute.xlu0 %1562
        %1564 = vrot.lane.b32.xlu0 %v1438, 16
        %v1565 = vpop.permute.xlu0 %1564
        %1566 = vrot.lane.b32.xlu0 %v1439, 16
        %v1567 = vpop.permute.xlu0 %1566
        %1600 = vrot.lane.b32.xlu0 %v1440, 24
        %v1601 = vpop.permute.xlu0 %1600
        %1602 = vrot.lane.b32.xlu0 %v1441, 24
        %v1603 = vpop.permute.xlu0 %1602
        %1604 = vrot.lane.b32.xlu0 %v1442, 24
        %v1605 = vpop.permute.xlu0 %1604
        %1606 = vrot.lane.b32.xlu0 %v1443, 24
        %v1607 = vpop.permute.xlu0 %1606
        %1608 = vrot.lane.b32.xlu0 %v1444, 24
        %v1609 = vpop.permute.xlu0 %1608
        %1610 = vrot.lane.b32.xlu0 %v1445, 24
        %v1611 = vpop.permute.xlu0 %1610
        %1612 = vrot.lane.b32.xlu0 %v1446, 24
        %v1613 = vpop.permute.xlu0 %1612
        %1614 = vrot.lane.b32.xlu0 %v1447, 24
        %v1615 = vpop.permute.xlu0 %1614
        %1616 = vrot.lane.b32.xlu0 %v1448, 24
        %v1617 = vpop.permute.xlu0 %1616
        %1618 = vrot.lane.b32.xlu0 %v1449, 24
        %v1619 = vpop.permute.xlu0 %1618
        %1620 = vrot.lane.b32.xlu0 %v1450, 24
        %v1621 = vpop.permute.xlu0 %1620
        %1622 = vrot.lane.b32.xlu0 %v1451, 24
        %v1623 = vpop.permute.xlu0 %1622
        %1624 = vrot.lane.b32.xlu0 %v1452, 24
        %v1625 = vpop.permute.xlu0 %1624
        %1626 = vrot.lane.b32.xlu0 %v1453, 24
        %v1627 = vpop.permute.xlu0 %1626
        %1628 = vrot.lane.b32.xlu0 %v1454, 24
        %v1629 = vpop.permute.xlu0 %1628
        %1630 = vrot.lane.b32.xlu0 %v1455, 24
        %v1631 = vpop.permute.xlu0 %1630
        %v1648 = vsel %vm403, %v1392, %v1473
        %v1649 = vsel %vm403, %v1393, %v1475
        %v1650 = vsel %vm403, %v1394, %v1477
        %v1651 = vsel %vm403, %v1395, %v1479
        %v1652 = vsel %vm403, %v1396, %v1481
        %v1653 = vsel %vm403, %v1397, %v1483
        %v1654 = vsel %vm403, %v1398, %v1485
        %v1655 = vsel %vm403, %v1399, %v1487
        %v1656 = vsel %vm403, %v1400, %v1489
        %v1657 = vsel %vm403, %v1401, %v1491
        %v1658 = vsel %vm403, %v1402, %v1493
        %v1659 = vsel %vm403, %v1403, %v1495
        %v1660 = vsel %vm403, %v1404, %v1497
        %v1661 = vsel %vm403, %v1405, %v1499
        %v1662 = vsel %vm403, %v1406, %v1501
        %v1663 = vsel %vm403, %v1407, %v1503
        %vm1664 = vcmask 130048
        %v1665 = vsel %vm1664, %v1648, %v1537
        %v1666 = vsel %vm1664, %v1649, %v1539
        %v1667 = vsel %vm1664, %v1650, %v1541
        %v1668 = vsel %vm1664, %v1651, %v1543
        %v1669 = vsel %vm1664, %v1652, %v1545
        %v1670 = vsel %vm1664, %v1653, %v1547
        %v1671 = vsel %vm1664, %v1654, %v1549
        %v1672 = vsel %vm1664, %v1655, %v1551
        %v1673 = vsel %vm1664, %v1656, %v1553
        %v1674 = vsel %vm1664, %v1657, %v1555
        %v1675 = vsel %vm1664, %v1658, %v1557
        %v1676 = vsel %vm1664, %v1659, %v1559
        %v1677 = vsel %vm1664, %v1660, %v1561
        %v1678 = vsel %vm1664, %v1661, %v1563
        %v1679 = vsel %vm1664, %v1662, %v1565
        %v1680 = vsel %vm1664, %v1663, %v1567
        %vm1681 = vcmask 195584
        %v1682 = vsel %vm1681, %v1665, %v1601
        %v1683 = vsel %vm1681, %v1666, %v1603
        %v1684 = vsel %vm1681, %v1667, %v1605
        %v1685 = vsel %vm1681, %v1668, %v1607
        %v1686 = vsel %vm1681, %v1669, %v1609
        %v1687 = vsel %vm1681, %v1670, %v1611
        %v1688 = vsel %vm1681, %v1671, %v1613
        %v1689 = vsel %vm1681, %v1672, %v1615
        %v1690 = vsel %vm1681, %v1673, %v1617
        %v1691 = vsel %vm1681, %v1674, %v1619
        %v1692 = vsel %vm1681, %v1675, %v1621
        %v1693 = vsel %vm1681, %v1676, %v1623
        %v1694 = vsel %vm1681, %v1677, %v1625
        %v1695 = vsel %vm1681, %v1678, %v1627
        %v1696 = vsel %vm1681, %v1679, %v1629
        %v1697 = vsel %vm1681, %v1680, %v1631
        %v1698 = vld [vmem:[#allocation11] sm:$0xff]
        %v1699 = vld [vmem:[#allocation11 + $0x8] sm:$0xff]
        %v1700 = vld [vmem:[#allocation11 + $0x10] sm:$0xff]
        %v1701 = vld [vmem:[#allocation11 + $0x18] sm:$0xff]
        %vm1702 = vcmask 261120
        %v1704 = vsel %vm1702, %v1682, 0
        %v1707 = vsel %vm1702, %v1683, 0
        %v1710 = vsel %vm1702, %v1684, 0
        %v1713 = vsel %vm1702, %v1685, 0
        %v1716 = vsel %vm1702, %v1686, 0
        %v1719 = vsel %vm1702, %v1687, 0
        %v1722 = vsel %vm1702, %v1688, 0
        %v1725 = vsel %vm1702, %v1689, 0
        %v1728 = vsel %vm1702, %v1690, 0
        %v1731 = vsel %vm1702, %v1691, 0
        %v1734 = vsel %vm1702, %v1692, 0
        %v1737 = vsel %vm1702, %v1693, 0
        %v1740 = vsel %vm1702, %v1694, 0
        %v1743 = vsel %vm1702, %v1695, 0
        %v1746 = vsel %vm1702, %v1696, 0
        %v1749 = vsel %vm1702, %v1697, 0
        %1751 = vmatprep.subr.mxu0 0.0
        %1752 = vmatpush1.msra.mxu0 %v1698
        %1753 = vmatprep.subr.mxu0 0.0
        %1754 = vmatpush1.msra.mxu0 %v1699
        %1755 = vmatprep.subr.mxu0 0.0
        %1756 = vmatpush1.msra.mxu0 %v1700
        %1757 = vmatprep.subr.mxu0 0.0
        %1758 = vmatpush1.msra.mxu0 %v1701
        %1759 = vmatprep.subr.mxu0 0.0
        %1760 = vmatpush1.msra.mxu0 0.0
        %1761 = vmatprep.subr.mxu0 0.0
        %1762 = vmatpush1.msra.mxu0 0.0
        %1763 = vmatprep.subr.mxu0 0.0
        %1764 = vmatpush1.msra.mxu0 0.0
        %1765 = vmatprep.subr.mxu0 0.0
        %1766 = vmatpush1.msra.mxu0 0.0
        %1767 = vmatprep.subr.mxu0 0.0
        %1768 = vmatpush1.msra.mxu0 0.0
        %1769 = vmatprep.subr.mxu0 0.0
        %1770 = vmatpush1.msra.mxu0 0.0
        %1771 = vmatprep.subr.mxu0 0.0
        %1772 = vmatpush1.msra.mxu0 0.0
        %1773 = vmatprep.subr.mxu0 0.0
        %1774 = vmatpush1.msra.mxu0 0.0
        %1775 = vmatprep.subr.mxu0 0.0
        %1776 = vmatpush1.msra.mxu0 0.0
        %1777 = vmatprep.subr.mxu0 0.0
        %1778 = vmatpush1.msra.mxu0 0.0
        %1779 = vmatprep.subr.mxu0 0.0
        %1780 = vmatpush1.msra.mxu0 0.0
        %1781 = vmatprep.subr.mxu0 0.0
        %1782 = vmatpush1.msra.mxu0 0.0
        %1783 = vmatprep.subr.mxu0 0.0
        %1784 = vmatpush1.msra.mxu0 0.0
        %1785 = vmatprep.subr.mxu0 0.0
        %1786 = vmatpush1.msra.mxu0 0.0
        %1787 = vmatprep.subr.mxu0 0.0
        %1788 = vmatpush1.msra.mxu0 0.0
        %1789 = vmatprep.subr.mxu0 0.0
        %1790 = vmatpush1.msra.mxu0 0.0
        %1791 = vmatprep.subr.mxu0 0.0
        %1792 = vmatpush1.msra.mxu0 0.0
        %1793 = vmatprep.subr.mxu0 0.0
        %1794 = vmatpush1.msra.mxu0 0.0
        %1795 = vmatprep.subr.mxu0 0.0
        %1796 = vmatpush1.msra.mxu0 0.0
        %1797 = vmatprep.subr.mxu0 0.0
        %1798 = vmatpush1.msra.mxu0 0.0
        %1799 = vmatprep.subr.mxu0 0.0
        %1800 = vmatpush1.msra.mxu0 0.0
        %1801 = vmatprep.subr.mxu0 0.0
        %1802 = vmatpush1.msra.mxu0 0.0
        %1803 = vmatprep.subr.mxu0 0.0
        %1804 = vmatpush1.msra.mxu0 0.0
        %1805 = vmatprep.subr.mxu0 0.0
        %1806 = vmatpush1.msra.mxu0 0.0
        %1807 = vmatprep.subr.mxu0 0.0
        %1808 = vmatpush1.msra.mxu0 0.0
        %1809 = vmatprep.subr.mxu0 0.0
        %1810 = vmatpush1.msra.mxu0 0.0
        %1811 = vmatprep.subr.mxu0 0.0
        %1812 = vmatpush1.msra.mxu0 0.0
        %1813 = vmatprep.subr.mxu0 0.0
        %1814 = vmatpush1.msra.mxu0 0.0
        %1815 = vmatprep.mubr.f32.mxu0 0.0
        %1816 = vmatmul.mubr.f32.gmra.mrb[0].mxu0 %v1704
        %v1817 = vpop.f32.mrb[0].mxu0
        %v1818 = vadd.f32 0.0, %v1817
        %v1819 = vpop.f32.mrb[0].mxu0
        %1820 = vmatprep.mubr.f32.mxu0 0.0
        %1821 = vmatmul.mubr.f32.gmra.mrb[0].mxu0 %v1707
        %v1822 = vpop.f32.mrb[0].mxu0
        %v1823 = vadd.f32 0.0, %v1822
        %v1824 = vpop.f32.mrb[0].mxu0
        %1825 = vmatprep.mubr.f32.mxu0 0.0
        %1826 = vmatmul.mubr.f32.gmra.mrb[0].mxu0 %v1710
        %v1827 = vpop.f32.mrb[0].mxu0
        %v1828 = vadd.f32 0.0, %v1827
        %v1829 = vpop.f32.mrb[0].mxu0
        %1830 = vmatprep.mubr.f32.mxu0 0.0
        %1831 = vmatmul.mubr.f32.gmra.mrb[0].mxu0 %v1713
        %v1832 = vpop.f32.mrb[0].mxu0
        %v1833 = vadd.f32 0.0, %v1832
        %v1834 = vpop.f32.mrb[0].mxu0
        %1835 = vmatprep.mubr.f32.mxu0 0.0
        %1836 = vmatmul.mubr.f32.gmra.mrb[0].mxu0 %v1716
        %v1837 = vpop.f32.mrb[0].mxu0
        %v1838 = vadd.f32 0.0, %v1837
        %v1839 = vpop.f32.mrb[0].mxu0
        %1840 = vmatprep.mubr.f32.mxu0 0.0
        %1841 = vmatmul.mubr.f32.gmra.mrb[0].mxu0 %v1719
        %v1842 = vpop.f32.mrb[0].mxu0
        %v1843 = vadd.f32 0.0, %v1842
        %v1844 = vpop.f32.mrb[0].mxu0
        %1845 = vmatprep.mubr.f32.mxu0 0.0
        %1846 = vmatmul.mubr.f32.gmra.mrb[0].mxu0 %v1722
        %v1847 = vpop.f32.mrb[0].mxu0
        %v1848 = vadd.f32 0.0, %v1847
        %v1849 = vpop.f32.mrb[0].mxu0
        %1850 = vmatprep.mubr.f32.mxu0 0.0
        %1851 = vmatmul.mubr.f32.gmra.mrb[0].mxu0 %v1725
        %v1852 = vpop.f32.mrb[0].mxu0
        %v1853 = vadd.f32 0.0, %v1852
        %v1854 = vpop.f32.mrb[0].mxu0
        %1855 = vmatprep.mubr.f32.mxu0 0.0
        %1856 = vmatmul.mubr.f32.gmra.mrb[0].mxu0 %v1728
        %v1857 = vpop.f32.mrb[0].mxu0
        %v1858 = vadd.f32 0.0, %v1857
        %v1859 = vpop.f32.mrb[0].mxu0
        %1860 = vmatprep.mubr.f32.mxu0 0.0
        %1861 = vmatmul.mubr.f32.gmra.mrb[0].mxu0 %v1731
        %v1862 = vpop.f32.mrb[0].mxu0
        %v1863 = vadd.f32 0.0, %v1862
        %v1864 = vpop.f32.mrb[0].mxu0
        %1865 = vmatprep.mubr.f32.mxu0 0.0
        %1866 = vmatmul.mubr.f32.gmra.mrb[0].mxu0 %v1734
        %v1867 = vpop.f32.mrb[0].mxu0
        %v1868 = vadd.f32 0.0, %v1867
        %v1869 = vpop.f32.mrb[0].mxu0
        %1870 = vmatprep.mubr.f32.mxu0 0.0
        %1871 = vmatmul.mubr.f32.gmra.mrb[0].mxu0 %v1737
        %v1872 = vpop.f32.mrb[0].mxu0
        %v1873 = vadd.f32 0.0, %v1872
        %v1874 = vpop.f32.mrb[0].mxu0
        %1875 = vmatprep.mubr.f32.mxu0 0.0
        %1876 = vmatmul.mubr.f32.gmra.mrb[0].mxu0 %v1740
        %v1877 = vpop.f32.mrb[0].mxu0
        %v1878 = vadd.f32 0.0, %v1877
        %v1879 = vpop.f32.mrb[0].mxu0
        %1880 = vmatprep.mubr.f32.mxu0 0.0
        %1881 = vmatmul.mubr.f32.gmra.mrb[0].mxu0 %v1743
        %v1882 = vpop.f32.mrb[0].mxu0
        %v1883 = vadd.f32 0.0, %v1882
        %v1884 = vpop.f32.mrb[0].mxu0
        %1885 = vmatprep.mubr.f32.mxu0 0.0
        %1886 = vmatmul.mubr.f32.gmra.mrb[0].mxu0 %v1746
        %v1887 = vpop.f32.mrb[0].mxu0
        %v1888 = vadd.f32 0.0, %v1887
        %v1889 = vpop.f32.mrb[0].mxu0
        %1890 = vmatprep.mubr.f32.mxu0 0.0
        %1891 = vmatmul.mubr.f32.gmra.mrb[0].mxu0 %v1749
        %v1892 = vpop.f32.mrb[0].mxu0
        %v1893 = vadd.f32 0.0, %v1892
        %v1894 = vpop.f32.mrb[0].mxu0
        %1895 = vdwg.mxu0
        %vm1896 = vcmask 31744
        %v1898 = vsel %vm1896, %v1375, 0
        %v1901 = vsel %vm1896, %v1376, 0
        %v1904 = vsel %vm1896, %v1377, 0
        %v1907 = vsel %vm1896, %v1378, 0
        %v1910 = vsel %vm1896, %v1379, 0
        %v1913 = vsel %vm1896, %v1380, 0
        %v1916 = vsel %vm1896, %v1381, 0
        %v1919 = vsel %vm1896, %v1382, 0
        %v1922 = vsel %vm1896, %v1383, 0
        %v1925 = vsel %vm1896, %v1384, 0
        %v1928 = vsel %vm1896, %v1385, 0
        %v1931 = vsel %vm1896, %v1386, 0
        %v1934 = vsel %vm1896, %v1387, 0
        %v1937 = vsel %vm1896, %v1388, 0
        %v1940 = vsel %vm1896, %v1389, 0
        %v1943 = vsel %vm1896, %v1390, 0
        %v1946 = vsel %vm596, %v1391, 0
        %1948 = vmatprep.subr.mxu0 0.0
        %1949 = vmatpush1.msra.mxu0 %v1946
        %1950 = vmatprep.subr.mxu0 0.0
        %1951 = vmatpush1.msra.mxu0 0.0
        %1952 = vmatprep.subr.mxu0 0.0
        %1953 = vmatpush1.msra.mxu0 0.0
        %1954 = vmatprep.subr.mxu0 0.0
        %1955 = vmatpush1.msra.mxu0 0.0
        %1956 = vmatprep.subr.mxu0 0.0
        %1957 = vmatpush1.msra.mxu0 0.0
        %1958 = vmatprep.subr.mxu0 0.0
        %1959 = vmatpush1.msra.mxu0 0.0
        %1960 = vmatprep.subr.mxu0 0.0
        %1961 = vmatpush1.msra.mxu0 0.0
        %1962 = vmatprep.subr.mxu0 0.0
        %1963 = vmatpush1.msra.mxu0 0.0
        %1964 = vmatprep.subr.mxu0 0.0
        %1965 = vmatpush1.msra.mxu0 0.0
        %1966 = vmatprep.subr.mxu0 0.0
        %1967 = vmatpush1.msra.mxu0 0.0
        %1968 = vmatprep.subr.mxu0 0.0
        %1969 = vmatpush1.msra.mxu0 0.0
        %1970 = vmatprep.subr.mxu0 0.0
        %1971 = vmatpush1.msra.mxu0 0.0
        %1972 = vmatprep.subr.mxu0 0.0
        %1973 = vmatpush1.msra.mxu0 0.0
        %1974 = vmatprep.subr.mxu0 0.0
        %1975 = vmatpush1.msra.mxu0 0.0
        %1976 = vmatprep.subr.mxu0 0.0
        %1977 = vmatpush1.msra.mxu0 0.0
        %1978 = vmatprep.subr.mxu0 0.0
        %1979 = vmatpush1.msra.mxu0 0.0
        %1980 = vmatprep.subr.mxu0 0.0
        %1981 = vmatpush1.msra.mxu0 0.0
        %1982 = vmatprep.subr.mxu0 0.0
        %1983 = vmatpush1.msra.mxu0 0.0
        %1984 = vmatprep.subr.mxu0 0.0
        %1985 = vmatpush1.msra.mxu0 0.0
        %1986 = vmatprep.subr.mxu0 0.0
        %1987 = vmatpush1.msra.mxu0 0.0
        %1988 = vmatprep.subr.mxu0 0.0
        %1989 = vmatpush1.msra.mxu0 0.0
        %1990 = vmatprep.subr.mxu0 0.0
        %1991 = vmatpush1.msra.mxu0 0.0
        %1992 = vmatprep.subr.mxu0 0.0
        %1993 = vmatpush1.msra.mxu0 0.0
        %1994 = vmatprep.subr.mxu0 0.0
        %1995 = vmatpush1.msra.mxu0 0.0
        %1996 = vmatprep.subr.mxu0 0.0
        %1997 = vmatpush1.msra.mxu0 0.0
        %1998 = vmatprep.subr.mxu0 0.0
        %1999 = vmatpush1.msra.mxu0 0.0
        %2000 = vmatprep.subr.mxu0 0.0
        %2001 = vmatpush1.msra.mxu0 0.0
        %2002 = vmatprep.subr.mxu0 0.0
        %2003 = vmatpush1.msra.mxu0 0.0
        %2004 = vmatprep.subr.mxu0 0.0
        %2005 = vmatpush1.msra.mxu0 0.0
        %2006 = vmatprep.subr.mxu0 0.0
        %2007 = vmatpush1.msra.mxu0 0.0
        %2008 = vmatprep.subr.mxu0 0.0
        %2009 = vmatpush1.msra.mxu0 0.0
        %2010 = vmatprep.subr.mxu0 0.0
        %2011 = vmatpush1.msra.mxu0 0.0
        %2012 = vmatprep.mubr.f32.mxu0 0.0
        %2013 = vmatmul.mubr.f32.gmra.mrb[0].mxu0 %v1898
        %v2014 = vpop.f32.mrb[0].mxu0
        %v2015 = vadd.f32 %v1818, %v2014
        %v2016 = vpop.f32.mrb[0].mxu0
        %2017 = vmatprep.mubr.f32.mxu0 0.0
        %2018 = vmatmul.mubr.f32.gmra.mrb[0].mxu0 %v1901
        %v2019 = vpop.f32.mrb[0].mxu0
        %v2020 = vadd.f32 %v1823, %v2019
        %v2021 = vpop.f32.mrb[0].mxu0
        %2022 = vmatprep.mubr.f32.mxu0 0.0
        %2023 = vmatmul.mubr.f32.gmra.mrb[0].mxu0 %v1904
        %v2024 = vpop.f32.mrb[0].mxu0
        %v2025 = vadd.f32 %v1828, %v2024
        %v2026 = vpop.f32.mrb[0].mxu0
        %2027 = vmatprep.mubr.f32.mxu0 0.0
        %2028 = vmatmul.mubr.f32.gmra.mrb[0].mxu0 %v1907
        %v2029 = vpop.f32.mrb[0].mxu0
        %v2030 = vadd.f32 %v1833, %v2029
        %v2031 = vpop.f32.mrb[0].mxu0
        %2032 = vmatprep.mubr.f32.mxu0 0.0
        %2033 = vmatmul.mubr.f32.gmra.mrb[0].mxu0 %v1910
        %v2034 = vpop.f32.mrb[0].mxu0
        %v2035 = vadd.f32 %v1838, %v2034
        %v2036 = vpop.f32.mrb[0].mxu0
        %2037 = vmatprep.mubr.f32.mxu0 0.0
        %2038 = vmatmul.mubr.f32.gmra.mrb[0].mxu0 %v1913
        %v2039 = vpop.f32.mrb[0].mxu0
        %v2040 = vadd.f32 %v1843, %v2039
        %v2041 = vpop.f32.mrb[0].mxu0
        %2042 = vmatprep.mubr.f32.mxu0 0.0
        %2043 = vmatmul.mubr.f32.gmra.mrb[0].mxu0 %v1916
        %v2044 = vpop.f32.mrb[0].mxu0
        %v2045 = vadd.f32 %v1848, %v2044
        %v2046 = vpop.f32.mrb[0].mxu0
        %2047 = vmatprep.mubr.f32.mxu0 0.0
        %2048 = vmatmul.mubr.f32.gmra.mrb[0].mxu0 %v1919
        %v2049 = vpop.f32.mrb[0].mxu0
        %v2050 = vadd.f32 %v1853, %v2049
        %v2051 = vpop.f32.mrb[0].mxu0
        %2052 = vmatprep.mubr.f32.mxu0 0.0
        %2053 = vmatmul.mubr.f32.gmra.mrb[0].mxu0 %v1922
        %v2054 = vpop.f32.mrb[0].mxu0
        %v2055 = vadd.f32 %v1858, %v2054
        %v2056 = vpop.f32.mrb[0].mxu0
        %2057 = vmatprep.mubr.f32.mxu0 0.0
        %2058 = vmatmul.mubr.f32.gmra.mrb[0].mxu0 %v1925
        %v2059 = vpop.f32.mrb[0].mxu0
        %v2060 = vadd.f32 %v1863, %v2059
        %v2061 = vpop.f32.mrb[0].mxu0
        %2062 = vmatprep.mubr.f32.mxu0 0.0
        %2063 = vmatmul.mubr.f32.gmra.mrb[0].mxu0 %v1928
        %v2064 = vpop.f32.mrb[0].mxu0
        %v2065 = vadd.f32 %v1868, %v2064
        %v2066 = vpop.f32.mrb[0].mxu0
        %2067 = vmatprep.mubr.f32.mxu0 0.0
        %2068 = vmatmul.mubr.f32.gmra.mrb[0].mxu0 %v1931
        %v2069 = vpop.f32.mrb[0].mxu0
        %v2070 = vadd.f32 %v1873, %v2069
        %v2071 = vpop.f32.mrb[0].mxu0
        %2072 = vmatprep.mubr.f32.mxu0 0.0
        %2073 = vmatmul.mubr.f32.gmra.mrb[0].mxu0 %v1934
        %v2074 = vpop.f32.mrb[0].mxu0
        %v2075 = vadd.f32 %v1878, %v2074
        %v2076 = vpop.f32.mrb[0].mxu0
        %2077 = vmatprep.mubr.f32.mxu0 0.0
        %2078 = vmatmul.mubr.f32.gmra.mrb[0].mxu0 %v1937
        %v2079 = vpop.f32.mrb[0].mxu0
        %v2080 = vadd.f32 %v1883, %v2079
        %v2081 = vpop.f32.mrb[0].mxu0
        %2082 = vmatprep.mubr.f32.mxu0 0.0
        %2083 = vmatmul.mubr.f32.gmra.mrb[0].mxu0 %v1940
        %v2084 = vpop.f32.mrb[0].mxu0
        %v2085 = vadd.f32 %v1888, %v2084
        %v2086 = vpop.f32.mrb[0].mxu0
        %2087 = vmatprep.mubr.f32.mxu0 0.0
        %2088 = vmatmul.mubr.f32.gmra.mrb[0].mxu0 %v1943
        %v2089 = vpop.f32.mrb[0].mxu0
        %v2090 = vadd.f32 %v1893, %v2089
        %v2091 = vpop.f32.mrb[0].mxu0
        %2092 = vdwg.mxu0
        %v2093 = vld [vmem:[%s906] sm:$0xff]
        %v2094 = vld [vmem:[%s906 + $0x8] sm:$0xff]
        %v2095 = vld [vmem:[%s906 + $0x18] sm:$0xff]
        %v2096 = vld [vmem:[%s906 + $0x20] sm:$0xff]
        %v2097 = vld [vmem:[%s906 + $0x30] sm:$0xff]
        %v2098 = vld [vmem:[%s906 + $0x38] sm:$0xff]
        %v2099 = vld [vmem:[%s906 + $0x48] sm:$0xff]
        %v2100 = vld [vmem:[%s906 + $0x50] sm:$0xff]
        %v2101 = vld [vmem:[%s906 + $0x60] sm:$0xff]
        %v2102 = vld [vmem:[%s906 + $0x68] sm:$0xff]
        %v2103 = vld [vmem:[%s906 + $0x78] sm:$0xff]
        %v2104 = vld [vmem:[%s906 + $0x80] sm:$0xff]
        %v2105 = vld [vmem:[%s906 + $0x90] sm:$0xff]
        %v2106 = vld [vmem:[%s906 + $0x98] sm:$0xff]
        %v2107 = vld [vmem:[%s906 + $0xa8] sm:$0xff]
        %v2108 = vld [vmem:[%s906 + $0xb0] sm:$0xff]
        %v2109 = vld [vmem:[%s889] sm:$0xff]
        %v2110 = vld [vmem:[%s889 + $0x8] sm:$0xff]
        %v2111 = vld [vmem:[%s889 + $0x18] sm:$0xff]
        %v2112 = vld [vmem:[%s889 + $0x20] sm:$0xff]
        %v2113 = vld [vmem:[%s889 + $0x30] sm:$0xff]
        %v2114 = vld [vmem:[%s889 + $0x38] sm:$0xff]
        %v2115 = vld [vmem:[%s889 + $0x48] sm:$0xff]
        %v2116 = vld [vmem:[%s889 + $0x50] sm:$0xff]
        %v2117 = vld [vmem:[%s889 + $0x60] sm:$0xff]
        %v2118 = vld [vmem:[%s889 + $0x68] sm:$0xff]
        %v2119 = vld [vmem:[%s889 + $0x78] sm:$0xff]
        %v2120 = vld [vmem:[%s889 + $0x80] sm:$0xff]
        %v2121 = vld [vmem:[%s889 + $0x90] sm:$0xff]
        %v2122 = vld [vmem:[%s889 + $0x98] sm:$0xff]
        %v2123 = vld [vmem:[%s889 + $0xa8] sm:$0xff]
        %v2124 = vld [vmem:[%s889 + $0xb0] sm:$0xff]
        %v2125 = vld [vmem:[%s906 + $0x1] sm:$0xff]
        %v2126 = vld [vmem:[%s906 + $0x9] sm:$0xff]
        %v2127 = vld [vmem:[%s906 + $0x19] sm:$0xff]
        %v2128 = vld [vmem:[%s906 + $0x21] sm:$0xff]
        %v2129 = vld [vmem:[%s906 + $0x31] sm:$0xff]
        %v2130 = vld [vmem:[%s906 + $0x39] sm:$0xff]
        %v2131 = vld [vmem:[%s906 + $0x49] sm:$0xff]
        %v2132 = vld [vmem:[%s906 + $0x51] sm:$0xff]
        %v2133 = vld [vmem:[%s906 + $0x61] sm:$0xff]
        %v2134 = vld [vmem:[%s906 + $0x69] sm:$0xff]
        %v2135 = vld [vmem:[%s906 + $0x79] sm:$0xff]
        %v2136 = vld [vmem:[%s906 + $0x81] sm:$0xff]
        %v2137 = vld [vmem:[%s906 + $0x91] sm:$0xff]
        %v2138 = vld [vmem:[%s906 + $0x99] sm:$0xff]
        %v2139 = vld [vmem:[%s906 + $0xa9] sm:$0xff]
        %v2140 = vld [vmem:[%s906 + $0xb1] sm:$0xff]
        %v2141 = vld [vmem:[%s889 + $0x1] sm:$0xff]
        %v2142 = vld [vmem:[%s889 + $0x9] sm:$0xff]
        %v2143 = vld [vmem:[%s889 + $0x19] sm:$0xff]
        %v2144 = vld [vmem:[%s889 + $0x21] sm:$0xff]
        %v2145 = vld [vmem:[%s889 + $0x31] sm:$0xff]
        %v2146 = vld [vmem:[%s889 + $0x39] sm:$0xff]
        %v2147 = vld [vmem:[%s889 + $0x49] sm:$0xff]
        %v2148 = vld [vmem:[%s889 + $0x51] sm:$0xff]
        %v2149 = vld [vmem:[%s889 + $0x61] sm:$0xff]
        %v2150 = vld [vmem:[%s889 + $0x69] sm:$0xff]
        %v2151 = vld [vmem:[%s889 + $0x79] sm:$0xff]
        %v2152 = vld [vmem:[%s889 + $0x81] sm:$0xff]
        %v2153 = vld [vmem:[%s889 + $0x91] sm:$0xff]
        %v2154 = vld [vmem:[%s889 + $0x99] sm:$0xff]
        %v2155 = vld [vmem:[%s889 + $0xa9] sm:$0xff]
        %v2156 = vld [vmem:[%s889 + $0xb1] sm:$0xff]
        %2173 = vrot.lane.b32.xlu0 %v2109, 8
        %v2174 = vpop.permute.xlu0 %2173
        %2175 = vrot.lane.b32.xlu0 %v2110, 8
        %v2176 = vpop.permute.xlu0 %2175
        %2177 = vrot.lane.b32.xlu0 %v2111, 8
        %v2178 = vpop.permute.xlu0 %2177
        %2179 = vrot.lane.b32.xlu0 %v2112, 8
        %v2180 = vpop.permute.xlu0 %2179
        %2181 = vrot.lane.b32.xlu0 %v2113, 8
        %v2182 = vpop.permute.xlu0 %2181
        %2183 = vrot.lane.b32.xlu0 %v2114, 8
        %v2184 = vpop.permute.xlu0 %2183
        %2185 = vrot.lane.b32.xlu0 %v2115, 8
        %v2186 = vpop.permute.xlu0 %2185
        %2187 = vrot.lane.b32.xlu0 %v2116, 8
        %v2188 = vpop.permute.xlu0 %2187
        %2189 = vrot.lane.b32.xlu0 %v2117, 8
        %v2190 = vpop.permute.xlu0 %2189
        %2191 = vrot.lane.b32.xlu0 %v2118, 8
        %v2192 = vpop.permute.xlu0 %2191
        %2193 = vrot.lane.b32.xlu0 %v2119, 8
        %v2194 = vpop.permute.xlu0 %2193
        %2195 = vrot.lane.b32.xlu0 %v2120, 8
        %v2196 = vpop.permute.xlu0 %2195
        %2197 = vrot.lane.b32.xlu0 %v2121, 8
        %v2198 = vpop.permute.xlu0 %2197
        %2199 = vrot.lane.b32.xlu0 %v2122, 8
        %v2200 = vpop.permute.xlu0 %2199
        %2201 = vrot.lane.b32.xlu0 %v2123, 8
        %v2202 = vpop.permute.xlu0 %2201
        %2203 = vrot.lane.b32.xlu0 %v2124, 8
        %v2204 = vpop.permute.xlu0 %2203
        %2237 = vrot.lane.b32.xlu0 %v2125, 16
        %v2238 = vpop.permute.xlu0 %2237
        %2239 = vrot.lane.b32.xlu0 %v2126, 16
        %v2240 = vpop.permute.xlu0 %2239
        %2241 = vrot.lane.b32.xlu0 %v2127, 16
        %v2242 = vpop.permute.xlu0 %2241
        %2243 = vrot.lane.b32.xlu0 %v2128, 16
        %v2244 = vpop.permute.xlu0 %2243
        %2245 = vrot.lane.b32.xlu0 %v2129, 16
        %v2246 = vpop.permute.xlu0 %2245
        %2247 = vrot.lane.b32.xlu0 %v2130, 16
        %v2248 = vpop.permute.xlu0 %2247
        %2249 = vrot.lane.b32.xlu0 %v2131, 16
        %v2250 = vpop.permute.xlu0 %2249
        %2251 = vrot.lane.b32.xlu0 %v2132, 16
        %v2252 = vpop.permute.xlu0 %2251
        %2253 = vrot.lane.b32.xlu0 %v2133, 16
        %v2254 = vpop.permute.xlu0 %2253
        %2255 = vrot.lane.b32.xlu0 %v2134, 16
        %v2256 = vpop.permute.xlu0 %2255
        %2257 = vrot.lane.b32.xlu0 %v2135, 16
        %v2258 = vpop.permute.xlu0 %2257
        %2259 = vrot.lane.b32.xlu0 %v2136, 16
        %v2260 = vpop.permute.xlu0 %2259
        %2261 = vrot.lane.b32.xlu0 %v2137, 16
        %v2262 = vpop.permute.xlu0 %2261
        %2263 = vrot.lane.b32.xlu0 %v2138, 16
        %v2264 = vpop.permute.xlu0 %2263
        %2265 = vrot.lane.b32.xlu0 %v2139, 16
        %v2266 = vpop.permute.xlu0 %2265
        %2267 = vrot.lane.b32.xlu0 %v2140, 16
        %v2268 = vpop.permute.xlu0 %2267
        %2301 = vrot.lane.b32.xlu0 %v2141, 24
        %v2302 = vpop.permute.xlu0 %2301
        %2303 = vrot.lane.b32.xlu0 %v2142, 24
        %v2304 = vpop.permute.xlu0 %2303
        %2305 = vrot.lane.b32.xlu0 %v2143, 24
        %v2306 = vpop.permute.xlu0 %2305
        %2307 = vrot.lane.b32.xlu0 %v2144, 24
        %v2308 = vpop.permute.xlu0 %2307
        %2309 = vrot.lane.b32.xlu0 %v2145, 24
        %v2310 = vpop.permute.xlu0 %2309
        %2311 = vrot.lane.b32.xlu0 %v2146, 24
        %v2312 = vpop.permute.xlu0 %2311
        %2313 = vrot.lane.b32.xlu0 %v2147, 24
        %v2314 = vpop.permute.xlu0 %2313
        %2315 = vrot.lane.b32.xlu0 %v2148, 24
        %v2316 = vpop.permute.xlu0 %2315
        %2317 = vrot.lane.b32.xlu0 %v2149, 24
        %v2318 = vpop.permute.xlu0 %2317
        %2319 = vrot.lane.b32.xlu0 %v2150, 24
        %v2320 = vpop.permute.xlu0 %2319
        %2321 = vrot.lane.b32.xlu0 %v2151, 24
        %v2322 = vpop.permute.xlu0 %2321
        %2323 = vrot.lane.b32.xlu0 %v2152, 24
        %v2324 = vpop.permute.xlu0 %2323
        %2325 = vrot.lane.b32.xlu0 %v2153, 24
        %v2326 = vpop.permute.xlu0 %2325
        %2327 = vrot.lane.b32.xlu0 %v2154, 24
        %v2328 = vpop.permute.xlu0 %2327
        %2329 = vrot.lane.b32.xlu0 %v2155, 24
        %v2330 = vpop.permute.xlu0 %2329
        %2331 = vrot.lane.b32.xlu0 %v2156, 24
        %v2332 = vpop.permute.xlu0 %2331
        %v2349 = vsel %vm403, %v2093, %v2174
        %v2350 = vsel %vm403, %v2094, %v2176
        %v2351 = vsel %vm403, %v2095, %v2178
        %v2352 = vsel %vm403, %v2096, %v2180
        %v2353 = vsel %vm403, %v2097, %v2182
        %v2354 = vsel %vm403, %v2098, %v2184
        %v2355 = vsel %vm403, %v2099, %v2186
        %v2356 = vsel %vm403, %v2100, %v2188
        %v2357 = vsel %vm403, %v2101, %v2190
        %v2358 = vsel %vm403, %v2102, %v2192
        %v2359 = vsel %vm403, %v2103, %v2194
        %v2360 = vsel %vm403, %v2104, %v2196
        %v2361 = vsel %vm403, %v2105, %v2198
        %v2362 = vsel %vm403, %v2106, %v2200
        %v2363 = vsel %vm403, %v2107, %v2202
        %v2364 = vsel %vm403, %v2108, %v2204
        %v2365 = vsel %vm1664, %v2349, %v2238
        %v2366 = vsel %vm1664, %v2350, %v2240
        %v2367 = vsel %vm1664, %v2351, %v2242
        %v2368 = vsel %vm1664, %v2352, %v2244
        %v2369 = vsel %vm1664, %v2353, %v2246
        %v2370 = vsel %vm1664, %v2354, %v2248
        %v2371 = vsel %vm1664, %v2355, %v2250
        %v2372 = vsel %vm1664, %v2356, %v2252
        %v2373 = vsel %vm1664, %v2357, %v2254
        %v2374 = vsel %vm1664, %v2358, %v2256
        %v2375 = vsel %vm1664, %v2359, %v2258
        %v2376 = vsel %vm1664, %v2360, %v2260
        %v2377 = vsel %vm1664, %v2361, %v2262
        %v2378 = vsel %vm1664, %v2362, %v2264
        %v2379 = vsel %vm1664, %v2363, %v2266
        %v2380 = vsel %vm1664, %v2364, %v2268
        %v2381 = vsel %vm1681, %v2365, %v2302
        %v2382 = vsel %vm1681, %v2366, %v2304
        %v2383 = vsel %vm1681, %v2367, %v2306
        %v2384 = vsel %vm1681, %v2368, %v2308
        %v2385 = vsel %vm1681, %v2369, %v2310
        %v2386 = vsel %vm1681, %v2370, %v2312
        %v2387 = vsel %vm1681, %v2371, %v2314
        %v2388 = vsel %vm1681, %v2372, %v2316
        %v2389 = vsel %vm1681, %v2373, %v2318
        %v2390 = vsel %vm1681, %v2374, %v2320
        %v2391 = vsel %vm1681, %v2375, %v2322
        %v2392 = vsel %vm1681, %v2376, %v2324
        %v2393 = vsel %vm1681, %v2377, %v2326
        %v2394 = vsel %vm1681, %v2378, %v2328
        %v2395 = vsel %vm1681, %v2379, %v2330
        %v2396 = vsel %vm1681, %v2380, %v2332
        %v2397 = vld [vmem:[#allocation11 + $0x20] sm:$0xff]
        %v2398 = vld [vmem:[#allocation11 + $0x28] sm:$0xff]
        %v2399 = vld [vmem:[#allocation11 + $0x30] sm:$0xff]
        %v2400 = vld [vmem:[#allocation11 + $0x38] sm:$0xff]
        %v2402 = vsel %vm1702, %v2381, 0
        %v2405 = vsel %vm1702, %v2382, 0
        %v2408 = vsel %vm1702, %v2383, 0
        %v2411 = vsel %vm1702, %v2384, 0
        %v2414 = vsel %vm1702, %v2385, 0
        %v2417 = vsel %vm1702, %v2386, 0
        %v2420 = vsel %vm1702, %v2387, 0
        %v2423 = vsel %vm1702, %v2388, 0
        %v2426 = vsel %vm1702, %v2389, 0
        %v2429 = vsel %vm1702, %v2390, 0
        %v2432 = vsel %vm1702, %v2391, 0
        %v2435 = vsel %vm1702, %v2392, 0
        %v2438 = vsel %vm1702, %v2393, 0
        %v2441 = vsel %vm1702, %v2394, 0
        %v2444 = vsel %vm1702, %v2395, 0
        %v2447 = vsel %vm1702, %v2396, 0
        %2449 = vmatprep.subr.mxu0 0.0
        %2450 = vmatpush1.msra.mxu0 %v2397
        %2451 = vmatprep.subr.mxu0 0.0
        %2452 = vmatpush1.msra.mxu0 %v2398
        %2453 = vmatprep.subr.mxu0 0.0
        %2454 = vmatpush1.msra.mxu0 %v2399
        %2455 = vmatprep.subr.mxu0 0.0
        %2456 = vmatpush1.msra.mxu0 %v2400
        %2457 = vmatprep.subr.mxu0 0.0
        %2458 = vmatpush1.msra.mxu0 0.0
        %2459 = vmatprep.subr.mxu0 0.0
        %2460 = vmatpush1.msra.mxu0 0.0
        %2461 = vmatprep.subr.mxu0 0.0
        %2462 = vmatpush1.msra.mxu0 0.0
        %2463 = vmatprep.subr.mxu0 0.0
        %2464 = vmatpush1.msra.mxu0 0.0
        %2465 = vmatprep.subr.mxu0 0.0
        %2466 = vmatpush1.msra.mxu0 0.0
        %2467 = vmatprep.subr.mxu0 0.0
        %2468 = vmatpush1.msra.mxu0 0.0
        %2469 = vmatprep.subr.mxu0 0.0
        %2470 = vmatpush1.msra.mxu0 0.0
        %2471 = vmatprep.subr.mxu0 0.0
        %2472 = vmatpush1.msra.mxu0 0.0
        %2473 = vmatprep.subr.mxu0 0.0
        %2474 = vmatpush1.msra.mxu0 0.0
        %2475 = vmatprep.subr.mxu0 0.0
        %2476 = vmatpush1.msra.mxu0 0.0
        %2477 = vmatprep.subr.mxu0 0.0
        %2478 = vmatpush1.msra.mxu0 0.0
        %2479 = vmatprep.subr.mxu0 0.0
        %2480 = vmatpush1.msra.mxu0 0.0
        %2481 = vmatprep.subr.mxu0 0.0
        %2482 = vmatpush1.msra.mxu0 0.0
        %2483 = vmatprep.subr.mxu0 0.0
        %2484 = vmatpush1.msra.mxu0 0.0
        %2485 = vmatprep.subr.mxu0 0.0
        %2486 = vmatpush1.msra.mxu0 0.0
        %2487 = vmatprep.subr.mxu0 0.0
        %2488 = vmatpush1.msra.mxu0 0.0
        %2489 = vmatprep.subr.mxu0 0.0
        %2490 = vmatpush1.msra.mxu0 0.0
        %2491 = vmatprep.subr.mxu0 0.0
        %2492 = vmatpush1.msra.mxu0 0.0
        %2493 = vmatprep.subr.mxu0 0.0
        %2494 = vmatpush1.msra.mxu0 0.0
        %2495 = vmatprep.subr.mxu0 0.0
        %2496 = vmatpush1.msra.mxu0 0.0
        %2497 = vmatprep.subr.mxu0 0.0
        %2498 = vmatpush1.msra.mxu0 0.0
        %2499 = vmatprep.subr.mxu0 0.0
        %2500 = vmatpush1.msra.mxu0 0.0
        %2501 = vmatprep.subr.mxu0 0.0
        %2502 = vmatpush1.msra.mxu0 0.0
        %2503 = vmatprep.subr.mxu0 0.0
        %2504 = vmatpush1.msra.mxu0 0.0
        %2505 = vmatprep.subr.mxu0 0.0
        %2506 = vmatpush1.msra.mxu0 0.0
        %2507 = vmatprep.subr.mxu0 0.0
        %2508 = vmatpush1.msra.mxu0 0.0
        %2509 = vmatprep.subr.mxu0 0.0
        %2510 = vmatpush1.msra.mxu0 0.0
        %2511 = vmatprep.subr.mxu0 0.0
        %2512 = vmatpush1.msra.mxu0 0.0
        %2513 = vmatprep.mubr.f32.mxu0 0.0
        %2514 = vmatmul.mubr.f32.gmra.mrb[0].mxu0 %v2402
        %v2515 = vpop.f32.mrb[0].mxu0
        %v2516 = vadd.f32 0.0, %v2515
        %v2517 = vpop.f32.mrb[0].mxu0
        %2518 = vmatprep.mubr.f32.mxu0 0.0
        %2519 = vmatmul.mubr.f32.gmra.mrb[0].mxu0 %v2405
        %v2520 = vpop.f32.mrb[0].mxu0
        %v2521 = vadd.f32 0.0, %v2520
        %v2522 = vpop.f32.mrb[0].mxu0
        %2523 = vmatprep.mubr.f32.mxu0 0.0
        %2524 = vmatmul.mubr.f32.gmra.mrb[0].mxu0 %v2408
        %v2525 = vpop.f32.mrb[0].mxu0
        %v2526 = vadd.f32 0.0, %v2525
        %v2527 = vpop.f32.mrb[0].mxu0
        %2528 = vmatprep.mubr.f32.mxu0 0.0
        %2529 = vmatmul.mubr.f32.gmra.mrb[0].mxu0 %v2411
        %v2530 = vpop.f32.mrb[0].mxu0
        %v2531 = vadd.f32 0.0, %v2530
        %v2532 = vpop.f32.mrb[0].mxu0
        %2533 = vmatprep.mubr.f32.mxu0 0.0
        %2534 = vmatmul.mubr.f32.gmra.mrb[0].mxu0 %v2414
        %v2535 = vpop.f32.mrb[0].mxu0
        %v2536 = vadd.f32 0.0, %v2535
        %v2537 = vpop.f32.mrb[0].mxu0
        %2538 = vmatprep.mubr.f32.mxu0 0.0
        %2539 = vmatmul.mubr.f32.gmra.mrb[0].mxu0 %v2417
        %v2540 = vpop.f32.mrb[0].mxu0
        %v2541 = vadd.f32 0.0, %v2540
        %v2542 = vpop.f32.mrb[0].mxu0
        %2543 = vmatprep.mubr.f32.mxu0 0.0
        %2544 = vmatmul.mubr.f32.gmra.mrb[0].mxu0 %v2420
        %v2545 = vpop.f32.mrb[0].mxu0
        %v2546 = vadd.f32 0.0, %v2545
        %v2547 = vpop.f32.mrb[0].mxu0
        %2548 = vmatprep.mubr.f32.mxu0 0.0
        %2549 = vmatmul.mubr.f32.gmra.mrb[0].mxu0 %v2423
        %v2550 = vpop.f32.mrb[0].mxu0
        %v2551 = vadd.f32 0.0, %v2550
        %v2552 = vpop.f32.mrb[0].mxu0
        %2553 = vmatprep.mubr.f32.mxu0 0.0
        %2554 = vmatmul.mubr.f32.gmra.mrb[0].mxu0 %v2426
        %v2555 = vpop.f32.mrb[0].mxu0
        %v2556 = vadd.f32 0.0, %v2555
        %v2557 = vpop.f32.mrb[0].mxu0
        %2558 = vmatprep.mubr.f32.mxu0 0.0
        %2559 = vmatmul.mubr.f32.gmra.mrb[0].mxu0 %v2429
        %v2560 = vpop.f32.mrb[0].mxu0
        %v2561 = vadd.f32 0.0, %v2560
        %v2562 = vpop.f32.mrb[0].mxu0
        %2563 = vmatprep.mubr.f32.mxu0 0.0
        %2564 = vmatmul.mubr.f32.gmra.mrb[0].mxu0 %v2432
        %v2565 = vpop.f32.mrb[0].mxu0
        %v2566 = vadd.f32 0.0, %v2565
        %v2567 = vpop.f32.mrb[0].mxu0
        %2568 = vmatprep.mubr.f32.mxu0 0.0
        %2569 = vmatmul.mubr.f32.gmra.mrb[0].mxu0 %v2435
        %v2570 = vpop.f32.mrb[0].mxu0
        %v2571 = vadd.f32 0.0, %v2570
        %v2572 = vpop.f32.mrb[0].mxu0
        %2573 = vmatprep.mubr.f32.mxu0 0.0
        %2574 = vmatmul.mubr.f32.gmra.mrb[0].mxu0 %v2438
        %v2575 = vpop.f32.mrb[0].mxu0
        %v2576 = vadd.f32 0.0, %v2575
        %v2577 = vpop.f32.mrb[0].mxu0
        %2578 = vmatprep.mubr.f32.mxu0 0.0
        %2579 = vmatmul.mubr.f32.gmra.mrb[0].mxu0 %v2441
        %v2580 = vpop.f32.mrb[0].mxu0
        %v2581 = vadd.f32 0.0, %v2580
        %v2582 = vpop.f32.mrb[0].mxu0
        %2583 = vmatprep.mubr.f32.mxu0 0.0
        %2584 = vmatmul.mubr.f32.gmra.mrb[0].mxu0 %v2444
        %v2585 = vpop.f32.mrb[0].mxu0
        %v2586 = vadd.f32 0.0, %v2585
        %v2587 = vpop.f32.mrb[0].mxu0
        %2588 = vmatprep.mubr.f32.mxu0 0.0
        %2589 = vmatmul.mubr.f32.gmra.mrb[0].mxu0 %v2447
        %v2590 = vpop.f32.mrb[0].mxu0
        %v2591 = vadd.f32 0.0, %v2590
        %v2592 = vpop.f32.mrb[0].mxu0
        %2593 = vdwg.mxu0
        %v2594 = vadd.f32 %v2015, %v2516
        %v2595 = vadd.f32 %v2020, %v2521
        %v2596 = vadd.f32 %v2025, %v2526
        %v2597 = vadd.f32 %v2030, %v2531
        %v2598 = vadd.f32 %v2035, %v2536
        %v2599 = vadd.f32 %v2040, %v2541
        %v2600 = vadd.f32 %v2045, %v2546
        %v2601 = vadd.f32 %v2050, %v2551
        %v2602 = vadd.f32 %v2055, %v2556
        %v2603 = vadd.f32 %v2060, %v2561
        %v2604 = vadd.f32 %v2065, %v2566
        %v2605 = vadd.f32 %v2070, %v2571
        %v2606 = vadd.f32 %v2075, %v2576
        %v2607 = vadd.f32 %v2080, %v2581
        %v2608 = vadd.f32 %v2085, %v2586
        %v2609 = vadd.f32 %v2090, %v2591
        %v2610 = vld [vmem:[%s1358] sm:$0xff]
        %v2611 = vld [vmem:[%s1358 + $0x8] sm:$0xff]
        %v2612 = vld [vmem:[%s1358 + $0x18] sm:$0xff]
        %v2613 = vld [vmem:[%s1358 + $0x20] sm:$0xff]
        %v2614 = vld [vmem:[%s1358 + $0x30] sm:$0xff]
        %v2615 = vld [vmem:[%s1358 + $0x38] sm:$0xff]
        %v2616 = vld [vmem:[%s1358 + $0x48] sm:$0xff]
        %v2617 = vld [vmem:[%s1358 + $0x50] sm:$0xff]
        %v2618 = vld [vmem:[%s1358 + $0x60] sm:$0xff]
        %v2619 = vld [vmem:[%s1358 + $0x68] sm:$0xff]
        %v2620 = vld [vmem:[%s1358 + $0x78] sm:$0xff]
        %v2621 = vld [vmem:[%s1358 + $0x80] sm:$0xff]
        %v2622 = vld [vmem:[%s1358 + $0x90] sm:$0xff]
        %v2623 = vld [vmem:[%s1358 + $0x98] sm:$0xff]
        %v2624 = vld [vmem:[%s1358 + $0xa8] sm:$0xff]
        %v2625 = vld [vmem:[%s1358 + $0xb0] sm:$0xff]
        %v2626 = vld [vmem:[%s1341] sm:$0xff]
        %v2627 = vld [vmem:[%s1341 + $0x8] sm:$0xff]
        %v2628 = vld [vmem:[%s1341 + $0x18] sm:$0xff]
        %v2629 = vld [vmem:[%s1341 + $0x20] sm:$0xff]
        %v2630 = vld [vmem:[%s1341 + $0x30] sm:$0xff]
        %v2631 = vld [vmem:[%s1341 + $0x38] sm:$0xff]
        %v2632 = vld [vmem:[%s1341 + $0x48] sm:$0xff]
        %v2633 = vld [vmem:[%s1341 + $0x50] sm:$0xff]
        %v2634 = vld [vmem:[%s1341 + $0x60] sm:$0xff]
        %v2635 = vld [vmem:[%s1341 + $0x68] sm:$0xff]
        %v2636 = vld [vmem:[%s1341 + $0x78] sm:$0xff]
        %v2637 = vld [vmem:[%s1341 + $0x80] sm:$0xff]
        %v2638 = vld [vmem:[%s1341 + $0x90] sm:$0xff]
        %v2639 = vld [vmem:[%s1341 + $0x98] sm:$0xff]
        %v2640 = vld [vmem:[%s1341 + $0xa8] sm:$0xff]
        %v2641 = vld [vmem:[%s1341 + $0xb0] sm:$0xff]
        %v2642 = vld [vmem:[%s1358 + $0x1] sm:$0xff]
        %v2643 = vld [vmem:[%s1358 + $0x9] sm:$0xff]
        %v2644 = vld [vmem:[%s1358 + $0x19] sm:$0xff]
        %v2645 = vld [vmem:[%s1358 + $0x21] sm:$0xff]
        %v2646 = vld [vmem:[%s1358 + $0x31] sm:$0xff]
        %v2647 = vld [vmem:[%s1358 + $0x39] sm:$0xff]
        %v2648 = vld [vmem:[%s1358 + $0x49] sm:$0xff]
        %v2649 = vld [vmem:[%s1358 + $0x51] sm:$0xff]
        %v2650 = vld [vmem:[%s1358 + $0x61] sm:$0xff]
        %v2651 = vld [vmem:[%s1358 + $0x69] sm:$0xff]
        %v2652 = vld [vmem:[%s1358 + $0x79] sm:$0xff]
        %v2653 = vld [vmem:[%s1358 + $0x81] sm:$0xff]
        %v2654 = vld [vmem:[%s1358 + $0x91] sm:$0xff]
        %v2655 = vld [vmem:[%s1358 + $0x99] sm:$0xff]
        %v2656 = vld [vmem:[%s1358 + $0xa9] sm:$0xff]
        %v2657 = vld [vmem:[%s1358 + $0xb1] sm:$0xff]
        %v2658 = vld [vmem:[%s1341 + $0x1] sm:$0xff]
        %v2659 = vld [vmem:[%s1341 + $0x9] sm:$0xff]
        %v2660 = vld [vmem:[%s1341 + $0x19] sm:$0xff]
        %v2661 = vld [vmem:[%s1341 + $0x21] sm:$0xff]
        %v2662 = vld [vmem:[%s1341 + $0x31] sm:$0xff]
        %v2663 = vld [vmem:[%s1341 + $0x39] sm:$0xff]
        %v2664 = vld [vmem:[%s1341 + $0x49] sm:$0xff]
        %v2665 = vld [vmem:[%s1341 + $0x51] sm:$0xff]
        %v2666 = vld [vmem:[%s1341 + $0x61] sm:$0xff]
        %v2667 = vld [vmem:[%s1341 + $0x69] sm:$0xff]
        %v2668 = vld [vmem:[%s1341 + $0x79] sm:$0xff]
        %v2669 = vld [vmem:[%s1341 + $0x81] sm:$0xff]
        %v2670 = vld [vmem:[%s1341 + $0x91] sm:$0xff]
        %v2671 = vld [vmem:[%s1341 + $0x99] sm:$0xff]
        %v2672 = vld [vmem:[%s1341 + $0xa9] sm:$0xff]
        %v2673 = vld [vmem:[%s1341 + $0xb1] sm:$0xff]
        %2690 = vrot.lane.b32.xlu0 %v2626, 8
        %v2691 = vpop.permute.xlu0 %2690
        %2692 = vrot.lane.b32.xlu0 %v2627, 8
        %v2693 = vpop.permute.xlu0 %2692
        %2694 = vrot.lane.b32.xlu0 %v2628, 8
        %v2695 = vpop.permute.xlu0 %2694
        %2696 = vrot.lane.b32.xlu0 %v2629, 8
        %v2697 = vpop.permute.xlu0 %2696
        %2698 = vrot.lane.b32.xlu0 %v2630, 8
        %v2699 = vpop.permute.xlu0 %2698
        %2700 = vrot.lane.b32.xlu0 %v2631, 8
        %v2701 = vpop.permute.xlu0 %2700
        %2702 = vrot.lane.b32.xlu0 %v2632, 8
        %v2703 = vpop.permute.xlu0 %2702
        %2704 = vrot.lane.b32.xlu0 %v2633, 8
        %v2705 = vpop.permute.xlu0 %2704
        %2706 = vrot.lane.b32.xlu0 %v2634, 8
        %v2707 = vpop.permute.xlu0 %2706
        %2708 = vrot.lane.b32.xlu0 %v2635, 8
        %v2709 = vpop.permute.xlu0 %2708
        %2710 = vrot.lane.b32.xlu0 %v2636, 8
        %v2711 = vpop.permute.xlu0 %2710
        %2712 = vrot.lane.b32.xlu0 %v2637, 8
        %v2713 = vpop.permute.xlu0 %2712
        %2714 = vrot.lane.b32.xlu0 %v2638, 8
        %v2715 = vpop.permute.xlu0 %2714
        %2716 = vrot.lane.b32.xlu0 %v2639, 8
        %v2717 = vpop.permute.xlu0 %2716
        %2718 = vrot.lane.b32.xlu0 %v2640, 8
        %v2719 = vpop.permute.xlu0 %2718
        %2720 = vrot.lane.b32.xlu0 %v2641, 8
        %v2721 = vpop.permute.xlu0 %2720
        %2754 = vrot.lane.b32.xlu0 %v2642, 16
        %v2755 = vpop.permute.xlu0 %2754
        %2756 = vrot.lane.b32.xlu0 %v2643, 16
        %v2757 = vpop.permute.xlu0 %2756
        %2758 = vrot.lane.b32.xlu0 %v2644, 16
        %v2759 = vpop.permute.xlu0 %2758
        %2760 = vrot.lane.b32.xlu0 %v2645, 16
        %v2761 = vpop.permute.xlu0 %2760
        %2762 = vrot.lane.b32.xlu0 %v2646, 16
        %v2763 = vpop.permute.xlu0 %2762
        %2764 = vrot.lane.b32.xlu0 %v2647, 16
        %v2765 = vpop.permute.xlu0 %2764
        %2766 = vrot.lane.b32.xlu0 %v2648, 16
        %v2767 = vpop.permute.xlu0 %2766
        %2768 = vrot.lane.b32.xlu0 %v2649, 16
        %v2769 = vpop.permute.xlu0 %2768
        %2770 = vrot.lane.b32.xlu0 %v2650, 16
        %v2771 = vpop.permute.xlu0 %2770
        %2772 = vrot.lane.b32.xlu0 %v2651, 16
        %v2773 = vpop.permute.xlu0 %2772
        %2774 = vrot.lane.b32.xlu0 %v2652, 16
        %v2775 = vpop.permute.xlu0 %2774
        %2776 = vrot.lane.b32.xlu0 %v2653, 16
        %v2777 = vpop.permute.xlu0 %2776
        %2778 = vrot.lane.b32.xlu0 %v2654, 16
        %v2779 = vpop.permute.xlu0 %2778
        %2780 = vrot.lane.b32.xlu0 %v2655, 16
        %v2781 = vpop.permute.xlu0 %2780
        %2782 = vrot.lane.b32.xlu0 %v2656, 16
        %v2783 = vpop.permute.xlu0 %2782
        %2784 = vrot.lane.b32.xlu0 %v2657, 16
        %v2785 = vpop.permute.xlu0 %2784
        %2818 = vrot.lane.b32.xlu0 %v2658, 24
        %v2819 = vpop.permute.xlu0 %2818
        %2820 = vrot.lane.b32.xlu0 %v2659, 24
        %v2821 = vpop.permute.xlu0 %2820
        %2822 = vrot.lane.b32.xlu0 %v2660, 24
        %v2823 = vpop.permute.xlu0 %2822
        %2824 = vrot.lane.b32.xlu0 %v2661, 24
        %v2825 = vpop.permute.xlu0 %2824
        %2826 = vrot.lane.b32.xlu0 %v2662, 24
        %v2827 = vpop.permute.xlu0 %2826
        %2828 = vrot.lane.b32.xlu0 %v2663, 24
        %v2829 = vpop.permute.xlu0 %2828
        %2830 = vrot.lane.b32.xlu0 %v2664, 24
        %v2831 = vpop.permute.xlu0 %2830
        %2832 = vrot.lane.b32.xlu0 %v2665, 24
        %v2833 = vpop.permute.xlu0 %2832
        %2834 = vrot.lane.b32.xlu0 %v2666, 24
        %v2835 = vpop.permute.xlu0 %2834
        %2836 = vrot.lane.b32.xlu0 %v2667, 24
        %v2837 = vpop.permute.xlu0 %2836
        %2838 = vrot.lane.b32.xlu0 %v2668, 24
        %v2839 = vpop.permute.xlu0 %2838
        %2840 = vrot.lane.b32.xlu0 %v2669, 24
        %v2841 = vpop.permute.xlu0 %2840
        %2842 = vrot.lane.b32.xlu0 %v2670, 24
        %v2843 = vpop.permute.xlu0 %2842
        %2844 = vrot.lane.b32.xlu0 %v2671, 24
        %v2845 = vpop.permute.xlu0 %2844
        %2846 = vrot.lane.b32.xlu0 %v2672, 24
        %v2847 = vpop.permute.xlu0 %2846
        %2848 = vrot.lane.b32.xlu0 %v2673, 24
        %v2849 = vpop.permute.xlu0 %2848
        %v2866 = vsel %vm403, %v2610, %v2691
        %v2867 = vsel %vm403, %v2611, %v2693
        %v2868 = vsel %vm403, %v2612, %v2695
        %v2869 = vsel %vm403, %v2613, %v2697
        %v2870 = vsel %vm403, %v2614, %v2699
        %v2871 = vsel %vm403, %v2615, %v2701
        %v2872 = vsel %vm403, %v2616, %v2703
        %v2873 = vsel %vm403, %v2617, %v2705
        %v2874 = vsel %vm403, %v2618, %v2707
        %v2875 = vsel %vm403, %v2619, %v2709
        %v2876 = vsel %vm403, %v2620, %v2711
        %v2877 = vsel %vm403, %v2621, %v2713
        %v2878 = vsel %vm403, %v2622, %v2715
        %v2879 = vsel %vm403, %v2623, %v2717
        %v2880 = vsel %vm403, %v2624, %v2719
        %v2881 = vsel %vm403, %v2625, %v2721
        %v2882 = vsel %vm1664, %v2866, %v2755
        %v2883 = vsel %vm1664, %v2867, %v2757
        %v2884 = vsel %vm1664, %v2868, %v2759
        %v2885 = vsel %vm1664, %v2869, %v2761
        %v2886 = vsel %vm1664, %v2870, %v2763
        %v2887 = vsel %vm1664, %v2871, %v2765
        %v2888 = vsel %vm1664, %v2872, %v2767
        %v2889 = vsel %vm1664, %v2873, %v2769
        %v2890 = vsel %vm1664, %v2874, %v2771
        %v2891 = vsel %vm1664, %v2875, %v2773
        %v2892 = vsel %vm1664, %v2876, %v2775
        %v2893 = vsel %vm1664, %v2877, %v2777
        %v2894 = vsel %vm1664, %v2878, %v2779
        %v2895 = vsel %vm1664, %v2879, %v2781
        %v2896 = vsel %vm1664, %v2880, %v2783
        %v2897 = vsel %vm1664, %v2881, %v2785
        %v2898 = vsel %vm1681, %v2882, %v2819
        %v2899 = vsel %vm1681, %v2883, %v2821
        %v2900 = vsel %vm1681, %v2884, %v2823
        %v2901 = vsel %vm1681, %v2885, %v2825
        %v2902 = vsel %vm1681, %v2886, %v2827
        %v2903 = vsel %vm1681, %v2887, %v2829
        %v2904 = vsel %vm1681, %v2888, %v2831
        %v2905 = vsel %vm1681, %v2889, %v2833
        %v2906 = vsel %vm1681, %v2890, %v2835
        %v2907 = vsel %vm1681, %v2891, %v2837
        %v2908 = vsel %vm1681, %v2892, %v2839
        %v2909 = vsel %vm1681, %v2893, %v2841
        %v2910 = vsel %vm1681, %v2894, %v2843
        %v2911 = vsel %vm1681, %v2895, %v2845
        %v2912 = vsel %vm1681, %v2896, %v2847
        %v2913 = vsel %vm1681, %v2897, %v2849
        %v2914 = vld [vmem:[#allocation11 + $0x40] sm:$0xff]
        %v2915 = vld [vmem:[#allocation11 + $0x48] sm:$0xff]
        %v2916 = vld [vmem:[#allocation11 + $0x50] sm:$0xff]
        %v2917 = vld [vmem:[#allocation11 + $0x58] sm:$0xff]
        %v2919 = vsel %vm1702, %v2898, 0
        %v2922 = vsel %vm1702, %v2899, 0
        %v2925 = vsel %vm1702, %v2900, 0
        %v2928 = vsel %vm1702, %v2901, 0
        %v2931 = vsel %vm1702, %v2902, 0
        %v2934 = vsel %vm1702, %v2903, 0
        %v2937 = vsel %vm1702, %v2904, 0
        %v2940 = vsel %vm1702, %v2905, 0
        %v2943 = vsel %vm1702, %v2906, 0
        %v2946 = vsel %vm1702, %v2907, 0
        %v2949 = vsel %vm1702, %v2908, 0
        %v2952 = vsel %vm1702, %v2909, 0
        %v2955 = vsel %vm1702, %v2910, 0
        %v2958 = vsel %vm1702, %v2911, 0
        %v2961 = vsel %vm1702, %v2912, 0
        %v2964 = vsel %vm1702, %v2913, 0
        %2966 = vmatprep.subr.mxu0 0.0
        %2967 = vmatpush1.msra.mxu0 %v2914
        %2968 = vmatprep.subr.mxu0 0.0
        %2969 = vmatpush1.msra.mxu0 %v2915
        %2970 = vmatprep.subr.mxu0 0.0
        %2971 = vmatpush1.msra.mxu0 %v2916
        %2972 = vmatprep.subr.mxu0 0.0
        %2973 = vmatpush1.msra.mxu0 %v2917
        %2974 = vmatprep.subr.mxu0 0.0
        %2975 = vmatpush1.msra.mxu0 0.0
        %2976 = vmatprep.subr.mxu0 0.0
        %2977 = vmatpush1.msra.mxu0 0.0
        %2978 = vmatprep.subr.mxu0 0.0
        %2979 = vmatpush1.msra.mxu0 0.0
        %2980 = vmatprep.subr.mxu0 0.0
        %2981 = vmatpush1.msra.mxu0 0.0
        %2982 = vmatprep.subr.mxu0 0.0
        %2983 = vmatpush1.msra.mxu0 0.0
        %2984 = vmatprep.subr.mxu0 0.0
        %2985 = vmatpush1.msra.mxu0 0.0
        %2986 = vmatprep.subr.mxu0 0.0
        %2987 = vmatpush1.msra.mxu0 0.0
        %2988 = vmatprep.subr.mxu0 0.0
        %2989 = vmatpush1.msra.mxu0 0.0
        %2990 = vmatprep.subr.mxu0 0.0
        %2991 = vmatpush1.msra.mxu0 0.0
        %2992 = vmatprep.subr.mxu0 0.0
        %2993 = vmatpush1.msra.mxu0 0.0
        %2994 = vmatprep.subr.mxu0 0.0
        %2995 = vmatpush1.msra.mxu0 0.0
        %2996 = vmatprep.subr.mxu0 0.0
        %2997 = vmatpush1.msra.mxu0 0.0
        %2998 = vmatprep.subr.mxu0 0.0
        %2999 = vmatpush1.msra.mxu0 0.0
        %3000 = vmatprep.subr.mxu0 0.0
        %3001 = vmatpush1.msra.mxu0 0.0
        %3002 = vmatprep.subr.mxu0 0.0
        %3003 = vmatpush1.msra.mxu0 0.0
        %3004 = vmatprep.subr.mxu0 0.0
        %3005 = vmatpush1.msra.mxu0 0.0
        %3006 = vmatprep.subr.mxu0 0.0
        %3007 = vmatpush1.msra.mxu0 0.0
        %3008 = vmatprep.subr.mxu0 0.0
        %3009 = vmatpush1.msra.mxu0 0.0
        %3010 = vmatprep.subr.mxu0 0.0
        %3011 = vmatpush1.msra.mxu0 0.0
        %3012 = vmatprep.subr.mxu0 0.0
        %3013 = vmatpush1.msra.mxu0 0.0
        %3014 = vmatprep.subr.mxu0 0.0
        %3015 = vmatpush1.msra.mxu0 0.0
        %3016 = vmatprep.subr.mxu0 0.0
        %3017 = vmatpush1.msra.mxu0 0.0
        %3018 = vmatprep.subr.mxu0 0.0
        %3019 = vmatpush1.msra.mxu0 0.0
        %3020 = vmatprep.subr.mxu0 0.0
        %3021 = vmatpush1.msra.mxu0 0.0
        %3022 = vmatprep.subr.mxu0 0.0
        %3023 = vmatpush1.msra.mxu0 0.0
        %3024 = vmatprep.subr.mxu0 0.0
        %3025 = vmatpush1.msra.mxu0 0.0
        %3026 = vmatprep.subr.mxu0 0.0
        %3027 = vmatpush1.msra.mxu0 0.0
        %3028 = vmatprep.subr.mxu0 0.0
        %3029 = vmatpush1.msra.mxu0 0.0
        %3030 = vmatprep.mubr.f32.mxu0 0.0
        %3031 = vmatmul.mubr.f32.gmra.mrb[0].mxu0 %v2919
        %v3032 = vpop.f32.mrb[0].mxu0
        %v3033 = vadd.f32 0.0, %v3032
        %v3034 = vpop.f32.mrb[0].mxu0
        %3035 = vmatprep.mubr.f32.mxu0 0.0
        %3036 = vmatmul.mubr.f32.gmra.mrb[0].mxu0 %v2922
        %v3037 = vpop.f32.mrb[0].mxu0
        %v3038 = vadd.f32 0.0, %v3037
        %v3039 = vpop.f32.mrb[0].mxu0
        %3040 = vmatprep.mubr.f32.mxu0 0.0
        %3041 = vmatmul.mubr.f32.gmra.mrb[0].mxu0 %v2925
        %v3042 = vpop.f32.mrb[0].mxu0
        %v3043 = vadd.f32 0.0, %v3042
        %v3044 = vpop.f32.mrb[0].mxu0
        %3045 = vmatprep.mubr.f32.mxu0 0.0
        %3046 = vmatmul.mubr.f32.gmra.mrb[0].mxu0 %v2928
        %v3047 = vpop.f32.mrb[0].mxu0
        %v3048 = vadd.f32 0.0, %v3047
        %v3049 = vpop.f32.mrb[0].mxu0
        %3050 = vmatprep.mubr.f32.mxu0 0.0
        %3051 = vmatmul.mubr.f32.gmra.mrb[0].mxu0 %v2931
        %v3052 = vpop.f32.mrb[0].mxu0
        %v3053 = vadd.f32 0.0, %v3052
        %v3054 = vpop.f32.mrb[0].mxu0
        %3055 = vmatprep.mubr.f32.mxu0 0.0
        %3056 = vmatmul.mubr.f32.gmra.mrb[0].mxu0 %v2934
        %v3057 = vpop.f32.mrb[0].mxu0
        %v3058 = vadd.f32 0.0, %v3057
        %v3059 = vpop.f32.mrb[0].mxu0
        %3060 = vmatprep.mubr.f32.mxu0 0.0
        %3061 = vmatmul.mubr.f32.gmra.mrb[0].mxu0 %v2937
        %v3062 = vpop.f32.mrb[0].mxu0
        %v3063 = vadd.f32 0.0, %v3062
        %v3064 = vpop.f32.mrb[0].mxu0
        %3065 = vmatprep.mubr.f32.mxu0 0.0
        %3066 = vmatmul.mubr.f32.gmra.mrb[0].mxu0 %v2940
        %v3067 = vpop.f32.mrb[0].mxu0
        %v3068 = vadd.f32 0.0, %v3067
        %v3069 = vpop.f32.mrb[0].mxu0
        %3070 = vmatprep.mubr.f32.mxu0 0.0
        %3071 = vmatmul.mubr.f32.gmra.mrb[0].mxu0 %v2943
        %v3072 = vpop.f32.mrb[0].mxu0
        %v3073 = vadd.f32 0.0, %v3072
        %v3074 = vpop.f32.mrb[0].mxu0
        %3075 = vmatprep.mubr.f32.mxu0 0.0
        %3076 = vmatmul.mubr.f32.gmra.mrb[0].mxu0 %v2946
        %v3077 = vpop.f32.mrb[0].mxu0
        %v3078 = vadd.f32 0.0, %v3077
        %v3079 = vpop.f32.mrb[0].mxu0
        %3080 = vmatprep.mubr.f32.mxu0 0.0
        %3081 = vmatmul.mubr.f32.gmra.mrb[0].mxu0 %v2949
        %v3082 = vpop.f32.mrb[0].mxu0
        %v3083 = vadd.f32 0.0, %v3082
        %v3084 = vpop.f32.mrb[0].mxu0
        %3085 = vmatprep.mubr.f32.mxu0 0.0
        %3086 = vmatmul.mubr.f32.gmra.mrb[0].mxu0 %v2952
        %v3087 = vpop.f32.mrb[0].mxu0
        %v3088 = vadd.f32 0.0, %v3087
        %v3089 = vpop.f32.mrb[0].mxu0
        %3090 = vmatprep.mubr.f32.mxu0 0.0
        %3091 = vmatmul.mubr.f32.gmra.mrb[0].mxu0 %v2955
        %v3092 = vpop.f32.mrb[0].mxu0
        %v3093 = vadd.f32 0.0, %v3092
        %v3094 = vpop.f32.mrb[0].mxu0
        %3095 = vmatprep.mubr.f32.mxu0 0.0
        %3096 = vmatmul.mubr.f32.gmra.mrb[0].mxu0 %v2958
        %v3097 = vpop.f32.mrb[0].mxu0
        %v3098 = vadd.f32 0.0, %v3097
        %v3099 = vpop.f32.mrb[0].mxu0
        %3100 = vmatprep.mubr.f32.mxu0 0.0
        %3101 = vmatmul.mubr.f32.gmra.mrb[0].mxu0 %v2961
        %v3102 = vpop.f32.mrb[0].mxu0
        %v3103 = vadd.f32 0.0, %v3102
        %v3104 = vpop.f32.mrb[0].mxu0
        %3105 = vmatprep.mubr.f32.mxu0 0.0
        %3106 = vmatmul.mubr.f32.gmra.mrb[0].mxu0 %v2964
        %v3107 = vpop.f32.mrb[0].mxu0
        %v3108 = vadd.f32 0.0, %v3107
        %v3109 = vpop.f32.mrb[0].mxu0
        %3110 = vdwg.mxu0
        %v3111 = vadd.f32 %v2594, %v3033
        %v3112 = vadd.f32 %v2595, %v3038
        %v3113 = vadd.f32 %v2596, %v3043
        %v3114 = vadd.f32 %v2597, %v3048
        %v3115 = vadd.f32 %v2598, %v3053
        %v3116 = vadd.f32 %v2599, %v3058
        %v3117 = vadd.f32 %v2600, %v3063
        %v3118 = vadd.f32 %v2601, %v3068
        %v3119 = vadd.f32 %v2602, %v3073
        %v3120 = vadd.f32 %v2603, %v3078
        %v3121 = vadd.f32 %v2604, %v3083
        %v3122 = vadd.f32 %v2605, %v3088
        %v3123 = vadd.f32 %v2606, %v3093
        %v3124 = vadd.f32 %v2607, %v3098
        %v3125 = vadd.f32 %v2608, %v3103
        %v3126 = vadd.f32 %v2609, %v3108
        %s3127 = scalar_lea.vmem [#allocation2], 456
        %v3128 = vld [vmem:[%s3127] sm:$0xff]
        %v3129 = vld [vmem:[%s3127 + $0x8] sm:$0xff]
        %v3130 = vld [vmem:[%s3127 + $0x18] sm:$0xff]
        %v3131 = vld [vmem:[%s3127 + $0x20] sm:$0xff]
        %v3132 = vld [vmem:[%s3127 + $0x30] sm:$0xff]
        %v3133 = vld [vmem:[%s3127 + $0x38] sm:$0xff]
        %v3134 = vld [vmem:[%s3127 + $0x48] sm:$0xff]
        %v3135 = vld [vmem:[%s3127 + $0x50] sm:$0xff]
        %v3136 = vld [vmem:[%s3127 + $0x60] sm:$0xff]
        %v3137 = vld [vmem:[%s3127 + $0x68] sm:$0xff]
        %v3138 = vld [vmem:[%s3127 + $0x78] sm:$0xff]
        %v3139 = vld [vmem:[%s3127 + $0x80] sm:$0xff]
        %v3140 = vld [vmem:[%s3127 + $0x90] sm:$0xff]
        %v3141 = vld [vmem:[%s3127 + $0x98] sm:$0xff]
        %v3142 = vld [vmem:[%s3127 + $0xa8] sm:$0xff]
        %v3143 = vld [vmem:[%s3127 + $0xb0] sm:$0xff]
        %s3144 = scalar_lea.vmem [#allocation2], 672
        %v3145 = vld [vmem:[%s3144] sm:$0xff]
        %v3146 = vld [vmem:[%s3144 + $0x8] sm:$0xff]
        %v3147 = vld [vmem:[%s3144 + $0x18] sm:$0xff]
        %v3148 = vld [vmem:[%s3144 + $0x20] sm:$0xff]
        %v3149 = vld [vmem:[%s3144 + $0x30] sm:$0xff]
        %v3150 = vld [vmem:[%s3144 + $0x38] sm:$0xff]
        %v3151 = vld [vmem:[%s3144 + $0x48] sm:$0xff]
        %v3152 = vld [vmem:[%s3144 + $0x50] sm:$0xff]
        %v3153 = vld [vmem:[%s3144 + $0x60] sm:$0xff]
        %v3154 = vld [vmem:[%s3144 + $0x68] sm:$0xff]
        %v3155 = vld [vmem:[%s3144 + $0x78] sm:$0xff]
        %v3156 = vld [vmem:[%s3144 + $0x80] sm:$0xff]
        %v3157 = vld [vmem:[%s3144 + $0x90] sm:$0xff]
        %v3158 = vld [vmem:[%s3144 + $0x98] sm:$0xff]
        %v3159 = vld [vmem:[%s3144 + $0xa8] sm:$0xff]
        %v3160 = vld [vmem:[%s3144 + $0xb0] sm:$0xff]
        %v3161 = vld [vmem:[%s3127 + $0x1] sm:$0xff]
        %v3162 = vld [vmem:[%s3127 + $0x9] sm:$0xff]
        %v3163 = vld [vmem:[%s3127 + $0x19] sm:$0xff]
        %v3164 = vld [vmem:[%s3127 + $0x21] sm:$0xff]
        %v3165 = vld [vmem:[%s3127 + $0x31] sm:$0xff]
        %v3166 = vld [vmem:[%s3127 + $0x39] sm:$0xff]
        %v3167 = vld [vmem:[%s3127 + $0x49] sm:$0xff]
        %v3168 = vld [vmem:[%s3127 + $0x51] sm:$0xff]
        %v3169 = vld [vmem:[%s3127 + $0x61] sm:$0xff]
        %v3170 = vld [vmem:[%s3127 + $0x69] sm:$0xff]
        %v3171 = vld [vmem:[%s3127 + $0x79] sm:$0xff]
        %v3172 = vld [vmem:[%s3127 + $0x81] sm:$0xff]
        %v3173 = vld [vmem:[%s3127 + $0x91] sm:$0xff]
        %v3174 = vld [vmem:[%s3127 + $0x99] sm:$0xff]
        %v3175 = vld [vmem:[%s3127 + $0xa9] sm:$0xff]
        %v3176 = vld [vmem:[%s3127 + $0xb1] sm:$0xff]
        %v3177 = vld [vmem:[%s3144 + $0x1] sm:$0xff]
        %v3178 = vld [vmem:[%s3144 + $0x9] sm:$0xff]
        %v3179 = vld [vmem:[%s3144 + $0x19] sm:$0xff]
        %v3180 = vld [vmem:[%s3144 + $0x21] sm:$0xff]
        %v3181 = vld [vmem:[%s3144 + $0x31] sm:$0xff]
        %v3182 = vld [vmem:[%s3144 + $0x39] sm:$0xff]
        %v3183 = vld [vmem:[%s3144 + $0x49] sm:$0xff]
        %v3184 = vld [vmem:[%s3144 + $0x51] sm:$0xff]
        %v3185 = vld [vmem:[%s3144 + $0x61] sm:$0xff]
        %v3186 = vld [vmem:[%s3144 + $0x69] sm:$0xff]
        %v3187 = vld [vmem:[%s3144 + $0x79] sm:$0xff]
        %v3188 = vld [vmem:[%s3144 + $0x81] sm:$0xff]
        %v3189 = vld [vmem:[%s3144 + $0x91] sm:$0xff]
        %v3190 = vld [vmem:[%s3144 + $0x99] sm:$0xff]
        %v3191 = vld [vmem:[%s3144 + $0xa9] sm:$0xff]
        %v3192 = vld [vmem:[%s3144 + $0xb1] sm:$0xff]
        %3209 = vrot.lane.b32.xlu0 %v3145, 8
        %v3210 = vpop.permute.xlu0 %3209
        %3211 = vrot.lane.b32.xlu0 %v3146, 8
        %v3212 = vpop.permute.xlu0 %3211
        %3213 = vrot.lane.b32.xlu0 %v3147, 8
        %v3214 = vpop.permute.xlu0 %3213
        %3215 = vrot.lane.b32.xlu0 %v3148, 8
        %v3216 = vpop.permute.xlu0 %3215
        %3217 = vrot.lane.b32.xlu0 %v3149, 8
        %v3218 = vpop.permute.xlu0 %3217
        %3219 = vrot.lane.b32.xlu0 %v3150, 8
        %v3220 = vpop.permute.xlu0 %3219
        %3221 = vrot.lane.b32.xlu0 %v3151, 8
        %v3222 = vpop.permute.xlu0 %3221
        %3223 = vrot.lane.b32.xlu0 %v3152, 8
        %v3224 = vpop.permute.xlu0 %3223
        %3225 = vrot.lane.b32.xlu0 %v3153, 8
        %v3226 = vpop.permute.xlu0 %3225
        %3227 = vrot.lane.b32.xlu0 %v3154, 8
        %v3228 = vpop.permute.xlu0 %3227
        %3229 = vrot.lane.b32.xlu0 %v3155, 8
        %v3230 = vpop.permute.xlu0 %3229
        %3231 = vrot.lane.b32.xlu0 %v3156, 8
        %v3232 = vpop.permute.xlu0 %3231
        %3233 = vrot.lane.b32.xlu0 %v3157, 8
        %v3234 = vpop.permute.xlu0 %3233
        %3235 = vrot.lane.b32.xlu0 %v3158, 8
        %v3236 = vpop.permute.xlu0 %3235
        %3237 = vrot.lane.b32.xlu0 %v3159, 8
        %v3238 = vpop.permute.xlu0 %3237
        %3239 = vrot.lane.b32.xlu0 %v3160, 8
        %v3240 = vpop.permute.xlu0 %3239
        %3273 = vrot.lane.b32.xlu0 %v3161, 16
        %v3274 = vpop.permute.xlu0 %3273
        %3275 = vrot.lane.b32.xlu0 %v3162, 16
        %v3276 = vpop.permute.xlu0 %3275
        %3277 = vrot.lane.b32.xlu0 %v3163, 16
        %v3278 = vpop.permute.xlu0 %3277
        %3279 = vrot.lane.b32.xlu0 %v3164, 16
        %v3280 = vpop.permute.xlu0 %3279
        %3281 = vrot.lane.b32.xlu0 %v3165, 16
        %v3282 = vpop.permute.xlu0 %3281
        %3283 = vrot.lane.b32.xlu0 %v3166, 16
        %v3284 = vpop.permute.xlu0 %3283
        %3285 = vrot.lane.b32.xlu0 %v3167, 16
        %v3286 = vpop.permute.xlu0 %3285
        %3287 = vrot.lane.b32.xlu0 %v3168, 16
        %v3288 = vpop.permute.xlu0 %3287
        %3289 = vrot.lane.b32.xlu0 %v3169, 16
        %v3290 = vpop.permute.xlu0 %3289
        %3291 = vrot.lane.b32.xlu0 %v3170, 16
        %v3292 = vpop.permute.xlu0 %3291
        %3293 = vrot.lane.b32.xlu0 %v3171, 16
        %v3294 = vpop.permute.xlu0 %3293
        %3295 = vrot.lane.b32.xlu0 %v3172, 16
        %v3296 = vpop.permute.xlu0 %3295
        %3297 = vrot.lane.b32.xlu0 %v3173, 16
        %v3298 = vpop.permute.xlu0 %3297
        %3299 = vrot.lane.b32.xlu0 %v3174, 16
        %v3300 = vpop.permute.xlu0 %3299
        %3301 = vrot.lane.b32.xlu0 %v3175, 16
        %v3302 = vpop.permute.xlu0 %3301
        %3303 = vrot.lane.b32.xlu0 %v3176, 16
        %v3304 = vpop.permute.xlu0 %3303
        %3337 = vrot.lane.b32.xlu0 %v3177, 24
        %v3338 = vpop.permute.xlu0 %3337
        %3339 = vrot.lane.b32.xlu0 %v3178, 24
        %v3340 = vpop.permute.xlu0 %3339
        %3341 = vrot.lane.b32.xlu0 %v3179, 24
        %v3342 = vpop.permute.xlu0 %3341
        %3343 = vrot.lane.b32.xlu0 %v3180, 24
        %v3344 = vpop.permute.xlu0 %3343
        %3345 = vrot.lane.b32.xlu0 %v3181, 24
        %v3346 = vpop.permute.xlu0 %3345
        %3347 = vrot.lane.b32.xlu0 %v3182, 24
        %v3348 = vpop.permute.xlu0 %3347
        %3349 = vrot.lane.b32.xlu0 %v3183, 24
        %v3350 = vpop.permute.xlu0 %3349
        %3351 = vrot.lane.b32.xlu0 %v3184, 24
        %v3352 = vpop.permute.xlu0 %3351
        %3353 = vrot.lane.b32.xlu0 %v3185, 24
        %v3354 = vpop.permute.xlu0 %3353
        %3355 = vrot.lane.b32.xlu0 %v3186, 24
        %v3356 = vpop.permute.xlu0 %3355
        %3357 = vrot.lane.b32.xlu0 %v3187, 24
        %v3358 = vpop.permute.xlu0 %3357
        %3359 = vrot.lane.b32.xlu0 %v3188, 24
        %v3360 = vpop.permute.xlu0 %3359
        %3361 = vrot.lane.b32.xlu0 %v3189, 24
        %v3362 = vpop.permute.xlu0 %3361
        %3363 = vrot.lane.b32.xlu0 %v3190, 24
        %v3364 = vpop.permute.xlu0 %3363
        %3365 = vrot.lane.b32.xlu0 %v3191, 24
        %v3366 = vpop.permute.xlu0 %3365
        %3367 = vrot.lane.b32.xlu0 %v3192, 24
        %v3368 = vpop.permute.xlu0 %3367
        %v3385 = vsel %vm403, %v3128, %v3210
        %v3386 = vsel %vm403, %v3129, %v3212
        %v3387 = vsel %vm403, %v3130, %v3214
        %v3388 = vsel %vm403, %v3131, %v3216
        %v3389 = vsel %vm403, %v3132, %v3218
        %v3390 = vsel %vm403, %v3133, %v3220
        %v3391 = vsel %vm403, %v3134, %v3222
        %v3392 = vsel %vm403, %v3135, %v3224
        %v3393 = vsel %vm403, %v3136, %v3226
        %v3394 = vsel %vm403, %v3137, %v3228
        %v3395 = vsel %vm403, %v3138, %v3230
        %v3396 = vsel %vm403, %v3139, %v3232
        %v3397 = vsel %vm403, %v3140, %v3234
        %v3398 = vsel %vm403, %v3141, %v3236
        %v3399 = vsel %vm403, %v3142, %v3238
        %v3400 = vsel %vm403, %v3143, %v3240
        %v3401 = vsel %vm1664, %v3385, %v3274
        %v3402 = vsel %vm1664, %v3386, %v3276
        %v3403 = vsel %vm1664, %v3387, %v3278
        %v3404 = vsel %vm1664, %v3388, %v3280
        %v3405 = vsel %vm1664, %v3389, %v3282
        %v3406 = vsel %vm1664, %v3390, %v3284
        %v3407 = vsel %vm1664, %v3391, %v3286
        %v3408 = vsel %vm1664, %v3392, %v3288
        %v3409 = vsel %vm1664, %v3393, %v3290
        %v3410 = vsel %vm1664, %v3394, %v3292
        %v3411 = vsel %vm1664, %v3395, %v3294
        %v3412 = vsel %vm1664, %v3396, %v3296
        %v3413 = vsel %vm1664, %v3397, %v3298
        %v3414 = vsel %vm1664, %v3398, %v3300
        %v3415 = vsel %vm1664, %v3399, %v3302
        %v3416 = vsel %vm1664, %v3400, %v3304
        %v3417 = vsel %vm1681, %v3401, %v3338
        %v3418 = vsel %vm1681, %v3402, %v3340
        %v3419 = vsel %vm1681, %v3403, %v3342
        %v3420 = vsel %vm1681, %v3404, %v3344
        %v3421 = vsel %vm1681, %v3405, %v3346
        %v3422 = vsel %vm1681, %v3406, %v3348
        %v3423 = vsel %vm1681, %v3407, %v3350
        %v3424 = vsel %vm1681, %v3408, %v3352
        %v3425 = vsel %vm1681, %v3409, %v3354
        %v3426 = vsel %vm1681, %v3410, %v3356
        %v3427 = vsel %vm1681, %v3411, %v3358
        %v3428 = vsel %vm1681, %v3412, %v3360
        %v3429 = vsel %vm1681, %v3413, %v3362
        %v3430 = vsel %vm1681, %v3414, %v3364
        %v3431 = vsel %vm1681, %v3415, %v3366
        %v3432 = vsel %vm1681, %v3416, %v3368
        %v3433 = vld [vmem:[#allocation11 + $0x60] sm:$0xff]
        %v3434 = vld [vmem:[#allocation11 + $0x68] sm:$0xff]
        %v3435 = vld [vmem:[#allocation11 + $0x70] sm:$0xff]
        %v3436 = vld [vmem:[#allocation11 + $0x78] sm:$0xff]
        %v3438 = vsel %vm1702, %v3417, 0
        %v3441 = vsel %vm1702, %v3418, 0
        %v3444 = vsel %vm1702, %v3419, 0
        %v3447 = vsel %vm1702, %v3420, 0
        %v3450 = vsel %vm1702, %v3421, 0
        %v3453 = vsel %vm1702, %v3422, 0
        %v3456 = vsel %vm1702, %v3423, 0
        %v3459 = vsel %vm1702, %v3424, 0
        %v3462 = vsel %vm1702, %v3425, 0
        %v3465 = vsel %vm1702, %v3426, 0
        %v3468 = vsel %vm1702, %v3427, 0
        %v3471 = vsel %vm1702, %v3428, 0
        %v3474 = vsel %vm1702, %v3429, 0
        %v3477 = vsel %vm1702, %v3430, 0
        %v3480 = vsel %vm1702, %v3431, 0
        %v3483 = vsel %vm1702, %v3432, 0
        %3485 = vmatprep.subr.mxu0 0.0
        %3486 = vmatpush1.msra.mxu0 %v3433
        %3487 = vmatprep.subr.mxu0 0.0
        %3488 = vmatpush1.msra.mxu0 %v3434
        %3489 = vmatprep.subr.mxu0 0.0
        %3490 = vmatpush1.msra.mxu0 %v3435
        %3491 = vmatprep.subr.mxu0 0.0
        %3492 = vmatpush1.msra.mxu0 %v3436
        %3493 = vmatprep.subr.mxu0 0.0
        %3494 = vmatpush1.msra.mxu0 0.0
        %3495 = vmatprep.subr.mxu0 0.0
        %3496 = vmatpush1.msra.mxu0 0.0
        %3497 = vmatprep.subr.mxu0 0.0
        %3498 = vmatpush1.msra.mxu0 0.0
        %3499 = vmatprep.subr.mxu0 0.0
        %3500 = vmatpush1.msra.mxu0 0.0
        %3501 = vmatprep.subr.mxu0 0.0
        %3502 = vmatpush1.msra.mxu0 0.0
        %3503 = vmatprep.subr.mxu0 0.0
        %3504 = vmatpush1.msra.mxu0 0.0
        %3505 = vmatprep.subr.mxu0 0.0
        %3506 = vmatpush1.msra.mxu0 0.0
        %3507 = vmatprep.subr.mxu0 0.0
        %3508 = vmatpush1.msra.mxu0 0.0
        %3509 = vmatprep.subr.mxu0 0.0
        %3510 = vmatpush1.msra.mxu0 0.0
        %3511 = vmatprep.subr.mxu0 0.0
        %3512 = vmatpush1.msra.mxu0 0.0
        %3513 = vmatprep.subr.mxu0 0.0
        %3514 = vmatpush1.msra.mxu0 0.0
        %3515 = vmatprep.subr.mxu0 0.0
        %3516 = vmatpush1.msra.mxu0 0.0
        %3517 = vmatprep.subr.mxu0 0.0
        %3518 = vmatpush1.msra.mxu0 0.0
        %3519 = vmatprep.subr.mxu0 0.0
        %3520 = vmatpush1.msra.mxu0 0.0
        %3521 = vmatprep.subr.mxu0 0.0
        %3522 = vmatpush1.msra.mxu0 0.0
        %3523 = vmatprep.subr.mxu0 0.0
        %3524 = vmatpush1.msra.mxu0 0.0
        %3525 = vmatprep.subr.mxu0 0.0
        %3526 = vmatpush1.msra.mxu0 0.0
        %3527 = vmatprep.subr.mxu0 0.0
        %3528 = vmatpush1.msra.mxu0 0.0
        %3529 = vmatprep.subr.mxu0 0.0
        %3530 = vmatpush1.msra.mxu0 0.0
        %3531 = vmatprep.subr.mxu0 0.0
        %3532 = vmatpush1.msra.mxu0 0.0
        %3533 = vmatprep.subr.mxu0 0.0
        %3534 = vmatpush1.msra.mxu0 0.0
        %3535 = vmatprep.subr.mxu0 0.0
        %3536 = vmatpush1.msra.mxu0 0.0
        %3537 = vmatprep.subr.mxu0 0.0
        %3538 = vmatpush1.msra.mxu0 0.0
        %3539 = vmatprep.subr.mxu0 0.0
        %3540 = vmatpush1.msra.mxu0 0.0
        %3541 = vmatprep.subr.mxu0 0.0
        %3542 = vmatpush1.msra.mxu0 0.0
        %3543 = vmatprep.subr.mxu0 0.0
        %3544 = vmatpush1.msra.mxu0 0.0
        %3545 = vmatprep.subr.mxu0 0.0
        %3546 = vmatpush1.msra.mxu0 0.0
        %3547 = vmatprep.subr.mxu0 0.0
        %3548 = vmatpush1.msra.mxu0 0.0
        %3549 = vmatprep.mubr.f32.mxu0 0.0
        %3550 = vmatmul.mubr.f32.gmra.mrb[0].mxu0 %v3438
        %v3551 = vpop.f32.mrb[0].mxu0
        %v3552 = vadd.f32 0.0, %v3551
        %v3553 = vpop.f32.mrb[0].mxu0
        %3554 = vmatprep.mubr.f32.mxu0 0.0
        %3555 = vmatmul.mubr.f32.gmra.mrb[0].mxu0 %v3441
        %v3556 = vpop.f32.mrb[0].mxu0
        %v3557 = vadd.f32 0.0, %v3556
        %v3558 = vpop.f32.mrb[0].mxu0
        %3559 = vmatprep.mubr.f32.mxu0 0.0
        %3560 = vmatmul.mubr.f32.gmra.mrb[0].mxu0 %v3444
        %v3561 = vpop.f32.mrb[0].mxu0
        %v3562 = vadd.f32 0.0, %v3561
        %v3563 = vpop.f32.mrb[0].mxu0
        %3564 = vmatprep.mubr.f32.mxu0 0.0
        %3565 = vmatmul.mubr.f32.gmra.mrb[0].mxu0 %v3447
        %v3566 = vpop.f32.mrb[0].mxu0
        %v3567 = vadd.f32 0.0, %v3566
        %v3568 = vpop.f32.mrb[0].mxu0
        %3569 = vmatprep.mubr.f32.mxu0 0.0
        %3570 = vmatmul.mubr.f32.gmra.mrb[0].mxu0 %v3450
        %v3571 = vpop.f32.mrb[0].mxu0
        %v3572 = vadd.f32 0.0, %v3571
        %v3573 = vpop.f32.mrb[0].mxu0
        %3574 = vmatprep.mubr.f32.mxu0 0.0
        %3575 = vmatmul.mubr.f32.gmra.mrb[0].mxu0 %v3453
        %v3576 = vpop.f32.mrb[0].mxu0
        %v3577 = vadd.f32 0.0, %v3576
        %v3578 = vpop.f32.mrb[0].mxu0
        %3579 = vmatprep.mubr.f32.mxu0 0.0
        %3580 = vmatmul.mubr.f32.gmra.mrb[0].mxu0 %v3456
        %v3581 = vpop.f32.mrb[0].mxu0
        %v3582 = vadd.f32 0.0, %v3581
        %v3583 = vpop.f32.mrb[0].mxu0
        %3584 = vmatprep.mubr.f32.mxu0 0.0
        %3585 = vmatmul.mubr.f32.gmra.mrb[0].mxu0 %v3459
        %v3586 = vpop.f32.mrb[0].mxu0
        %v3587 = vadd.f32 0.0, %v3586
        %v3588 = vpop.f32.mrb[0].mxu0
        %3589 = vmatprep.mubr.f32.mxu0 0.0
        %3590 = vmatmul.mubr.f32.gmra.mrb[0].mxu0 %v3462
        %v3591 = vpop.f32.mrb[0].mxu0
        %v3592 = vadd.f32 0.0, %v3591
        %v3593 = vpop.f32.mrb[0].mxu0
        %3594 = vmatprep.mubr.f32.mxu0 0.0
        %3595 = vmatmul.mubr.f32.gmra.mrb[0].mxu0 %v3465
        %v3596 = vpop.f32.mrb[0].mxu0
        %v3597 = vadd.f32 0.0, %v3596
        %v3598 = vpop.f32.mrb[0].mxu0
        %3599 = vmatprep.mubr.f32.mxu0 0.0
        %3600 = vmatmul.mubr.f32.gmra.mrb[0].mxu0 %v3468
        %v3601 = vpop.f32.mrb[0].mxu0
        %v3602 = vadd.f32 0.0, %v3601
        %v3603 = vpop.f32.mrb[0].mxu0
        %3604 = vmatprep.mubr.f32.mxu0 0.0
        %3605 = vmatmul.mubr.f32.gmra.mrb[0].mxu0 %v3471
        %v3606 = vpop.f32.mrb[0].mxu0
        %v3607 = vadd.f32 0.0, %v3606
        %v3608 = vpop.f32.mrb[0].mxu0
        %3609 = vmatprep.mubr.f32.mxu0 0.0
        %3610 = vmatmul.mubr.f32.gmra.mrb[0].mxu0 %v3474
        %v3611 = vpop.f32.mrb[0].mxu0
        %v3612 = vadd.f32 0.0, %v3611
        %v3613 = vpop.f32.mrb[0].mxu0
        %3614 = vmatprep.mubr.f32.mxu0 0.0
        %3615 = vmatmul.mubr.f32.gmra.mrb[0].mxu0 %v3477
        %v3616 = vpop.f32.mrb[0].mxu0
        %v3617 = vadd.f32 0.0, %v3616
        %v3618 = vpop.f32.mrb[0].mxu0
        %3619 = vmatprep.mubr.f32.mxu0 0.0
        %3620 = vmatmul.mubr.f32.gmra.mrb[0].mxu0 %v3480
        %v3621 = vpop.f32.mrb[0].mxu0
        %v3622 = vadd.f32 0.0, %v3621
        %v3623 = vpop.f32.mrb[0].mxu0
        %3624 = vmatprep.mubr.f32.mxu0 0.0
        %3625 = vmatmul.mubr.f32.gmra.mrb[0].mxu0 %v3483
        %v3626 = vpop.f32.mrb[0].mxu0
        %v3627 = vadd.f32 0.0, %v3626
        %v3628 = vpop.f32.mrb[0].mxu0
        %3629 = vdwg.mxu0
        %v3630 = vadd.f32 %v3111, %v3552
        %v3631 = vadd.f32 %v3112, %v3557
        %v3632 = vadd.f32 %v3113, %v3562
        %v3633 = vadd.f32 %v3114, %v3567
        %v3634 = vadd.f32 %v3115, %v3572
        %v3635 = vadd.f32 %v3116, %v3577
        %v3636 = vadd.f32 %v3117, %v3582
        %v3637 = vadd.f32 %v3118, %v3587
        %v3638 = vadd.f32 %v3119, %v3592
        %v3639 = vadd.f32 %v3120, %v3597
        %v3640 = vadd.f32 %v3121, %v3602
        %v3641 = vadd.f32 %v3122, %v3607
        %v3642 = vadd.f32 %v3123, %v3612
        %v3643 = vadd.f32 %v3124, %v3617
        %v3644 = vadd.f32 %v3125, %v3622
        %v3645 = vadd.f32 %v3126, %v3627
        %v3646 = vld [vmem:[#allocation14] sm:$0x1]
        %v3648 = vlaneseq
        %v3649 = vshrl.u32 %v3648, 7
        %v3650 = vsub.s32 0, %v3649
        %v3651 = vrot.slane %v3646, %v3650
        %v3653 = vadd.f32 %v3630, %v3651
        %v3654 = vadd.f32 %v3631, %v3651
        %v3655 = vadd.f32 %v3632, %v3651
        %v3656 = vadd.f32 %v3633, %v3651
        %v3657 = vadd.f32 %v3634, %v3651
        %v3658 = vadd.f32 %v3635, %v3651
        %v3659 = vadd.f32 %v3636, %v3651
        %v3660 = vadd.f32 %v3637, %v3651
        %v3661 = vadd.f32 %v3638, %v3651
        %v3662 = vadd.f32 %v3639, %v3651
        %v3663 = vadd.f32 %v3640, %v3651
        %v3664 = vadd.f32 %v3641, %v3651
        %v3665 = vadd.f32 %v3642, %v3651
        %v3666 = vadd.f32 %v3643, %v3651
        %v3667 = vadd.f32 %v3644, %v3651
        %v3668 = vadd.f32 %v3645, %v3651
        %3669 = vst [vmem:[%s402] sm:$0xff] %v3653
        %3670 = vst [vmem:[%s402 + $0x8] sm:$0xff] %v3654
        %3671 = vst [vmem:[%s402 + $0x10] sm:$0xff] %v3655
        %3672 = vst [vmem:[%s402 + $0x18] sm:$0xff] %v3656
        %3673 = vst [vmem:[%s402 + $0x20] sm:$0xff] %v3657
        %3674 = vst [vmem:[%s402 + $0x28] sm:$0xff] %v3658
        %3675 = vst [vmem:[%s402 + $0x30] sm:$0xff] %v3659
        %3676 = vst [vmem:[%s402 + $0x38] sm:$0xff] %v3660
        %3677 = vst [vmem:[%s402 + $0x40] sm:$0xff] %v3661
        %3678 = vst [vmem:[%s402 + $0x48] sm:$0xff] %v3662
        %3679 = vst [vmem:[%s402 + $0x50] sm:$0xff] %v3663
        %3680 = vst [vmem:[%s402 + $0x58] sm:$0xff] %v3664
        %3681 = vst [vmem:[%s402 + $0x60] sm:$0xff] %v3665
        %3682 = vst [vmem:[%s402 + $0x68] sm:$0xff] %v3666
        %3683 = vst [vmem:[%s402 + $0x70] sm:$0xff] %v3667
        %3684 = vst [vmem:[%s402 + $0x78] sm:$0xff] %v3668
        %s3685 = sand.u32 %s194, 1
        %s3686 = scalar_lea.sflag [#allocation5], %s3685
        %s3687 = sand.u32 %s194, 1
        %s3688 = smul.addr %s3687, 128
        %s3689 = scalar_lea.vmem [#allocation15], %s3688
        // Predicated region
        $region77: #{tpu_custom_call.1} parent=47 // pred_check
          %p3690 = pneg %p204
        $region78: #{tpu_custom_call.1} parent=47 // pred_check_branch
          %3692 = sbr.rel (%p3690) target = $region80
        $region79: #{tpu_custom_call.1} parent=47 // pred_region
          %s3694 = ssub.s32 2048, 2048
          %3695 = vsyncadd %s3686, %s3694
          %s3696 = smul.addr %s29, 16
          %s3697 = smul.addr %s3696, 128
          %s3698 = scalar_lea.hbm %s7, %s3697
          %s3699 = sshll.u32 %s3689, 4
          %s3700 = int_to_ptr.vmem [resolvable:$true] %s3699
          %3705 = dma.vmem_to_hbm [thread:$0]  %s3700, 2048, %s3698, %s3686, 128, 128, 8
        $region80: #{tpu_custom_call.1} parent=47 // pred_fallthru
          _
      $region48: #{tpu_custom_call.1} parent=5 // pred_fallthru
        _
      %p3706 = scmp.le.s32.totalorder 2, %s24
      // Predicated region
      $region81: #{tpu_custom_call.1} parent=5 // pred_check
        %p3707 = pneg %p3706
      $region82: #{tpu_custom_call.1} parent=5 // pred_check_branch
        %3709 = sbr.rel (%p3707) target = $region84
      $region83: #{tpu_custom_call.1} parent=5 // pred_region
        %s3710 = ssub.s32 %s24, 2
        // Predicated region
        $region85: #{tpu_custom_call.1} parent=83 // pred_check
          %p3711 = pneg %p210
        $region86: #{tpu_custom_call.1} parent=83 // pred_check_branch
          %3713 = sbr.rel (%p3711) target = $region88
        $region87: #{tpu_custom_call.1} parent=83 // pred_region
          %s3714 = sand.u32 %s195, 1
          %s3715 = scalar_lea.sflag [#allocation5], %s3714
          %s3716 = sand.u32 %s195, 1
          %s3717 = smul.addr %s3716, 128
          %s3718 = scalar_lea.vmem [#allocation15], %s3717
          %3719 = dma.done %s3715, 2048
        $region88: #{tpu_custom_call.1} parent=83 // pred_fallthru
          _
      $region84: #{tpu_custom_call.1} parent=5 // pred_fallthru
        _
    $region6: #{tpu_custom_call.1} parent=1 // loop_footer
      %s28 = sadd.s32 1, %s24
    $region7: #{tpu_custom_call.1} parent=1 // loop_footer_branch
      %23 = sbr.rel target = $region3
    $region8: #{tpu_custom_call.1} parent=1 // loop_exit
      _
    %3720 = vsyncpa [#allocation4], 1
    %s3721 = scalar_lea.sflag [#allocation4], 1
    %3722 = vsyncpa %s3721, 1
    %3723 = vsyncpa [#allocation7], 1
    %s3724 = scalar_lea.sflag [#allocation7], 1
    %3725 = vsyncpa %s3724, 1
    %3726 = vsyncpa [#allocation10], 1
    %3727 = vsyncpa [#allocation13], 1
    %3728 = vsyncpa [#allocation5], 1
    %s3729 = scalar_lea.sflag [#allocation5], 1
    %3730 = vsyncpa %s3729, 1

</llo_original>
